<compile_context>
chip_gen: v5e
topology: v5e:2x2
jax: 0.10.0
libtpu: 0.0.40
codegen_flags: <defaults>
</compile_context>

<pallas_src>
import jax
import jax.numpy as jnp
from jax.experimental import pallas as pl

_COMPUTE_DTYPE = jnp.bfloat16   # MXU-native operand dtype; accumulation stays f32


# ----------------------------------------------------------------------------
# Pallas kernels.  Every call is a single whole-array block resident in VMEM
# (no grid): all operand sets are < 1 MiB and the network is latency-bound, so
# grid steps, padding and double-buffering would be pure overhead.
# ----------------------------------------------------------------------------
def _conv_mm_kernel(p_ref, w_ref, b_ref, o_ref):
    """o = relu(P @ W + b); bf16 operands, f32 accumulate/epilogue, bf16 store."""
    acc = jnp.dot(p_ref[...], w_ref[...], preferred_element_type=jnp.float32)
    o_ref[...] = jnp.maximum(acc + b_ref[...], 0.0).astype(o_ref.dtype)


def _conv_tconv_kernel(p_ref, w3_ref, b3_ref, w4_ref, o_ref):
    """Fused conv3 + tconv1 matmuls: the bottleneck activation (8 x 64) never
    leaves VMEM.  o = relu(P @ W3 + b3) @ W4   (tconv1 cols, f32)."""
    h = jnp.dot(p_ref[...], w3_ref[...], preferred_element_type=jnp.float32)
    h = jnp.maximum(h + b3_ref[...], 0.0).astype(_COMPUTE_DTYPE)
    o_ref[...] = jnp.dot(h, w4_ref[...], preferred_element_type=jnp.float32)


def _bias_relu_mm_kernel(s_ref, b_ref, w_ref, o_ref):
    """Prologue-fused tconv: s is the previous tconv's col2im sum (f32);
    o = relu(s + b) @ W   (this tconv's cols, f32)."""
    h = jnp.maximum(s_ref[...] + b_ref[...], 0.0).astype(_COMPUTE_DTYPE)
    o_ref[...] = jnp.dot(h, w_ref[...], preferred_element_type=jnp.float32)


# ----------------------------------------------------------------------------
# XLA-side spatial rearrangement glue (thin, lane-dense, NHWC).
# ----------------------------------------------------------------------------
def _im2col_nhwc(x, kh, kw, stride):
    """x (N,H,W,C) -> patches (N*Ho*Wo, kh*kw*C).  K ordered (kh, kw, C)."""
    N, H, W, C = x.shape
    Ho = (H - kh) // stride + 1
    Wo = (W - kw) // stride + 1
    ii = jnp.arange(Ho)[:, None] * stride + jnp.arange(kh)[None, :]   # (Ho, kh)
    jj = jnp.arange(Wo)[:, None] * stride + jnp.arange(kw)[None, :]   # (Wo, kw)
    p = x[:, ii[:, None, :, None], jj[None, :, None, :], :]           # (N,Ho,Wo,kh,kw,C)
    return p.reshape(N * Ho * Wo, kh * kw * C), Ho, Wo


def _col2im_overlap_add(cols, stride, Ho, Wo):
    """cols (N,H,W,kh,kw,Co) f32 -> overlap-added (N,Ho,Wo,Co) f32 (no bias)."""
    N, H, W, kh, kw, Co = cols.shape
    s = stride
    if kh % s == 0 and kw % s == 0:
        # Dense phase decomposition:  oi = i*s + a = (i + a_blk)*s + a_ph
        r, q = kh // s, kw // s
        c = cols.reshape(N, H, W, r, s, q, s, Co)
        acc = jnp.zeros((N, H + r - 1, s, W + q - 1, s, Co), jnp.float32)
        for ab in range(r):
            for bb in range(q):
                contrib = jnp.transpose(c[:, :, :, ab, :, bb, :, :],
                                        (0, 1, 3, 2, 4, 5))          # (N,H,s,W,s,Co)
                acc = acc + jnp.pad(
                    contrib,
                    ((0, 0), (ab, r - 1 - ab), (0, 0),
                     (bb, q - 1 - bb), (0, 0), (0, 0)))
        out = acc.reshape(N, (H + r - 1) * s, (W + q - 1) * s, Co)
        return jnp.pad(out, ((0, 0), (0, Ho - out.shape[1]),
                             (0, Wo - out.shape[2]), (0, 0)))
    # Generic fallback (unused for this model's k/s combos): per-tap strided add.
    out = jnp.zeros((N, Ho, Wo, Co), jnp.float32)
    for a in range(kh):
        for bcol in range(kw):
            out = out.at[:, a:a + (H - 1) * s + 1:s,
                         bcol:bcol + (W - 1) * s + 1:s, :].add(cols[:, :, :, a, bcol, :])
    return out


# ----------------------------------------------------------------------------
# Parameters (deterministic, PyTorch-default-style uniform init) + one-time
# repack into matmul-ready operands.
# ----------------------------------------------------------------------------
def _init_conv(key, cout, cin, k):
    bound = 1.0 / jnp.sqrt(cin * k * k)
    kw_, kb_ = jax.random.split(key)
    w = jax.random.uniform(kw_, (cout, cin, k, k), jnp.float32, -bound, bound)
    b = jax.random.uniform(kb_, (cout,), jnp.float32, -bound, bound)
    return w, b


def _init_tconv(key, cin, cout, k):
    bound = 1.0 / jnp.sqrt(cin * k * k)
    kw_, kb_ = jax.random.split(key)
    w = jax.random.uniform(kw_, (cin, cout, k, k), jnp.float32, -bound, bound)
    b = jax.random.uniform(kb_, (cout,), jnp.float32, -bound, bound)
    return w, b


def init_params(key, im_c=3):
    ks = jax.random.split(key, 6)
    return {
        "conv1": _init_conv(ks[0], 128, im_c, 8),
        "conv2": _init_conv(ks[1], 64, 128, 4),
        "conv3": _init_conv(ks[2], 64, 64, 4),
        "tconv1": _init_tconv(ks[3], 64, 64, 4),
        "tconv2": _init_tconv(ks[4], 64, 128, 4),
        "tconv3": _init_tconv(ks[5], 128, im_c, 8),
    }


def pack_params(params):
    """One-time repack: bf16 weight matrices (K ordered (kh,kw,C)) + f32 bias rows."""
    def conv_w(w):    # (Co, Ci, kh, kw) -> (kh*kw*Ci, Co)
        co, ci, kh, kw = w.shape
        return jnp.transpose(w, (2, 3, 1, 0)).reshape(kh * kw * ci, co).astype(_COMPUTE_DTYPE)

    def tconv_w(w):   # (Ci, Co, kh, kw) -> (Ci, kh*kw*Co)
        ci, co, kh, kw = w.shape
        return jnp.transpose(w, (0, 2, 3, 1)).reshape(ci, kh * kw * co).astype(_COMPUTE_DTYPE)

    def brow(b):
        return b.reshape(1, -1).astype(jnp.float32)

    return {
        "w1": conv_w(params["conv1"][0]),   "b1": brow(params["conv1"][1]),
        "w2": conv_w(params["conv2"][0]),   "b2": brow(params["conv2"][1]),
        "w3": conv_w(params["conv3"][0]),   "b3": brow(params["conv3"][1]),
        "w4": tconv_w(params["tconv1"][0]), "b4": brow(params["tconv1"][1]),
        "w5": tconv_w(params["tconv2"][0]), "b5": brow(params["tconv2"][1]),
        "w6": tconv_w(params["tconv3"][0]), "b6": brow(params["tconv3"][1]),
    }


# ----------------------------------------------------------------------------
# Full forward (matches Auto_Encoder_Model.forward, activation = ReLU)
# ----------------------------------------------------------------------------
@jax.jit
def auto_encoder_forward(packed, x):
    """Public interface is NCHW f32 (PyTorch); internally NHWC / row matrices."""
    n = x.shape[0]
    co1 = packed["w1"].shape[1]
    co2 = packed["w2"].shape[1]
    co4 = packed["w4"].shape[1] // 16    # tconv1: kh*kw = 16
    co5 = packed["w5"].shape[1] // 16    # tconv2: kh*kw = 16
    co6 = packed["w6"].shape[1] // 64    # tconv3: kh*kw = 64

    # --- boundary layout + conv1 im2col (XLA, fused with the input transpose) ---
    h = jnp.transpose(x, (0, 2, 3, 1)).astype(_COMPUTE_DTYPE)        # NCHW -> NHWC
    p1, ho1, wo1 = _im2col_nhwc(h, 8, 8, 4)                          # (450, 192)

    # --- encoder ---
    a1 = pl.pallas_call(
        _conv_mm_kernel,
        out_shape=jax.ShapeDtypeStruct((p1.shape[0], co1), _COMPUTE_DTYPE),
    )(p1, packed["w1"], packed["b1"])

    p2, ho2, wo2 = _im2col_nhwc(a1.reshape(n, ho1, wo1, co1), 4, 4, 2)   # (72, 2048)
    a2 = pl.pallas_call(
        _conv_mm_kernel,
        out_shape=jax.ShapeDtypeStruct((p2.shape[0], co2), _COMPUTE_DTYPE),
    )(p2, packed["w2"], packed["b2"])

    p3, ho3, wo3 = _im2col_nhwc(a2.reshape(n, ho2, wo2, co2), 4, 4, 2)   # (8, 1024)

    # --- bottleneck: conv3 + tconv1 fused (no rearrangement needed between them) ---
    c4 = pl.pallas_call(
        _conv_tconv_kernel,
        out_shape=jax.ShapeDtypeStruct((p3.shape[0], packed["w4"].shape[1]),
                                       jnp.float32),
    )(p3, packed["w3"], packed["b3"], packed["w4"])

    # --- decoder (tconv bias+ReLU folded into the next kernel's prologue) ---
    ho4, wo4 = (ho3 - 1) * 2 + 4, (wo3 - 1) * 2 + 4                       # 6, 6
    s4 = _col2im_overlap_add(c4.reshape(n, ho3, wo3, 4, 4, co4), 2, ho4, wo4)

    c5 = pl.pallas_call(
        _bias_relu_mm_kernel,
        out_shape=jax.ShapeDtypeStruct((n * ho4 * wo4, packed["w5"].shape[1]),
                                       jnp.float32),
    )(s4.reshape(n * ho4 * wo4, co4), packed["b4"], packed["w5"])

    ho5, wo5 = (ho4 - 1) * 2 + 4 + 1, (wo4 - 1) * 2 + 4 + 1               # 15, 15
    s5 = _col2im_overlap_add(c5.reshape(n, ho4, wo4, 4, 4, co5), 2, ho5, wo5)

    c6 = pl.pallas_call(
        _bias_relu_mm_kernel,
        out_shape=jax.ShapeDtypeStruct((n * ho5 * wo5, packed["w6"].shape[1]),
                                       jnp.float32),
    )(s5.reshape(n * ho5 * wo5, co5), packed["b5"], packed["w6"])

    ho6, wo6 = (ho5 - 1) * 4 + 8, (wo5 - 1) * 4 + 8                       # 64, 64
    s6 = _col2im_overlap_add(c6.reshape(n, ho5, wo5, 8, 8, co6), 4, ho6, wo6)
    out = jnp.maximum(s6 + packed["b6"].reshape(1, 1, 1, co6), 0.0)
    return jnp.transpose(out, (0, 3, 1, 2))                               # NHWC -> NCHW


# ----------------------------------------------------------------------------
# Pure-JAX reference (lax conv, same bf16 operand casting points) for checking
# ----------------------------------------------------------------------------
def _conv_ref(x, w, b, stride):
    y = jax.lax.conv_general_dilated(
        x.astype(_COMPUTE_DTYPE), w.astype(_COMPUTE_DTYPE), (stride, stride), "VALID",
        dimension_numbers=("NCHW", "OIHW", "NCHW"),
        preferred_element_type=jnp.float32)
    return jax.nn.relu(y + b[None, :, None, None])


def _tconv_ref(x, w, b, stride, op=0):
    kh, kw = w.shape[2], w.shape[3]
    w_c = jnp.flip(w, (2, 3)).transpose(1, 0, 2, 3)
    y = jax.lax.conv_general_dilated(
        x.astype(_COMPUTE_DTYPE), w_c.astype(_COMPUTE_DTYPE), (1, 1),
        padding=[(kh - 1, kh - 1 + op), (kw - 1, kw - 1 + op)],
        lhs_dilation=(stride, stride),
        dimension_numbers=("NCHW", "OIHW", "NCHW"),
        preferred_element_type=jnp.float32)
    return jax.nn.relu(y + b[None, :, None, None])


@jax.jit
def reference_forward(params, x):
    h = _conv_ref(x, *params["conv1"], stride=4)
    h = _conv_ref(h, *params["conv2"], stride=2)
    h = _conv_ref(h, *params["conv3"], stride=2)
    h = _tconv_ref(h, *params["tconv1"], stride=2)
    h = _tconv_ref(h, *params["tconv2"], stride=2, op=1)
    h = _tconv_ref(h, *params["tconv3"], stride=4)
    return h


if __name__ == "__main__":
    key = jax.random.PRNGKey(0)
    k_param, k_x = jax.random.split(key)

    # 64x64 round-trips exactly through the module: 64 -> 15 -> 6 -> 2 -> 6 -> 15 -> 64
    x = jax.random.normal(k_x, (2, 3, 64, 64), jnp.float32)
    params = init_params(k_param, im_c=3)
    packed = pack_params(params)   # one-time weight repack, outside the forward jit

    y = jax.block_until_ready(auto_encoder_forward(packed, x))
    assert y.shape == (2, 3, 64, 64), y.shape

    y_ref = jax.block_until_ready(reference_forward(params, x))
    max_err = float(jnp.max(jnp.abs(y - y_ref)))
    assert jnp.allclose(y, y_ref, rtol=2e-2, atol=2e-2), max_err

    print("KERNEL_OK")
</pallas_src>

<mosaic_0001>
module attributes {stable_mosaic.version = 11 : i64} {
  func.func @_conv_mm_kernel(%arg0: memref<450x192xbf16, #tpu.memory_space<vmem>>, %arg1: memref<192x128xbf16, #tpu.memory_space<vmem>>, %arg2: memref<1x128xf32, #tpu.memory_space<vmem>>, %arg3: memref<450x128xbf16, #tpu.memory_space<vmem>>) attributes {dimension_semantics = [], scalar_prefetch = 0 : i64, scratch_operands = 0 : i64, tpu.core_type = #tpu.core_type<tc>} {
    %c0 = arith.constant 0 : index
    %c0_0 = arith.constant 0 : index
    %0 = vector.load %arg0[%c0, %c0_0] : memref<450x192xbf16, #tpu.memory_space<vmem>>, vector<450x192xbf16>
    %c0_1 = arith.constant 0 : index
    %c0_2 = arith.constant 0 : index
    %1 = vector.load %arg1[%c0_1, %c0_2] : memref<192x128xbf16, #tpu.memory_space<vmem>>, vector<192x128xbf16>
    %cst = arith.constant dense<0.000000e+00> : vector<450x128xf32>
    %2 = tpu.matmul %0, %1, %cst {dimension_numbers = #tpu.dot_dimension_numbers<[1], [0], [0], [1], [0, 0, 1, 1], [], []>} : vector<450x192xbf16>, vector<192x128xbf16>, vector<450x128xf32> -> vector<450x128xf32>
    %c0_3 = arith.constant 0 : index
    %c0_4 = arith.constant 0 : index
    %3 = vector.load %arg2[%c0_3, %c0_4] : memref<1x128xf32, #tpu.memory_space<vmem>>, vector<1x128xf32>
    %4 = vector.broadcast %3 : vector<1x128xf32> to vector<450x128xf32>
    %5 = arith.addf %2, %4 : vector<450x128xf32>
    %cst_5 = arith.constant 0.000000e+00 : f32
    %6 = vector.broadcast %cst_5 : f32 to vector<450x128xf32>
    %7 = arith.maximumf %5, %6 : vector<450x128xf32>
    %8 = arith.truncf %7 : vector<450x128xf32> to vector<450x128xbf16>
    %c0_6 = arith.constant 0 : index
    %c0_7 = arith.constant 0 : index
    %9 = vector.load %arg3[%c0_6, %c0_7] : memref<450x128xbf16, #tpu.memory_space<vmem>>, vector<450x128xbf16>
    tpu.vector_store %arg3[%c0_6, %c0_7], %8 {strides = array<i32>} : memref<450x128xbf16, #tpu.memory_space<vmem>>, vector<450x128xbf16>,
    return
  }
}

module attributes {stable_mosaic.version = 11 : i64} {
  func.func @_conv_mm_kernel(%arg0: memref<72x2048xbf16, #tpu.memory_space<vmem>>, %arg1: memref<2048x64xbf16, #tpu.memory_space<vmem>>, %arg2: memref<1x64xf32, #tpu.memory_space<vmem>>, %arg3: memref<72x64xbf16, #tpu.memory_space<vmem>>) attributes {dimension_semantics = [], scalar_prefetch = 0 : i64, scratch_operands = 0 : i64, tpu.core_type = #tpu.core_type<tc>} {
    %c0 = arith.constant 0 : index
    %c0_0 = arith.constant 0 : index
    %0 = vector.load %arg0[%c0, %c0_0] : memref<72x2048xbf16, #tpu.memory_space<vmem>>, vector<72x2048xbf16>
    %c0_1 = arith.constant 0 : index
    %c0_2 = arith.constant 0 : index
    %1 = vector.load %arg1[%c0_1, %c0_2] : memref<2048x64xbf16, #tpu.memory_space<vmem>>, vector<2048x64xbf16>
    %cst = arith.constant dense<0.000000e+00> : vector<72x64xf32>
    %2 = tpu.matmul %0, %1, %cst {dimension_numbers = #tpu.dot_dimension_numbers<[1], [0], [0], [1], [0, 0, 1, 1], [], []>} : vector<72x2048xbf16>, vector<2048x64xbf16>, vector<72x64xf32> -> vector<72x64xf32>
    %c0_3 = arith.constant 0 : index
    %c0_4 = arith.constant 0 : index
    %3 = vector.load %arg2[%c0_3, %c0_4] : memref<1x64xf32, #tpu.memory_space<vmem>>, vector<1x64xf32>
    %4 = vector.broadcast %3 : vector<1x64xf32> to vector<72x64xf32>
    %5 = arith.addf %2, %4 : vector<72x64xf32>
    %cst_5 = arith.constant 0.000000e+00 : f32
    %6 = vector.broadcast %cst_5 : f32 to vector<72x64xf32>
    %7 = arith.maximumf %5, %6 : vector<72x64xf32>
    %8 = arith.truncf %7 : vector<72x64xf32> to vector<72x64xbf16>
    %c0_6 = arith.constant 0 : index
    %c0_7 = arith.constant 0 : index
    %9 = vector.load %arg3[%c0_6, %c0_7] : memref<72x64xbf16, #tpu.memory_space<vmem>>, vector<72x64xbf16>
    tpu.vector_store %arg3[%c0_6, %c0_7], %8 {strides = array<i32>} : memref<72x64xbf16, #tpu.memory_space<vmem>>, vector<72x64xbf16>,
    return
  }
}

module attributes {stable_mosaic.version = 11 : i64} {
  func.func @_conv_tconv_kernel(%arg0: memref<8x1024xbf16, #tpu.memory_space<vmem>>, %arg1: memref<1024x64xbf16, #tpu.memory_space<vmem>>, %arg2: memref<1x64xf32, #tpu.memory_space<vmem>>, %arg3: memref<64x1024xbf16, #tpu.memory_space<vmem>>, %arg4: memref<8x1024xf32, #tpu.memory_space<vmem>>) attributes {dimension_semantics = [], scalar_prefetch = 0 : i64, scratch_operands = 0 : i64, tpu.core_type = #tpu.core_type<tc>} {
    %c0 = arith.constant 0 : index
    %c0_0 = arith.constant 0 : index
    %0 = vector.load %arg0[%c0, %c0_0] : memref<8x1024xbf16, #tpu.memory_space<vmem>>, vector<8x1024xbf16>
    %c0_1 = arith.constant 0 : index
    %c0_2 = arith.constant 0 : index
    %1 = vector.load %arg1[%c0_1, %c0_2] : memref<1024x64xbf16, #tpu.memory_space<vmem>>, vector<1024x64xbf16>
    %cst = arith.constant dense<0.000000e+00> : vector<8x64xf32>
    %2 = tpu.matmul %0, %1, %cst {dimension_numbers = #tpu.dot_dimension_numbers<[1], [0], [0], [1], [0, 0, 1, 1], [], []>} : vector<8x1024xbf16>, vector<1024x64xbf16>, vector<8x64xf32> -> vector<8x64xf32>
    %c0_3 = arith.constant 0 : index
    %c0_4 = arith.constant 0 : index
    %3 = vector.load %arg2[%c0_3, %c0_4] : memref<1x64xf32, #tpu.memory_space<vmem>>, vector<1x64xf32>
    %4 = vector.broadcast %3 : vector<1x64xf32> to vector<8x64xf32>
    %5 = arith.addf %2, %4 : vector<8x64xf32>
    %cst_5 = arith.constant 0.000000e+00 : f32
    %6 = vector.broadcast %cst_5 : f32 to vector<8x64xf32>
    %7 = arith.maximumf %5, %6 : vector<8x64xf32>
    %8 = arith.truncf %7 : vector<8x64xf32> to vector<8x64xbf16>
    %c0_6 = arith.constant 0 : index
    %c0_7 = arith.constant 0 : index
    %9 = vector.load %arg3[%c0_6, %c0_7] : memref<64x1024xbf16, #tpu.memory_space<vmem>>, vector<64x1024xbf16>
    %cst_8 = arith.constant dense<0.000000e+00> : vector<8x1024xf32>
    %10 = tpu.matmul %8, %9, %cst_8 {dimension_numbers = #tpu.dot_dimension_numbers<[1], [0], [0], [1], [0, 0, 1, 1], [], []>} : vector<8x64xbf16>, vector<64x1024xbf16>, vector<8x1024xf32> -> vector<8x1024xf32>
    %c0_9 = arith.constant 0 : index
    %c0_10 = arith.constant 0 : index
    %11 = vector.load %arg4[%c0_9, %c0_10] : memref<8x1024xf32, #tpu.memory_space<vmem>>, vector<8x1024xf32>
    tpu.vector_store %arg4[%c0_9, %c0_10], %10 {strides = array<i32>} : memref<8x1024xf32, #tpu.memory_space<vmem>>, vector<8x1024xf32>,
    return
  }
}

module attributes {stable_mosaic.version = 11 : i64} {
  func.func @_bias_relu_mm_kernel(%arg0: memref<72x64xf32, #tpu.memory_space<vmem>>, %arg1: memref<1x64xf32, #tpu.memory_space<vmem>>, %arg2: memref<64x2048xbf16, #tpu.memory_space<vmem>>, %arg3: memref<72x2048xf32, #tpu.memory_space<vmem>>) attributes {dimension_semantics = [], scalar_prefetch = 0 : i64, scratch_operands = 0 : i64, tpu.core_type = #tpu.core_type<tc>} {
    %c0 = arith.constant 0 : index
    %c0_0 = arith.constant 0 : index
    %0 = vector.load %arg0[%c0, %c0_0] : memref<72x64xf32, #tpu.memory_space<vmem>>, vector<72x64xf32>
    %c0_1 = arith.constant 0 : index
    %c0_2 = arith.constant 0 : index
    %1 = vector.load %arg1[%c0_1, %c0_2] : memref<1x64xf32, #tpu.memory_space<vmem>>, vector<1x64xf32>
    %2 = vector.broadcast %1 : vector<1x64xf32> to vector<72x64xf32>
    %3 = arith.addf %0, %2 : vector<72x64xf32>
    %cst = arith.constant 0.000000e+00 : f32
    %4 = vector.broadcast %cst : f32 to vector<72x64xf32>
    %5 = arith.maximumf %3, %4 : vector<72x64xf32>
    %6 = arith.truncf %5 : vector<72x64xf32> to vector<72x64xbf16>
    %c0_3 = arith.constant 0 : index
    %c0_4 = arith.constant 0 : index
    %7 = vector.load %arg2[%c0_3, %c0_4] : memref<64x2048xbf16, #tpu.memory_space<vmem>>, vector<64x2048xbf16>
    %cst_5 = arith.constant dense<0.000000e+00> : vector<72x2048xf32>
    %8 = tpu.matmul %6, %7, %cst_5 {dimension_numbers = #tpu.dot_dimension_numbers<[1], [0], [0], [1], [0, 0, 1, 1], [], []>} : vector<72x64xbf16>, vector<64x2048xbf16>, vector<72x2048xf32> -> vector<72x2048xf32>
    %c0_6 = arith.constant 0 : index
    %c0_7 = arith.constant 0 : index
    %9 = vector.load %arg3[%c0_6, %c0_7] : memref<72x2048xf32, #tpu.memory_space<vmem>>, vector<72x2048xf32>
    tpu.vector_store %arg3[%c0_6, %c0_7], %8 {strides = array<i32>} : memref<72x2048xf32, #tpu.memory_space<vmem>>, vector<72x2048xf32>,
    return
  }
}

module attributes {stable_mosaic.version = 11 : i64} {
  func.func @_bias_relu_mm_kernel(%arg0: memref<450x128xf32, #tpu.memory_space<vmem>>, %arg1: memref<1x128xf32, #tpu.memory_space<vmem>>, %arg2: memref<128x192xbf16, #tpu.memory_space<vmem>>, %arg3: memref<450x192xf32, #tpu.memory_space<vmem>>) attributes {dimension_semantics = [], scalar_prefetch = 0 : i64, scratch_operands = 0 : i64, tpu.core_type = #tpu.core_type<tc>} {
    %c0 = arith.constant 0 : index
    %c0_0 = arith.constant 0 : index
    %0 = vector.load %arg0[%c0, %c0_0] : memref<450x128xf32, #tpu.memory_space<vmem>>, vector<450x128xf32>
    %c0_1 = arith.constant 0 : index
    %c0_2 = arith.constant 0 : index
    %1 = vector.load %arg1[%c0_1, %c0_2] : memref<1x128xf32, #tpu.memory_space<vmem>>, vector<1x128xf32>
    %2 = vector.broadcast %1 : vector<1x128xf32> to vector<450x128xf32>
    %3 = arith.addf %0, %2 : vector<450x128xf32>
    %cst = arith.constant 0.000000e+00 : f32
    %4 = vector.broadcast %cst : f32 to vector<450x128xf32>
    %5 = arith.maximumf %3, %4 : vector<450x128xf32>
    %6 = arith.truncf %5 : vector<450x128xf32> to vector<450x128xbf16>
    %c0_3 = arith.constant 0 : index
    %c0_4 = arith.constant 0 : index
    %7 = vector.load %arg2[%c0_3, %c0_4] : memref<128x192xbf16, #tpu.memory_space<vmem>>, vector<128x192xbf16>
    %cst_5 = arith.constant dense<0.000000e+00> : vector<450x192xf32>
    %8 = tpu.matmul %6, %7, %cst_5 {dimension_numbers = #tpu.dot_dimension_numbers<[1], [0], [0], [1], [0, 0, 1, 1], [], []>} : vector<450x128xbf16>, vector<128x192xbf16>, vector<450x192xf32> -> vector<450x192xf32>
    %c0_6 = arith.constant 0 : index
    %c0_7 = arith.constant 0 : index
    %9 = vector.load %arg3[%c0_6, %c0_7] : memref<450x192xf32, #tpu.memory_space<vmem>>, vector<450x192xf32>
    tpu.vector_store %arg3[%c0_6, %c0_7], %8 {strides = array<i32>} : memref<450x192xf32, #tpu.memory_space<vmem>>, vector<450x192xf32>,
    return
  }
}

</mosaic_0001>

<llo_original>
// kernel: auto_encoder_forward.5
$region0: #{auto_encoder_forward.5}
  #allocation0 [shape = 'u32[]', space=smem, size = 0x4, offset = 0x4, fixed_abs, tag = 'smem constant byte address 0x4 - core index']
  #allocation1 [shape = 'u32[72,128]{1,0:T(1,128)}', space=vmem, size = 0x9000, scoped, tag = 'internal scratch']
  %s0 = inlined_call_operand.vmem [shape: bf16[450,192], index: 0, kind: input, shape index: {}]
  %s1 = inlined_call_operand.vmem [shape: bf16[192,128], index: 1, kind: input, shape index: {}]
  %s2 = inlined_call_operand.vmem [shape: f32[1,128], index: 2, kind: input, shape index: {}]
  %s3 = inlined_call_operand.vmem [shape: bf16[450,128], index: 3, kind: output, shape index: {}]
  %s4 = sld [smem:[#allocation0]]
  $region22: #{auto_encoder_forward.5} parent=0
    _
  %s6 = ssub.s32 1, %s4
  %s7 = scalar_select 0, %s6, %s4
  // Predicated region
  $region2: #{auto_encoder_forward.5} parent=0 // pred_check
    _
  $region3: #{auto_encoder_forward.5} parent=0 // pred_check_branch
    %9 = sbr.rel (0) target = $region5
  $region4: #{auto_encoder_forward.5} parent=0 // pred_region
    _
  $region5: #{auto_encoder_forward.5} parent=0 // pred_fallthru
    _
  // Predicated region
  $region6: #{auto_encoder_forward.5} parent=0 // pred_check
    _
  $region7: #{auto_encoder_forward.5} parent=0 // pred_check_branch
    %11 = sbr.rel (0) target = $region9
  $region8: #{auto_encoder_forward.5} parent=0 // pred_region
    _
  $region9: #{auto_encoder_forward.5} parent=0 // pred_fallthru
    _
  // Predicated region
  $region10: #{auto_encoder_forward.5} parent=0 // pred_check
    _
  $region11: #{auto_encoder_forward.5} parent=0 // pred_check_branch
    %13 = sbr.rel (0) target = $region13
  $region12: #{auto_encoder_forward.5} parent=0 // pred_region
    _
  $region13: #{auto_encoder_forward.5} parent=0 // pred_fallthru
    _
  %v15 = vld [vmem:[%s0] sm:$0xff]
  %v16 = vld [vmem:[%s0 + $0x8] sm:$0xff]
  %v17 = vld [vmem:[%s0 + $0x10] sm:$0xff]
  %v18 = vld [vmem:[%s0 + $0x18] sm:$0xff]
  %v19 = vld [vmem:[%s0 + $0x20] sm:$0xff]
  %v20 = vld [vmem:[%s0 + $0x28] sm:$0xff]
  %v21 = vld [vmem:[%s0 + $0x30] sm:$0xff]
  %v22 = vld [vmem:[%s0 + $0x38] sm:$0xff]
  %v23 = vld [vmem:[%s0 + $0x40] sm:$0xff]
  %v24 = vld [vmem:[%s0 + $0x48] sm:$0xff]
  %v25 = vld [vmem:[%s0 + $0x50] sm:$0xff]
  %v26 = vld [vmem:[%s0 + $0x58] sm:$0xff]
  %v27 = vld [vmem:[%s0 + $0x60] sm:$0xff]
  %v28 = vld [vmem:[%s0 + $0x68] sm:$0xff]
  %v29 = vld [vmem:[%s0 + $0x70] sm:$0xff]
  %v30 = vld [vmem:[%s0 + $0x78] sm:$0xff]
  %v31 = vld [vmem:[%s0 + $0x80] sm:$0xff]
  %v32 = vld [vmem:[%s0 + $0x88] sm:$0xff]
  %v33 = vld [vmem:[%s0 + $0x90] sm:$0xff]
  %v34 = vld [vmem:[%s0 + $0x98] sm:$0xff]
  %v35 = vld [vmem:[%s0 + $0xa0] sm:$0xff]
  %v36 = vld [vmem:[%s0 + $0xa8] sm:$0xff]
  %v37 = vld [vmem:[%s0 + $0xb0] sm:$0xff]
  %v38 = vld [vmem:[%s0 + $0xb8] sm:$0xff]
  %v39 = vld [vmem:[%s0 + $0xc0] sm:$0xff]
  %v40 = vld [vmem:[%s0 + $0xc8] sm:$0xff]
  %v41 = vld [vmem:[%s0 + $0xd0] sm:$0xff]
  %v42 = vld [vmem:[%s0 + $0xd8] sm:$0xff]
  %v43 = vld [vmem:[%s0 + $0xe0] sm:$0xff]
  %v44 = vld [vmem:[%s0 + $0xe8] sm:$0xff]
  %v45 = vld [vmem:[%s0 + $0xf0] sm:$0xff]
  %v46 = vld [vmem:[%s0 + $0xf8] sm:$0xff]
  %v47 = vld [vmem:[%s0 + $0x100] sm:$0xff]
  %v48 = vld [vmem:[%s0 + $0x108] sm:$0xff]
  %v49 = vld [vmem:[%s0 + $0x110] sm:$0xff]
  %v50 = vld [vmem:[%s0 + $0x118] sm:$0xff]
  %v51 = vld [vmem:[%s0 + $0x120] sm:$0xff]
  %v52 = vld [vmem:[%s0 + $0x128] sm:$0xff]
  %v53 = vld [vmem:[%s0 + $0x130] sm:$0xff]
  %v54 = vld [vmem:[%s0 + $0x138] sm:$0xff]
  %v55 = vld [vmem:[%s0 + $0x140] sm:$0xff]
  %v56 = vld [vmem:[%s0 + $0x148] sm:$0xff]
  %v57 = vld [vmem:[%s0 + $0x150] sm:$0xff]
  %v58 = vld [vmem:[%s0 + $0x158] sm:$0xff]
  %v59 = vld [vmem:[%s0 + $0x160] sm:$0xff]
  %v60 = vld [vmem:[%s0 + $0x168] sm:$0xff]
  %v61 = vld [vmem:[%s0 + $0x170] sm:$0xff]
  %v62 = vld [vmem:[%s0 + $0x178] sm:$0xff]
  %v63 = vld [vmem:[%s0 + $0x180] sm:$0xff]
  %v64 = vld [vmem:[%s0 + $0x188] sm:$0xff]
  %v65 = vld [vmem:[%s0 + $0x190] sm:$0xff]
  %v66 = vld [vmem:[%s0 + $0x198] sm:$0xff]
  %v67 = vld [vmem:[%s0 + $0x1a0] sm:$0xff]
  %v68 = vld [vmem:[%s0 + $0x1a8] sm:$0xff]
  %v69 = vld [vmem:[%s0 + $0x1b0] sm:$0xff]
  %v70 = vld [vmem:[%s0 + $0x1b8] sm:$0xff]
  %v71 = vld [vmem:[%s0 + $0x1c0] sm:$0x11]
  %v72 = vld [vmem:[%s1] sm:$0xf]
  %v73 = vld [vmem:[%s1 + $0x4] sm:$0xf]
  %v74 = vld [vmem:[%s1 + $0x8] sm:$0xf]
  %v75 = vld [vmem:[%s1 + $0xc] sm:$0xf]
  %v76 = vld [vmem:[%s1 + $0x10] sm:$0xf]
  %v77 = vld [vmem:[%s1 + $0x14] sm:$0xf]
  %v78 = vld [vmem:[%s1 + $0x18] sm:$0xf]
  %v79 = vld [vmem:[%s1 + $0x1c] sm:$0xf]
  %v80 = vld [vmem:[%s1 + $0x20] sm:$0xf]
  %v81 = vld [vmem:[%s1 + $0x24] sm:$0xf]
  %v82 = vld [vmem:[%s1 + $0x28] sm:$0xf]
  %v83 = vld [vmem:[%s1 + $0x2c] sm:$0xf]
  %v84 = vld [vmem:[%s1 + $0x30] sm:$0xf]
  %v85 = vld [vmem:[%s1 + $0x34] sm:$0xf]
  %v86 = vld [vmem:[%s1 + $0x38] sm:$0xf]
  %v87 = vld [vmem:[%s1 + $0x3c] sm:$0xf]
  %v88 = vld [vmem:[%s1 + $0x40] sm:$0xf]
  %v89 = vld [vmem:[%s1 + $0x44] sm:$0xf]
  %v90 = vld [vmem:[%s1 + $0x48] sm:$0xf]
  %v91 = vld [vmem:[%s1 + $0x4c] sm:$0xf]
  %v92 = vld [vmem:[%s1 + $0x50] sm:$0xf]
  %v93 = vld [vmem:[%s1 + $0x54] sm:$0xf]
  %v94 = vld [vmem:[%s1 + $0x58] sm:$0xf]
  %v95 = vld [vmem:[%s1 + $0x5c] sm:$0xf]
  %v96 = vld [vmem:[%s2] sm:$0x1]
  %v98 = vperm.slane %v96, 0
  %v157 = vunpack.c.l.b16 %v15
  %v158 = vunpack.c.h.b16 %v15
  %v159 = vunpack.c.l.b16 %v16
  %v160 = vunpack.c.h.b16 %v16
  %v161 = vunpack.c.l.b16 %v17
  %v162 = vunpack.c.h.b16 %v17
  %v163 = vunpack.c.l.b16 %v18
  %v164 = vunpack.c.h.b16 %v18
  %v165 = vunpack.c.l.b16 %v19
  %v166 = vunpack.c.h.b16 %v19
  %v167 = vunpack.c.l.b16 %v20
  %v168 = vunpack.c.h.b16 %v20
  %v169 = vunpack.c.l.b16 %v21
  %v170 = vunpack.c.h.b16 %v21
  %v171 = vunpack.c.l.b16 %v22
  %v172 = vunpack.c.h.b16 %v22
  %v173 = vunpack.c.l.b16 %v23
  %v174 = vunpack.c.h.b16 %v23
  %v175 = vunpack.c.l.b16 %v24
  %v176 = vunpack.c.h.b16 %v24
  %v177 = vunpack.c.l.b16 %v25
  %v178 = vunpack.c.h.b16 %v25
  %v179 = vunpack.c.l.b16 %v26
  %v180 = vunpack.c.h.b16 %v26
  %v181 = vunpack.c.l.b16 %v27
  %v182 = vunpack.c.h.b16 %v27
  %v183 = vunpack.c.l.b16 %v28
  %v184 = vunpack.c.h.b16 %v28
  %v185 = vunpack.c.l.b16 %v29
  %v186 = vunpack.c.h.b16 %v29
  %v187 = vunpack.c.l.b16 %v30
  %v188 = vunpack.c.h.b16 %v30
  %v189 = vunpack.c.l.b16 %v31
  %v190 = vunpack.c.h.b16 %v31
  %v191 = vunpack.c.l.b16 %v32
  %v192 = vunpack.c.h.b16 %v32
  %v193 = vunpack.c.l.b16 %v33
  %v194 = vunpack.c.h.b16 %v33
  %v195 = vunpack.c.l.b16 %v34
  %v196 = vunpack.c.h.b16 %v34
  %v197 = vunpack.c.l.b16 %v35
  %v198 = vunpack.c.h.b16 %v35
  %v199 = vunpack.c.l.b16 %v36
  %v200 = vunpack.c.h.b16 %v36
  %v201 = vunpack.c.l.b16 %v37
  %v202 = vunpack.c.h.b16 %v37
  %v203 = vunpack.c.l.b16 %v38
  %v204 = vunpack.c.h.b16 %v38
  %v205 = vunpack.c.l.b16 %v39
  %v206 = vunpack.c.h.b16 %v39
  %v207 = vunpack.c.l.b16 %v40
  %v208 = vunpack.c.h.b16 %v40
  %v209 = vunpack.c.l.b16 %v41
  %v210 = vunpack.c.h.b16 %v41
  %v211 = vunpack.c.l.b16 %v42
  %v212 = vunpack.c.h.b16 %v42
  %v213 = vunpack.c.l.b16 %v43
  %v214 = vunpack.c.h.b16 %v43
  %v215 = vunpack.c.l.b16 %v44
  %v216 = vunpack.c.h.b16 %v44
  %v217 = vunpack.c.l.b16 %v45
  %v218 = vunpack.c.h.b16 %v45
  %v219 = vunpack.c.l.b16 %v46
  %v220 = vunpack.c.h.b16 %v46
  %v221 = vunpack.c.l.b16 %v47
  %v222 = vunpack.c.h.b16 %v47
  %v223 = vunpack.c.l.b16 %v48
  %v224 = vunpack.c.h.b16 %v48
  %v225 = vunpack.c.l.b16 %v49
  %v226 = vunpack.c.h.b16 %v49
  %v227 = vunpack.c.l.b16 %v50
  %v228 = vunpack.c.h.b16 %v50
  %v229 = vunpack.c.l.b16 %v51
  %v230 = vunpack.c.h.b16 %v51
  %v231 = vunpack.c.l.b16 %v52
  %v232 = vunpack.c.h.b16 %v52
  %v233 = vunpack.c.l.b16 %v53
  %v234 = vunpack.c.h.b16 %v53
  %v235 = vunpack.c.l.b16 %v54
  %v236 = vunpack.c.h.b16 %v54
  %v237 = vunpack.c.l.b16 %v55
  %v238 = vunpack.c.h.b16 %v55
  %v239 = vunpack.c.l.b16 %v56
  %v240 = vunpack.c.h.b16 %v56
  %v241 = vunpack.c.l.b16 %v57
  %v242 = vunpack.c.h.b16 %v57
  %v243 = vunpack.c.l.b16 %v58
  %v244 = vunpack.c.h.b16 %v58
  %v245 = vunpack.c.l.b16 %v59
  %v246 = vunpack.c.h.b16 %v59
  %v247 = vunpack.c.l.b16 %v60
  %v248 = vunpack.c.h.b16 %v60
  %v249 = vunpack.c.l.b16 %v61
  %v250 = vunpack.c.h.b16 %v61
  %v251 = vunpack.c.l.b16 %v62
  %v252 = vunpack.c.h.b16 %v62
  %v253 = vunpack.c.l.b16 %v63
  %v254 = vunpack.c.h.b16 %v63
  %v255 = vunpack.c.l.b16 %v64
  %v256 = vunpack.c.h.b16 %v64
  %v257 = vunpack.c.l.b16 %v65
  %v258 = vunpack.c.h.b16 %v65
  %v259 = vunpack.c.l.b16 %v66
  %v260 = vunpack.c.h.b16 %v66
  %v261 = vunpack.c.l.b16 %v67
  %v262 = vunpack.c.h.b16 %v67
  %v263 = vunpack.c.l.b16 %v68
  %v264 = vunpack.c.h.b16 %v68
  %v265 = vunpack.c.l.b16 %v69
  %v266 = vunpack.c.h.b16 %v69
  %v267 = vunpack.c.l.b16 %v70
  %v268 = vunpack.c.h.b16 %v70
  %v269 = vunpack.c.l.b16 %v71
  %v270 = vunpack.c.h.b16 %v71
  %v271 = vpack.c.b16 %v159, %v157
  %v272 = vpack.c.b16 %v160, %v158
  %v273 = vpack.c.b16 %v163, %v161
  %v274 = vpack.c.b16 %v164, %v162
  %v275 = vpack.c.b16 %v167, %v165
  %v276 = vpack.c.b16 %v168, %v166
  %v277 = vpack.c.b16 %v171, %v169
  %v278 = vpack.c.b16 %v172, %v170
  %v279 = vpack.c.b16 %v175, %v173
  %v280 = vpack.c.b16 %v176, %v174
  %v281 = vpack.c.b16 %v179, %v177
  %v282 = vpack.c.b16 %v180, %v178
  %v283 = vpack.c.b16 %v183, %v181
  %v284 = vpack.c.b16 %v184, %v182
  %v285 = vpack.c.b16 %v187, %v185
  %v286 = vpack.c.b16 %v188, %v186
  %v287 = vpack.c.b16 %v191, %v189
  %v288 = vpack.c.b16 %v192, %v190
  %v289 = vpack.c.b16 %v195, %v193
  %v290 = vpack.c.b16 %v196, %v194
  %v291 = vpack.c.b16 %v199, %v197
  %v292 = vpack.c.b16 %v200, %v198
  %v293 = vpack.c.b16 %v203, %v201
  %v294 = vpack.c.b16 %v204, %v202
  %v295 = vpack.c.b16 %v207, %v205
  %v296 = vpack.c.b16 %v208, %v206
  %v297 = vpack.c.b16 %v211, %v209
  %v298 = vpack.c.b16 %v212, %v210
  %v299 = vpack.c.b16 %v215, %v213
  %v300 = vpack.c.b16 %v216, %v214
  %v301 = vpack.c.b16 %v219, %v217
  %v302 = vpack.c.b16 %v220, %v218
  %v303 = vpack.c.b16 %v223, %v221
  %v304 = vpack.c.b16 %v224, %v222
  %v305 = vpack.c.b16 %v227, %v225
  %v306 = vpack.c.b16 %v228, %v226
  %v307 = vpack.c.b16 %v231, %v229
  %v308 = vpack.c.b16 %v232, %v230
  %v309 = vpack.c.b16 %v235, %v233
  %v310 = vpack.c.b16 %v236, %v234
  %v311 = vpack.c.b16 %v239, %v237
  %v312 = vpack.c.b16 %v240, %v238
  %v313 = vpack.c.b16 %v243, %v241
  %v314 = vpack.c.b16 %v244, %v242
  %v315 = vpack.c.b16 %v247, %v245
  %v316 = vpack.c.b16 %v248, %v246
  %v317 = vpack.c.b16 %v251, %v249
  %v318 = vpack.c.b16 %v252, %v250
  %v319 = vpack.c.b16 %v255, %v253
  %v320 = vpack.c.b16 %v256, %v254
  %v321 = vpack.c.b16 %v259, %v257
  %v322 = vpack.c.b16 %v260, %v258
  %v323 = vpack.c.b16 %v263, %v261
  %v324 = vpack.c.b16 %v264, %v262
  %v325 = vpack.c.b16 %v267, %v265
  %v326 = vpack.c.b16 %v268, %v266
  %v327 = vpack.c.b16 %v269, %v269
  %v328 = vpack.c.b16 %v270, %v270
  %v382 = vunpack.c.l.b16 %v72
  %v383 = vunpack.c.l.b16 %v73
  %v384 = vunpack.c.l.b16 %v74
  %v385 = vunpack.c.l.b16 %v75
  %v386 = vunpack.c.l.b16 %v76
  %v387 = vunpack.c.l.b16 %v77
  %v388 = vunpack.c.l.b16 %v78
  %v389 = vunpack.c.l.b16 %v79
  %v390 = vunpack.c.l.b16 %v80
  %v391 = vunpack.c.l.b16 %v81
  %v392 = vunpack.c.l.b16 %v82
  %v393 = vunpack.c.l.b16 %v83
  %v394 = vunpack.c.l.b16 %v84
  %v395 = vunpack.c.l.b16 %v85
  %v396 = vunpack.c.l.b16 %v86
  %v397 = vunpack.c.l.b16 %v87
  %v398 = vunpack.c.l.b16 %v88
  %v399 = vunpack.c.l.b16 %v89
  %v400 = vunpack.c.l.b16 %v90
  %v401 = vunpack.c.l.b16 %v91
  %v402 = vunpack.c.l.b16 %v92
  %v403 = vunpack.c.l.b16 %v93
  %v404 = vunpack.c.l.b16 %v94
  %v405 = vunpack.c.l.b16 %v95
  %v406 = vpack.c.b16 %v383, %v382
  %v407 = vpack.c.b16 %v385, %v384
  %v408 = vpack.c.b16 %v387, %v386
  %v409 = vpack.c.b16 %v389, %v388
  %v410 = vpack.c.b16 %v391, %v390
  %v411 = vpack.c.b16 %v393, %v392
  %v412 = vpack.c.b16 %v395, %v394
  %v413 = vpack.c.b16 %v397, %v396
  %v414 = vpack.c.b16 %v399, %v398
  %v415 = vpack.c.b16 %v401, %v400
  %v416 = vpack.c.b16 %v403, %v402
  %v417 = vpack.c.b16 %v405, %v404
  %vm430 = vcmask 523264
  %v432 = vsel %vm430, %v272, 0
  %v435 = vsel %vm430, %v274, 0
  %v438 = vsel %vm430, %v276, 0
  %v441 = vsel %vm430, %v278, 0
  %v444 = vsel %vm430, %v280, 0
  %v447 = vsel %vm430, %v282, 0
  %v450 = vsel %vm430, %v284, 0
  %v453 = vsel %vm430, %v286, 0
  %v456 = vsel %vm430, %v288, 0
  %v459 = vsel %vm430, %v290, 0
  %v462 = vsel %vm430, %v292, 0
  %v465 = vsel %vm430, %v294, 0
  %v468 = vsel %vm430, %v296, 0
  %v471 = vsel %vm430, %v298, 0
  %v474 = vsel %vm430, %v300, 0
  %v477 = vsel %vm430, %v302, 0
  %v480 = vsel %vm430, %v304, 0
  %v483 = vsel %vm430, %v306, 0
  %v486 = vsel %vm430, %v308, 0
  %v489 = vsel %vm430, %v310, 0
  %v492 = vsel %vm430, %v312, 0
  %v495 = vsel %vm430, %v314, 0
  %v498 = vsel %vm430, %v316, 0
  %v501 = vsel %vm430, %v318, 0
  %v504 = vsel %vm430, %v320, 0
  %v507 = vsel %vm430, %v322, 0
  %v510 = vsel %vm430, %v324, 0
  %v513 = vsel %vm430, %v326, 0
  %v516 = vsel %vm430, %v328, 0
  %518 = vmatpush.bf16.msra.mxu0 %v413
  %519 = vmatpush.bf16.msra.mxu0 %v412
  %520 = vmatpush.bf16.msra.mxu0 %v411
  %521 = vmatpush.bf16.msra.mxu0 %v410
  %522 = vmatpush.bf16.msra.mxu0 %v409
  %523 = vmatpush.bf16.msra.mxu0 %v408
  %524 = vmatpush.bf16.msra.mxu0 %v407
  %525 = vmatpush.bf16.msra.mxu0 %v406
  %526 = vmatmul.bf16.gmra.mxu0 %v271
  %v527 = vpop.f32.mrf.mxu0
  %v528 = vadd.f32 %v98, %v527
  %v529 = vpop.f32.mrf.mxu0
  %v530 = vadd.f32 %v98, %v529
  %531 = vmatmul.bf16.gmra.mxu0 %v273
  %v532 = vpop.f32.mrf.mxu0
  %v533 = vadd.f32 %v98, %v532
  %v534 = vpop.f32.mrf.mxu0
  %v535 = vadd.f32 %v98, %v534
  %536 = vmatmul.bf16.gmra.mxu0 %v275
  %v537 = vpop.f32.mrf.mxu0
  %v538 = vadd.f32 %v98, %v537
  %v539 = vpop.f32.mrf.mxu0
  %v540 = vadd.f32 %v98, %v539
  %541 = vmatmul.bf16.gmra.mxu0 %v277
  %v542 = vpop.f32.mrf.mxu0
  %v543 = vadd.f32 %v98, %v542
  %v544 = vpop.f32.mrf.mxu0
  %v545 = vadd.f32 %v98, %v544
  %546 = vmatmul.bf16.gmra.mxu0 %v279
  %v547 = vpop.f32.mrf.mxu0
  %v548 = vadd.f32 %v98, %v547
  %v549 = vpop.f32.mrf.mxu0
  %v550 = vadd.f32 %v98, %v549
  %551 = vmatmul.bf16.gmra.mxu0 %v281
  %v552 = vpop.f32.mrf.mxu0
  %v553 = vadd.f32 %v98, %v552
  %v554 = vpop.f32.mrf.mxu0
  %v555 = vadd.f32 %v98, %v554
  %556 = vmatmul.bf16.gmra.mxu0 %v283
  %v557 = vpop.f32.mrf.mxu0
  %v558 = vadd.f32 %v98, %v557
  %v559 = vpop.f32.mrf.mxu0
  %v560 = vadd.f32 %v98, %v559
  %561 = vmatmul.bf16.gmra.mxu0 %v285
  %v562 = vpop.f32.mrf.mxu0
  %v563 = vadd.f32 %v98, %v562
  %v564 = vpop.f32.mrf.mxu0
  %v565 = vadd.f32 %v98, %v564
  %566 = vmatmul.bf16.gmra.mxu0 %v287
  %v567 = vpop.f32.mrf.mxu0
  %v568 = vadd.f32 %v98, %v567
  %v569 = vpop.f32.mrf.mxu0
  %v570 = vadd.f32 %v98, %v569
  %571 = vmatmul.bf16.gmra.mxu0 %v289
  %v572 = vpop.f32.mrf.mxu0
  %v573 = vadd.f32 %v98, %v572
  %v574 = vpop.f32.mrf.mxu0
  %v575 = vadd.f32 %v98, %v574
  %576 = vmatmul.bf16.gmra.mxu0 %v291
  %v577 = vpop.f32.mrf.mxu0
  %v578 = vadd.f32 %v98, %v577
  %v579 = vpop.f32.mrf.mxu0
  %v580 = vadd.f32 %v98, %v579
  %581 = vmatmul.bf16.gmra.mxu0 %v293
  %v582 = vpop.f32.mrf.mxu0
  %v583 = vadd.f32 %v98, %v582
  %v584 = vpop.f32.mrf.mxu0
  %v585 = vadd.f32 %v98, %v584
  %586 = vmatmul.bf16.gmra.mxu0 %v295
  %v587 = vpop.f32.mrf.mxu0
  %v588 = vadd.f32 %v98, %v587
  %v589 = vpop.f32.mrf.mxu0
  %v590 = vadd.f32 %v98, %v589
  %591 = vmatmul.bf16.gmra.mxu0 %v297
  %v592 = vpop.f32.mrf.mxu0
  %v593 = vadd.f32 %v98, %v592
  %v594 = vpop.f32.mrf.mxu0
  %v595 = vadd.f32 %v98, %v594
  %596 = vmatmul.bf16.gmra.mxu0 %v299
  %v597 = vpop.f32.mrf.mxu0
  %v598 = vadd.f32 %v98, %v597
  %v599 = vpop.f32.mrf.mxu0
  %v600 = vadd.f32 %v98, %v599
  %601 = vmatmul.bf16.gmra.mxu0 %v301
  %v602 = vpop.f32.mrf.mxu0
  %v603 = vadd.f32 %v98, %v602
  %v604 = vpop.f32.mrf.mxu0
  %v605 = vadd.f32 %v98, %v604
  %606 = vmatmul.bf16.gmra.mxu0 %v303
  %v607 = vpop.f32.mrf.mxu0
  %v608 = vadd.f32 %v98, %v607
  %v609 = vpop.f32.mrf.mxu0
  %v610 = vadd.f32 %v98, %v609
  %611 = vmatmul.bf16.gmra.mxu0 %v305
  %v612 = vpop.f32.mrf.mxu0
  %v613 = vadd.f32 %v98, %v612
  %v614 = vpop.f32.mrf.mxu0
  %v615 = vadd.f32 %v98, %v614
  %616 = vmatmul.bf16.gmra.mxu0 %v307
  %v617 = vpop.f32.mrf.mxu0
  %v618 = vadd.f32 %v98, %v617
  %v619 = vpop.f32.mrf.mxu0
  %v620 = vadd.f32 %v98, %v619
  %621 = vmatmul.bf16.gmra.mxu0 %v309
  %v622 = vpop.f32.mrf.mxu0
  %v623 = vadd.f32 %v98, %v622
  %v624 = vpop.f32.mrf.mxu0
  %v625 = vadd.f32 %v98, %v624
  %626 = vmatmul.bf16.gmra.mxu0 %v311
  %v627 = vpop.f32.mrf.mxu0
  %v628 = vadd.f32 %v98, %v627
  %v629 = vpop.f32.mrf.mxu0
  %v630 = vadd.f32 %v98, %v629
  %631 = vmatmul.bf16.gmra.mxu0 %v313
  %v632 = vpop.f32.mrf.mxu0
  %v633 = vadd.f32 %v98, %v632
  %v634 = vpop.f32.mrf.mxu0
  %v635 = vadd.f32 %v98, %v634
  %636 = vmatmul.bf16.gmra.mxu0 %v315
  %v637 = vpop.f32.mrf.mxu0
  %v638 = vadd.f32 %v98, %v637
  %v639 = vpop.f32.mrf.mxu0
  %v640 = vadd.f32 %v98, %v639
  %641 = vmatmul.bf16.gmra.mxu0 %v317
  %v642 = vpop.f32.mrf.mxu0
  %v643 = vadd.f32 %v98, %v642
  %v644 = vpop.f32.mrf.mxu0
  %v645 = vadd.f32 %v98, %v644
  %646 = vmatmul.bf16.gmra.mxu0 %v319
  %v647 = vpop.f32.mrf.mxu0
  %v648 = vadd.f32 %v98, %v647
  %v649 = vpop.f32.mrf.mxu0
  %v650 = vadd.f32 %v98, %v649
  %651 = vmatmul.bf16.gmra.mxu0 %v321
  %v652 = vpop.f32.mrf.mxu0
  %v653 = vadd.f32 %v98, %v652
  %v654 = vpop.f32.mrf.mxu0
  %v655 = vadd.f32 %v98, %v654
  %656 = vmatmul.bf16.gmra.mxu0 %v323
  %v657 = vpop.f32.mrf.mxu0
  %v658 = vadd.f32 %v98, %v657
  %v659 = vpop.f32.mrf.mxu0
  %v660 = vadd.f32 %v98, %v659
  %661 = vmatmul.bf16.gmra.mxu0 %v325
  %v662 = vpop.f32.mrf.mxu0
  %v663 = vadd.f32 %v98, %v662
  %v664 = vpop.f32.mrf.mxu0
  %v665 = vadd.f32 %v98, %v664
  %666 = vmatmul.bf16.gmra.mxu0 %v327
  %v667 = vpop.f32.mrf.mxu0
  %v668 = vadd.f32 %v98, %v667
  %v669 = vpop.f32.mrf.mxu0
  %670 = vdwg.mxu0
  %671 = vmatpush.bf16.msra.mxu0 0
  %672 = vmatpush.bf16.msra.mxu0 0
  %673 = vmatpush.bf16.msra.mxu0 0
  %674 = vmatpush.bf16.msra.mxu0 0
  %675 = vmatpush.bf16.msra.mxu0 %v417
  %676 = vmatpush.bf16.msra.mxu0 %v416
  %677 = vmatpush.bf16.msra.mxu0 %v415
  %678 = vmatpush.bf16.msra.mxu0 %v414
  %679 = vmatmul.bf16.gmra.mxu0 %v432
  %v680 = vpop.f32.mrf.mxu0
  %v681 = vadd.f32 %v528, %v680
  %v682 = vpop.f32.mrf.mxu0
  %v683 = vadd.f32 %v530, %v682
  %684 = vmatmul.bf16.gmra.mxu0 %v435
  %v685 = vpop.f32.mrf.mxu0
  %v686 = vadd.f32 %v533, %v685
  %v687 = vpop.f32.mrf.mxu0
  %v688 = vadd.f32 %v535, %v687
  %689 = vmatmul.bf16.gmra.mxu0 %v438
  %v690 = vpop.f32.mrf.mxu0
  %v691 = vadd.f32 %v538, %v690
  %v692 = vpop.f32.mrf.mxu0
  %v693 = vadd.f32 %v540, %v692
  %694 = vmatmul.bf16.gmra.mxu0 %v441
  %v695 = vpop.f32.mrf.mxu0
  %v696 = vadd.f32 %v543, %v695
  %v697 = vpop.f32.mrf.mxu0
  %v698 = vadd.f32 %v545, %v697
  %699 = vmatmul.bf16.gmra.mxu0 %v444
  %v700 = vpop.f32.mrf.mxu0
  %v701 = vadd.f32 %v548, %v700
  %v702 = vpop.f32.mrf.mxu0
  %v703 = vadd.f32 %v550, %v702
  %704 = vmatmul.bf16.gmra.mxu0 %v447
  %v705 = vpop.f32.mrf.mxu0
  %v706 = vadd.f32 %v553, %v705
  %v707 = vpop.f32.mrf.mxu0
  %v708 = vadd.f32 %v555, %v707
  %709 = vmatmul.bf16.gmra.mxu0 %v450
  %v710 = vpop.f32.mrf.mxu0
  %v711 = vadd.f32 %v558, %v710
  %v712 = vpop.f32.mrf.mxu0
  %v713 = vadd.f32 %v560, %v712
  %714 = vmatmul.bf16.gmra.mxu0 %v453
  %v715 = vpop.f32.mrf.mxu0
  %v716 = vadd.f32 %v563, %v715
  %v717 = vpop.f32.mrf.mxu0
  %v718 = vadd.f32 %v565, %v717
  %719 = vmatmul.bf16.gmra.mxu0 %v456
  %v720 = vpop.f32.mrf.mxu0
  %v721 = vadd.f32 %v568, %v720
  %v722 = vpop.f32.mrf.mxu0
  %v723 = vadd.f32 %v570, %v722
  %724 = vmatmul.bf16.gmra.mxu0 %v459
  %v725 = vpop.f32.mrf.mxu0
  %v726 = vadd.f32 %v573, %v725
  %v727 = vpop.f32.mrf.mxu0
  %v728 = vadd.f32 %v575, %v727
  %729 = vmatmul.bf16.gmra.mxu0 %v462
  %v730 = vpop.f32.mrf.mxu0
  %v731 = vadd.f32 %v578, %v730
  %v732 = vpop.f32.mrf.mxu0
  %v733 = vadd.f32 %v580, %v732
  %734 = vmatmul.bf16.gmra.mxu0 %v465
  %v735 = vpop.f32.mrf.mxu0
  %v736 = vadd.f32 %v583, %v735
  %v737 = vpop.f32.mrf.mxu0
  %v738 = vadd.f32 %v585, %v737
  %739 = vmatmul.bf16.gmra.mxu0 %v468
  %v740 = vpop.f32.mrf.mxu0
  %v741 = vadd.f32 %v588, %v740
  %v742 = vpop.f32.mrf.mxu0
  %v743 = vadd.f32 %v590, %v742
  %744 = vmatmul.bf16.gmra.mxu0 %v471
  %v745 = vpop.f32.mrf.mxu0
  %v746 = vadd.f32 %v593, %v745
  %v747 = vpop.f32.mrf.mxu0
  %v748 = vadd.f32 %v595, %v747
  %749 = vmatmul.bf16.gmra.mxu0 %v474
  %v750 = vpop.f32.mrf.mxu0
  %v751 = vadd.f32 %v598, %v750
  %v752 = vpop.f32.mrf.mxu0
  %v753 = vadd.f32 %v600, %v752
  %754 = vmatmul.bf16.gmra.mxu0 %v477
  %v755 = vpop.f32.mrf.mxu0
  %v756 = vadd.f32 %v603, %v755
  %v757 = vpop.f32.mrf.mxu0
  %v758 = vadd.f32 %v605, %v757
  %759 = vmatmul.bf16.gmra.mxu0 %v480
  %v760 = vpop.f32.mrf.mxu0
  %v761 = vadd.f32 %v608, %v760
  %v762 = vpop.f32.mrf.mxu0
  %v763 = vadd.f32 %v610, %v762
  %764 = vmatmul.bf16.gmra.mxu0 %v483
  %v765 = vpop.f32.mrf.mxu0
  %v766 = vadd.f32 %v613, %v765
  %v767 = vpop.f32.mrf.mxu0
  %v768 = vadd.f32 %v615, %v767
  %769 = vmatmul.bf16.gmra.mxu0 %v486
  %v770 = vpop.f32.mrf.mxu0
  %v771 = vadd.f32 %v618, %v770
  %v772 = vpop.f32.mrf.mxu0
  %v773 = vadd.f32 %v620, %v772
  %774 = vmatmul.bf16.gmra.mxu0 %v489
  %v775 = vpop.f32.mrf.mxu0
  %v776 = vadd.f32 %v623, %v775
  %v777 = vpop.f32.mrf.mxu0
  %v778 = vadd.f32 %v625, %v777
  %779 = vmatmul.bf16.gmra.mxu0 %v492
  %v780 = vpop.f32.mrf.mxu0
  %v781 = vadd.f32 %v628, %v780
  %v782 = vpop.f32.mrf.mxu0
  %v783 = vadd.f32 %v630, %v782
  %784 = vmatmul.bf16.gmra.mxu0 %v495
  %v785 = vpop.f32.mrf.mxu0
  %v786 = vadd.f32 %v633, %v785
  %v787 = vpop.f32.mrf.mxu0
  %v788 = vadd.f32 %v635, %v787
  %789 = vmatmul.bf16.gmra.mxu0 %v498
  %v790 = vpop.f32.mrf.mxu0
  %v791 = vadd.f32 %v638, %v790
  %v792 = vpop.f32.mrf.mxu0
  %v793 = vadd.f32 %v640, %v792
  %794 = vmatmul.bf16.gmra.mxu0 %v501
  %v795 = vpop.f32.mrf.mxu0
  %v796 = vadd.f32 %v643, %v795
  %v797 = vpop.f32.mrf.mxu0
  %v798 = vadd.f32 %v645, %v797
  %799 = vmatmul.bf16.gmra.mxu0 %v504
  %v800 = vpop.f32.mrf.mxu0
  %v801 = vadd.f32 %v648, %v800
  %v802 = vpop.f32.mrf.mxu0
  %v803 = vadd.f32 %v650, %v802
  %804 = vmatmul.bf16.gmra.mxu0 %v507
  %v805 = vpop.f32.mrf.mxu0
  %v806 = vadd.f32 %v653, %v805
  %v807 = vpop.f32.mrf.mxu0
  %v808 = vadd.f32 %v655, %v807
  %809 = vmatmul.bf16.gmra.mxu0 %v510
  %v810 = vpop.f32.mrf.mxu0
  %v811 = vadd.f32 %v658, %v810
  %v812 = vpop.f32.mrf.mxu0
  %v813 = vadd.f32 %v660, %v812
  %814 = vmatmul.bf16.gmra.mxu0 %v513
  %v815 = vpop.f32.mrf.mxu0
  %v816 = vadd.f32 %v663, %v815
  %v817 = vpop.f32.mrf.mxu0
  %v818 = vadd.f32 %v665, %v817
  %819 = vmatmul.bf16.gmra.mxu0 %v516
  %v820 = vpop.f32.mrf.mxu0
  %v821 = vadd.f32 %v668, %v820
  %v822 = vpop.f32.mrf.mxu0
  %823 = vdwg.mxu0
  %v824 = vmax.f32 %v681, 0.0
  %v825 = vmax.f32 %v683, 0.0
  %v826 = vmax.f32 %v686, 0.0
  %v827 = vmax.f32 %v688, 0.0
  %v828 = vmax.f32 %v691, 0.0
  %v829 = vmax.f32 %v693, 0.0
  %v830 = vmax.f32 %v696, 0.0
  %v831 = vmax.f32 %v698, 0.0
  %v832 = vmax.f32 %v701, 0.0
  %v833 = vmax.f32 %v703, 0.0
  %v834 = vmax.f32 %v706, 0.0
  %v835 = vmax.f32 %v708, 0.0
  %v836 = vmax.f32 %v711, 0.0
  %v837 = vmax.f32 %v713, 0.0
  %v838 = vmax.f32 %v716, 0.0
  %v839 = vmax.f32 %v718, 0.0
  %v840 = vmax.f32 %v721, 0.0
  %v841 = vmax.f32 %v723, 0.0
  %v842 = vmax.f32 %v726, 0.0
  %v843 = vmax.f32 %v728, 0.0
  %v844 = vmax.f32 %v731, 0.0
  %v845 = vmax.f32 %v733, 0.0
  %v846 = vmax.f32 %v736, 0.0
  %v847 = vmax.f32 %v738, 0.0
  %v848 = vmax.f32 %v741, 0.0
  %v849 = vmax.f32 %v743, 0.0
  %v850 = vmax.f32 %v746, 0.0
  %v851 = vmax.f32 %v748, 0.0
  %v852 = vmax.f32 %v751, 0.0
  %v853 = vmax.f32 %v753, 0.0
  %v854 = vmax.f32 %v756, 0.0
  %v855 = vmax.f32 %v758, 0.0
  %v856 = vmax.f32 %v761, 0.0
  %v857 = vmax.f32 %v763, 0.0
  %v858 = vmax.f32 %v766, 0.0
  %v859 = vmax.f32 %v768, 0.0
  %v860 = vmax.f32 %v771, 0.0
  %v861 = vmax.f32 %v773, 0.0
  %v862 = vmax.f32 %v776, 0.0
  %v863 = vmax.f32 %v778, 0.0
  %v864 = vmax.f32 %v781, 0.0
  %v865 = vmax.f32 %v783, 0.0
  %v866 = vmax.f32 %v786, 0.0
  %v867 = vmax.f32 %v788, 0.0
  %v868 = vmax.f32 %v791, 0.0
  %v869 = vmax.f32 %v793, 0.0
  %v870 = vmax.f32 %v796, 0.0
  %v871 = vmax.f32 %v798, 0.0
  %v872 = vmax.f32 %v801, 0.0
  %v873 = vmax.f32 %v803, 0.0
  %v874 = vmax.f32 %v806, 0.0
  %v875 = vmax.f32 %v808, 0.0
  %v876 = vmax.f32 %v811, 0.0
  %v877 = vmax.f32 %v813, 0.0
  %v878 = vmax.f32 %v816, 0.0
  %v879 = vmax.f32 %v818, 0.0
  %v880 = vmax.f32 %v821, 0.0
  %v881 = vpack.c.bf16 %v824, %v824
  %v882 = vpack.c.bf16 %v825, %v825
  %v883 = vpack.c.bf16 %v826, %v826
  %v884 = vpack.c.bf16 %v827, %v827
  %v885 = vpack.c.bf16 %v828, %v828
  %v886 = vpack.c.bf16 %v829, %v829
  %v887 = vpack.c.bf16 %v830, %v830
  %v888 = vpack.c.bf16 %v831, %v831
  %v889 = vpack.c.bf16 %v832, %v832
  %v890 = vpack.c.bf16 %v833, %v833
  %v891 = vpack.c.bf16 %v834, %v834
  %v892 = vpack.c.bf16 %v835, %v835
  %v893 = vpack.c.bf16 %v836, %v836
  %v894 = vpack.c.bf16 %v837, %v837
  %v895 = vpack.c.bf16 %v838, %v838
  %v896 = vpack.c.bf16 %v839, %v839
  %v897 = vpack.c.bf16 %v840, %v840
  %v898 = vpack.c.bf16 %v841, %v841
  %v899 = vpack.c.bf16 %v842, %v842
  %v900 = vpack.c.bf16 %v843, %v843
  %v901 = vpack.c.bf16 %v844, %v844
  %v902 = vpack.c.bf16 %v845, %v845
  %v903 = vpack.c.bf16 %v846, %v846
  %v904 = vpack.c.bf16 %v847, %v847
  %v905 = vpack.c.bf16 %v848, %v848
  %v906 = vpack.c.bf16 %v849, %v849
  %v907 = vpack.c.bf16 %v850, %v850
  %v908 = vpack.c.bf16 %v851, %v851
  %v909 = vpack.c.bf16 %v852, %v852
  %v910 = vpack.c.bf16 %v853, %v853
  %v911 = vpack.c.bf16 %v854, %v854
  %v912 = vpack.c.bf16 %v855, %v855
  %v913 = vpack.c.bf16 %v856, %v856
  %v914 = vpack.c.bf16 %v857, %v857
  %v915 = vpack.c.bf16 %v858, %v858
  %v916 = vpack.c.bf16 %v859, %v859
  %v917 = vpack.c.bf16 %v860, %v860
  %v918 = vpack.c.bf16 %v861, %v861
  %v919 = vpack.c.bf16 %v862, %v862
  %v920 = vpack.c.bf16 %v863, %v863
  %v921 = vpack.c.bf16 %v864, %v864
  %v922 = vpack.c.bf16 %v865, %v865
  %v923 = vpack.c.bf16 %v866, %v866
  %v924 = vpack.c.bf16 %v867, %v867
  %v925 = vpack.c.bf16 %v868, %v868
  %v926 = vpack.c.bf16 %v869, %v869
  %v927 = vpack.c.bf16 %v870, %v870
  %v928 = vpack.c.bf16 %v871, %v871
  %v929 = vpack.c.bf16 %v872, %v872
  %v930 = vpack.c.bf16 %v873, %v873
  %v931 = vpack.c.bf16 %v874, %v874
  %v932 = vpack.c.bf16 %v875, %v875
  %v933 = vpack.c.bf16 %v876, %v876
  %v934 = vpack.c.bf16 %v877, %v877
  %v935 = vpack.c.bf16 %v878, %v878
  %v936 = vpack.c.bf16 %v879, %v879
  %v937 = vpack.c.bf16 %v880, %v880
  %938 = vst [vmem:[%s3] sm:$0xf] %v881
  %939 = vst [vmem:[%s3 + $0x4] sm:$0xf] %v882
  %940 = vst [vmem:[%s3 + $0x8] sm:$0xf] %v883
  %941 = vst [vmem:[%s3 + $0xc] sm:$0xf] %v884
  %942 = vst [vmem:[%s3 + $0x10] sm:$0xf] %v885
  %943 = vst [vmem:[%s3 + $0x14] sm:$0xf] %v886
  %944 = vst [vmem:[%s3 + $0x18] sm:$0xf] %v887
  %945 = vst [vmem:[%s3 + $0x1c] sm:$0xf] %v888
  %946 = vst [vmem:[%s3 + $0x20] sm:$0xf] %v889
  %947 = vst [vmem:[%s3 + $0x24] sm:$0xf] %v890
  %948 = vst [vmem:[%s3 + $0x28] sm:$0xf] %v891
  %949 = vst [vmem:[%s3 + $0x2c] sm:$0xf] %v892
  %950 = vst [vmem:[%s3 + $0x30] sm:$0xf] %v893
  %951 = vst [vmem:[%s3 + $0x34] sm:$0xf] %v894
  %952 = vst [vmem:[%s3 + $0x38] sm:$0xf] %v895
  %953 = vst [vmem:[%s3 + $0x3c] sm:$0xf] %v896
  %954 = vst [vmem:[%s3 + $0x40] sm:$0xf] %v897
  %955 = vst [vmem:[%s3 + $0x44] sm:$0xf] %v898
  %956 = vst [vmem:[%s3 + $0x48] sm:$0xf] %v899
  %957 = vst [vmem:[%s3 + $0x4c] sm:$0xf] %v900
  %958 = vst [vmem:[%s3 + $0x50] sm:$0xf] %v901
  %959 = vst [vmem:[%s3 + $0x54] sm:$0xf] %v902
  %960 = vst [vmem:[%s3 + $0x58] sm:$0xf] %v903
  %961 = vst [vmem:[%s3 + $0x5c] sm:$0xf] %v904
  %962 = vst [vmem:[%s3 + $0x60] sm:$0xf] %v905
  %963 = vst [vmem:[%s3 + $0x64] sm:$0xf] %v906
  %964 = vst [vmem:[%s3 + $0x68] sm:$0xf] %v907
  %965 = vst [vmem:[%s3 + $0x6c] sm:$0xf] %v908
  %966 = vst [vmem:[%s3 + $0x70] sm:$0xf] %v909
  %967 = vst [vmem:[%s3 + $0x74] sm:$0xf] %v910
  %968 = vst [vmem:[%s3 + $0x78] sm:$0xf] %v911
  %969 = vst [vmem:[%s3 + $0x7c] sm:$0xf] %v912
  %970 = vst [vmem:[%s3 + $0x80] sm:$0xf] %v913
  %971 = vst [vmem:[%s3 + $0x84] sm:$0xf] %v914
  %972 = vst [vmem:[%s3 + $0x88] sm:$0xf] %v915
  %973 = vst [vmem:[%s3 + $0x8c] sm:$0xf] %v916
  %974 = vst [vmem:[%s3 + $0x90] sm:$0xf] %v917
  %975 = vst [vmem:[%s3 + $0x94] sm:$0xf] %v918
  %976 = vst [vmem:[%s3 + $0x98] sm:$0xf] %v919
  %977 = vst [vmem:[%s3 + $0x9c] sm:$0xf] %v920
  %978 = vst [vmem:[%s3 + $0xa0] sm:$0xf] %v921
  %979 = vst [vmem:[%s3 + $0xa4] sm:$0xf] %v922
  %980 = vst [vmem:[%s3 + $0xa8] sm:$0xf] %v923
  %981 = vst [vmem:[%s3 + $0xac] sm:$0xf] %v924
  %982 = vst [vmem:[%s3 + $0xb0] sm:$0xf] %v925
  %983 = vst [vmem:[%s3 + $0xb4] sm:$0xf] %v926
  %984 = vst [vmem:[%s3 + $0xb8] sm:$0xf] %v927
  %985 = vst [vmem:[%s3 + $0xbc] sm:$0xf] %v928
  %986 = vst [vmem:[%s3 + $0xc0] sm:$0xf] %v929
  %987 = vst [vmem:[%s3 + $0xc4] sm:$0xf] %v930
  %988 = vst [vmem:[%s3 + $0xc8] sm:$0xf] %v931
  %989 = vst [vmem:[%s3 + $0xcc] sm:$0xf] %v932
  %990 = vst [vmem:[%s3 + $0xd0] sm:$0xf] %v933
  %991 = vst [vmem:[%s3 + $0xd4] sm:$0xf] %v934
  %992 = vst [vmem:[%s3 + $0xd8] sm:$0xf] %v935
  %993 = vst [vmem:[%s3 + $0xdc] sm:$0xf] %v936
  %994 = vst [vmem:[%s3 + $0xe0] sm:$0x1] %v937
  // Predicated region
  $region14: #{auto_encoder_forward.5} parent=0 // pred_check
    _
  $region15: #{auto_encoder_forward.5} parent=0 // pred_check_branch
    %996 = sbr.rel (0) target = $region17
  $region16: #{auto_encoder_forward.5} parent=0 // pred_region
    _
  $region17: #{auto_encoder_forward.5} parent=0 // pred_fallthru
    _
  // Predicated region
  $region18: #{auto_encoder_forward.5} parent=0 // pred_check
    _
  $region19: #{auto_encoder_forward.5} parent=0 // pred_check_branch
    %998 = sbr.rel (0) target = $region21
  $region20: #{auto_encoder_forward.5} parent=0 // pred_region
    _
  $region21: #{auto_encoder_forward.5} parent=0 // pred_fallthru
    _

// kernel: auto_encoder_forward.6
$region0: #{auto_encoder_forward.6}
  #allocation0 [shape = 'u32[]', space=smem, size = 0x4, offset = 0x4, fixed_abs, tag = 'smem constant byte address 0x4 - core index']
  #allocation1 [shape = 'u32[72,128]{1,0:T(1,128)}', space=vmem, size = 0x9000, scoped, tag = 'internal scratch']
  %s0 = inlined_call_operand.vmem [shape: bf16[72,2048], index: 0, kind: input, shape index: {}]
  %s1 = inlined_call_operand.vmem [shape: bf16[2048,64], index: 1, kind: input, shape index: {}]
  %s2 = inlined_call_operand.vmem [shape: f32[1,64], index: 2, kind: input, shape index: {}]
  %s3 = inlined_call_operand.vmem [shape: bf16[72,64], index: 3, kind: output, shape index: {}]
  %s4 = sld [smem:[#allocation0]]
  $region22: #{auto_encoder_forward.6} parent=0
    _
  %s6 = ssub.s32 1, %s4
  %s7 = scalar_select 0, %s6, %s4
  // Predicated region
  $region2: #{auto_encoder_forward.6} parent=0 // pred_check
    _
  $region3: #{auto_encoder_forward.6} parent=0 // pred_check_branch
    %9 = sbr.rel (0) target = $region5
  $region4: #{auto_encoder_forward.6} parent=0 // pred_region
    _
  $region5: #{auto_encoder_forward.6} parent=0 // pred_fallthru
    _
  // Predicated region
  $region6: #{auto_encoder_forward.6} parent=0 // pred_check
    _
  $region7: #{auto_encoder_forward.6} parent=0 // pred_check_branch
    %11 = sbr.rel (0) target = $region9
  $region8: #{auto_encoder_forward.6} parent=0 // pred_region
    _
  $region9: #{auto_encoder_forward.6} parent=0 // pred_fallthru
    _
  // Predicated region
  $region10: #{auto_encoder_forward.6} parent=0 // pred_check
    _
  $region11: #{auto_encoder_forward.6} parent=0 // pred_check_branch
    %13 = sbr.rel (0) target = $region13
  $region12: #{auto_encoder_forward.6} parent=0 // pred_region
    _
  $region13: #{auto_encoder_forward.6} parent=0 // pred_fallthru
    _
  %v14 = vld [vmem:[%s0] sm:$0xff]
  %v15 = vld [vmem:[%s0 + $0x8] sm:$0xff]
  %v16 = vld [vmem:[%s0 + $0x10] sm:$0xff]
  %v17 = vld [vmem:[%s0 + $0x18] sm:$0xff]
  %v18 = vld [vmem:[%s0 + $0x20] sm:$0xff]
  %v19 = vld [vmem:[%s0 + $0x28] sm:$0xff]
  %v20 = vld [vmem:[%s0 + $0x30] sm:$0xff]
  %v21 = vld [vmem:[%s0 + $0x38] sm:$0xff]
  %v22 = vld [vmem:[%s0 + $0x40] sm:$0xff]
  %v23 = vld [vmem:[%s0 + $0x48] sm:$0xff]
  %v24 = vld [vmem:[%s0 + $0x50] sm:$0xff]
  %v25 = vld [vmem:[%s0 + $0x58] sm:$0xff]
  %v26 = vld [vmem:[%s0 + $0x60] sm:$0xff]
  %v27 = vld [vmem:[%s0 + $0x68] sm:$0xff]
  %v28 = vld [vmem:[%s0 + $0x70] sm:$0xff]
  %v29 = vld [vmem:[%s0 + $0x78] sm:$0xff]
  %v30 = vld [vmem:[%s0 + $0x80] sm:$0xff]
  %v31 = vld [vmem:[%s0 + $0x88] sm:$0xff]
  %v32 = vld [vmem:[%s0 + $0x90] sm:$0xff]
  %v33 = vld [vmem:[%s0 + $0x98] sm:$0xff]
  %v34 = vld [vmem:[%s0 + $0xa0] sm:$0xff]
  %v35 = vld [vmem:[%s0 + $0xa8] sm:$0xff]
  %v36 = vld [vmem:[%s0 + $0xb0] sm:$0xff]
  %v37 = vld [vmem:[%s0 + $0xb8] sm:$0xff]
  %v38 = vld [vmem:[%s0 + $0xc0] sm:$0xff]
  %v39 = vld [vmem:[%s0 + $0xc8] sm:$0xff]
  %v40 = vld [vmem:[%s0 + $0xd0] sm:$0xff]
  %v41 = vld [vmem:[%s0 + $0xd8] sm:$0xff]
  %v42 = vld [vmem:[%s0 + $0xe0] sm:$0xff]
  %v43 = vld [vmem:[%s0 + $0xe8] sm:$0xff]
  %v44 = vld [vmem:[%s0 + $0xf0] sm:$0xff]
  %v45 = vld [vmem:[%s0 + $0xf8] sm:$0xff]
  %v46 = vld [vmem:[%s0 + $0x100] sm:$0xff]
  %v47 = vld [vmem:[%s0 + $0x108] sm:$0xff]
  %v48 = vld [vmem:[%s0 + $0x110] sm:$0xff]
  %v49 = vld [vmem:[%s0 + $0x118] sm:$0xff]
  %v50 = vld [vmem:[%s0 + $0x120] sm:$0xff]
  %v51 = vld [vmem:[%s0 + $0x128] sm:$0xff]
  %v52 = vld [vmem:[%s0 + $0x130] sm:$0xff]
  %v53 = vld [vmem:[%s0 + $0x138] sm:$0xff]
  %v54 = vld [vmem:[%s0 + $0x140] sm:$0xff]
  %v55 = vld [vmem:[%s0 + $0x148] sm:$0xff]
  %v56 = vld [vmem:[%s0 + $0x150] sm:$0xff]
  %v57 = vld [vmem:[%s0 + $0x158] sm:$0xff]
  %v58 = vld [vmem:[%s0 + $0x160] sm:$0xff]
  %v59 = vld [vmem:[%s0 + $0x168] sm:$0xff]
  %v60 = vld [vmem:[%s0 + $0x170] sm:$0xff]
  %v61 = vld [vmem:[%s0 + $0x178] sm:$0xff]
  %v62 = vld [vmem:[%s0 + $0x180] sm:$0xff]
  %v63 = vld [vmem:[%s0 + $0x188] sm:$0xff]
  %v64 = vld [vmem:[%s0 + $0x190] sm:$0xff]
  %v65 = vld [vmem:[%s0 + $0x198] sm:$0xff]
  %v66 = vld [vmem:[%s0 + $0x1a0] sm:$0xff]
  %v67 = vld [vmem:[%s0 + $0x1a8] sm:$0xff]
  %v68 = vld [vmem:[%s0 + $0x1b0] sm:$0xff]
  %v69 = vld [vmem:[%s0 + $0x1b8] sm:$0xff]
  %v70 = vld [vmem:[%s0 + $0x1c0] sm:$0xff]
  %v71 = vld [vmem:[%s0 + $0x1c8] sm:$0xff]
  %v72 = vld [vmem:[%s0 + $0x1d0] sm:$0xff]
  %v73 = vld [vmem:[%s0 + $0x1d8] sm:$0xff]
  %v74 = vld [vmem:[%s0 + $0x1e0] sm:$0xff]
  %v75 = vld [vmem:[%s0 + $0x1e8] sm:$0xff]
  %v76 = vld [vmem:[%s0 + $0x1f0] sm:$0xff]
  %v77 = vld [vmem:[%s0 + $0x1f8] sm:$0xff]
  %v78 = vld [vmem:[%s0 + $0x200] sm:$0xff]
  %v79 = vld [vmem:[%s0 + $0x208] sm:$0xff]
  %v80 = vld [vmem:[%s0 + $0x210] sm:$0xff]
  %v81 = vld [vmem:[%s0 + $0x218] sm:$0xff]
  %v82 = vld [vmem:[%s0 + $0x220] sm:$0xff]
  %v83 = vld [vmem:[%s0 + $0x228] sm:$0xff]
  %v84 = vld [vmem:[%s0 + $0x230] sm:$0xff]
  %v85 = vld [vmem:[%s0 + $0x238] sm:$0xff]
  %v86 = vld [vmem:[%s1] sm:$0xf]
  %v87 = vld [vmem:[%s1 + $0x4] sm:$0xf]
  %v88 = vld [vmem:[%s1 + $0x8] sm:$0xf]
  %v89 = vld [vmem:[%s1 + $0xc] sm:$0xf]
  %v90 = vld [vmem:[%s1 + $0x10] sm:$0xf]
  %v91 = vld [vmem:[%s1 + $0x14] sm:$0xf]
  %v92 = vld [vmem:[%s1 + $0x18] sm:$0xf]
  %v93 = vld [vmem:[%s1 + $0x1c] sm:$0xf]
  %v94 = vld [vmem:[%s1 + $0x20] sm:$0xf]
  %v95 = vld [vmem:[%s1 + $0x24] sm:$0xf]
  %v96 = vld [vmem:[%s1 + $0x28] sm:$0xf]
  %v97 = vld [vmem:[%s1 + $0x2c] sm:$0xf]
  %v98 = vld [vmem:[%s1 + $0x30] sm:$0xf]
  %v99 = vld [vmem:[%s1 + $0x34] sm:$0xf]
  %v100 = vld [vmem:[%s1 + $0x38] sm:$0xf]
  %v101 = vld [vmem:[%s1 + $0x3c] sm:$0xf]
  %v102 = vld [vmem:[%s1 + $0x40] sm:$0xf]
  %v103 = vld [vmem:[%s1 + $0x44] sm:$0xf]
  %v104 = vld [vmem:[%s1 + $0x48] sm:$0xf]
  %v105 = vld [vmem:[%s1 + $0x4c] sm:$0xf]
  %v106 = vld [vmem:[%s1 + $0x50] sm:$0xf]
  %v107 = vld [vmem:[%s1 + $0x54] sm:$0xf]
  %v108 = vld [vmem:[%s1 + $0x58] sm:$0xf]
  %v109 = vld [vmem:[%s1 + $0x5c] sm:$0xf]
  %v110 = vld [vmem:[%s1 + $0x60] sm:$0xf]
  %v111 = vld [vmem:[%s1 + $0x64] sm:$0xf]
  %v112 = vld [vmem:[%s1 + $0x68] sm:$0xf]
  %v113 = vld [vmem:[%s1 + $0x6c] sm:$0xf]
  %v114 = vld [vmem:[%s1 + $0x70] sm:$0xf]
  %v115 = vld [vmem:[%s1 + $0x74] sm:$0xf]
  %v116 = vld [vmem:[%s1 + $0x78] sm:$0xf]
  %v117 = vld [vmem:[%s1 + $0x7c] sm:$0xf]
  %v118 = vld [vmem:[%s1 + $0x80] sm:$0xf]
  %v119 = vld [vmem:[%s1 + $0x84] sm:$0xf]
  %v120 = vld [vmem:[%s1 + $0x88] sm:$0xf]
  %v121 = vld [vmem:[%s1 + $0x8c] sm:$0xf]
  %v122 = vld [vmem:[%s1 + $0x90] sm:$0xf]
  %v123 = vld [vmem:[%s1 + $0x94] sm:$0xf]
  %v124 = vld [vmem:[%s1 + $0x98] sm:$0xf]
  %v125 = vld [vmem:[%s1 + $0x9c] sm:$0xf]
  %v126 = vld [vmem:[%s1 + $0xa0] sm:$0xf]
  %v127 = vld [vmem:[%s1 + $0xa4] sm:$0xf]
  %v128 = vld [vmem:[%s1 + $0xa8] sm:$0xf]
  %v129 = vld [vmem:[%s1 + $0xac] sm:$0xf]
  %v130 = vld [vmem:[%s1 + $0xb0] sm:$0xf]
  %v131 = vld [vmem:[%s1 + $0xb4] sm:$0xf]
  %v132 = vld [vmem:[%s1 + $0xb8] sm:$0xf]
  %v133 = vld [vmem:[%s1 + $0xbc] sm:$0xf]
  %v134 = vld [vmem:[%s1 + $0xc0] sm:$0xf]
  %v135 = vld [vmem:[%s1 + $0xc4] sm:$0xf]
  %v136 = vld [vmem:[%s1 + $0xc8] sm:$0xf]
  %v137 = vld [vmem:[%s1 + $0xcc] sm:$0xf]
  %v138 = vld [vmem:[%s1 + $0xd0] sm:$0xf]
  %v139 = vld [vmem:[%s1 + $0xd4] sm:$0xf]
  %v140 = vld [vmem:[%s1 + $0xd8] sm:$0xf]
  %v141 = vld [vmem:[%s1 + $0xdc] sm:$0xf]
  %v142 = vld [vmem:[%s1 + $0xe0] sm:$0xf]
  %v143 = vld [vmem:[%s1 + $0xe4] sm:$0xf]
  %v144 = vld [vmem:[%s1 + $0xe8] sm:$0xf]
  %v145 = vld [vmem:[%s1 + $0xec] sm:$0xf]
  %v146 = vld [vmem:[%s1 + $0xf0] sm:$0xf]
  %v147 = vld [vmem:[%s1 + $0xf4] sm:$0xf]
  %v148 = vld [vmem:[%s1 + $0xf8] sm:$0xf]
  %v149 = vld [vmem:[%s1 + $0xfc] sm:$0xf]
  %v150 = vld [vmem:[%s1 + $0x100] sm:$0xf]
  %v151 = vld [vmem:[%s1 + $0x104] sm:$0xf]
  %v152 = vld [vmem:[%s1 + $0x108] sm:$0xf]
  %v153 = vld [vmem:[%s1 + $0x10c] sm:$0xf]
  %v154 = vld [vmem:[%s1 + $0x110] sm:$0xf]
  %v155 = vld [vmem:[%s1 + $0x114] sm:$0xf]
  %v156 = vld [vmem:[%s1 + $0x118] sm:$0xf]
  %v157 = vld [vmem:[%s1 + $0x11c] sm:$0xf]
  %v158 = vld [vmem:[%s1 + $0x120] sm:$0xf]
  %v159 = vld [vmem:[%s1 + $0x124] sm:$0xf]
  %v160 = vld [vmem:[%s1 + $0x128] sm:$0xf]
  %v161 = vld [vmem:[%s1 + $0x12c] sm:$0xf]
  %v162 = vld [vmem:[%s1 + $0x130] sm:$0xf]
  %v163 = vld [vmem:[%s1 + $0x134] sm:$0xf]
  %v164 = vld [vmem:[%s1 + $0x138] sm:$0xf]
  %v165 = vld [vmem:[%s1 + $0x13c] sm:$0xf]
  %v166 = vld [vmem:[%s1 + $0x140] sm:$0xf]
  %v167 = vld [vmem:[%s1 + $0x144] sm:$0xf]
  %v168 = vld [vmem:[%s1 + $0x148] sm:$0xf]
  %v169 = vld [vmem:[%s1 + $0x14c] sm:$0xf]
  %v170 = vld [vmem:[%s1 + $0x150] sm:$0xf]
  %v171 = vld [vmem:[%s1 + $0x154] sm:$0xf]
  %v172 = vld [vmem:[%s1 + $0x158] sm:$0xf]
  %v173 = vld [vmem:[%s1 + $0x15c] sm:$0xf]
  %v174 = vld [vmem:[%s1 + $0x160] sm:$0xf]
  %v175 = vld [vmem:[%s1 + $0x164] sm:$0xf]
  %v176 = vld [vmem:[%s1 + $0x168] sm:$0xf]
  %v177 = vld [vmem:[%s1 + $0x16c] sm:$0xf]
  %v178 = vld [vmem:[%s1 + $0x170] sm:$0xf]
  %v179 = vld [vmem:[%s1 + $0x174] sm:$0xf]
  %v180 = vld [vmem:[%s1 + $0x178] sm:$0xf]
  %v181 = vld [vmem:[%s1 + $0x17c] sm:$0xf]
  %v182 = vld [vmem:[%s1 + $0x180] sm:$0xf]
  %v183 = vld [vmem:[%s1 + $0x184] sm:$0xf]
  %v184 = vld [vmem:[%s1 + $0x188] sm:$0xf]
  %v185 = vld [vmem:[%s1 + $0x18c] sm:$0xf]
  %v186 = vld [vmem:[%s1 + $0x190] sm:$0xf]
  %v187 = vld [vmem:[%s1 + $0x194] sm:$0xf]
  %v188 = vld [vmem:[%s1 + $0x198] sm:$0xf]
  %v189 = vld [vmem:[%s1 + $0x19c] sm:$0xf]
  %v190 = vld [vmem:[%s1 + $0x1a0] sm:$0xf]
  %v191 = vld [vmem:[%s1 + $0x1a4] sm:$0xf]
  %v192 = vld [vmem:[%s1 + $0x1a8] sm:$0xf]
  %v193 = vld [vmem:[%s1 + $0x1ac] sm:$0xf]
  %v194 = vld [vmem:[%s1 + $0x1b0] sm:$0xf]
  %v195 = vld [vmem:[%s1 + $0x1b4] sm:$0xf]
  %v196 = vld [vmem:[%s1 + $0x1b8] sm:$0xf]
  %v197 = vld [vmem:[%s1 + $0x1bc] sm:$0xf]
  %v198 = vld [vmem:[%s1 + $0x1c0] sm:$0xf]
  %v199 = vld [vmem:[%s1 + $0x1c4] sm:$0xf]
  %v200 = vld [vmem:[%s1 + $0x1c8] sm:$0xf]
  %v201 = vld [vmem:[%s1 + $0x1cc] sm:$0xf]
  %v202 = vld [vmem:[%s1 + $0x1d0] sm:$0xf]
  %v203 = vld [vmem:[%s1 + $0x1d4] sm:$0xf]
  %v204 = vld [vmem:[%s1 + $0x1d8] sm:$0xf]
  %v205 = vld [vmem:[%s1 + $0x1dc] sm:$0xf]
  %v206 = vld [vmem:[%s1 + $0x1e0] sm:$0xf]
  %v207 = vld [vmem:[%s1 + $0x1e4] sm:$0xf]
  %v208 = vld [vmem:[%s1 + $0x1e8] sm:$0xf]
  %v209 = vld [vmem:[%s1 + $0x1ec] sm:$0xf]
  %v210 = vld [vmem:[%s1 + $0x1f0] sm:$0xf]
  %v211 = vld [vmem:[%s1 + $0x1f4] sm:$0xf]
  %v212 = vld [vmem:[%s1 + $0x1f8] sm:$0xf]
  %v213 = vld [vmem:[%s1 + $0x1fc] sm:$0xf]
  %v214 = vld [vmem:[%s1 + $0x200] sm:$0xf]
  %v215 = vld [vmem:[%s1 + $0x204] sm:$0xf]
  %v216 = vld [vmem:[%s1 + $0x208] sm:$0xf]
  %v217 = vld [vmem:[%s1 + $0x20c] sm:$0xf]
  %v218 = vld [vmem:[%s1 + $0x210] sm:$0xf]
  %v219 = vld [vmem:[%s1 + $0x214] sm:$0xf]
  %v220 = vld [vmem:[%s1 + $0x218] sm:$0xf]
  %v221 = vld [vmem:[%s1 + $0x21c] sm:$0xf]
  %v222 = vld [vmem:[%s1 + $0x220] sm:$0xf]
  %v223 = vld [vmem:[%s1 + $0x224] sm:$0xf]
  %v224 = vld [vmem:[%s1 + $0x228] sm:$0xf]
  %v225 = vld [vmem:[%s1 + $0x22c] sm:$0xf]
  %v226 = vld [vmem:[%s1 + $0x230] sm:$0xf]
  %v227 = vld [vmem:[%s1 + $0x234] sm:$0xf]
  %v228 = vld [vmem:[%s1 + $0x238] sm:$0xf]
  %v229 = vld [vmem:[%s1 + $0x23c] sm:$0xf]
  %v230 = vld [vmem:[%s1 + $0x240] sm:$0xf]
  %v231 = vld [vmem:[%s1 + $0x244] sm:$0xf]
  %v232 = vld [vmem:[%s1 + $0x248] sm:$0xf]
  %v233 = vld [vmem:[%s1 + $0x24c] sm:$0xf]
  %v234 = vld [vmem:[%s1 + $0x250] sm:$0xf]
  %v235 = vld [vmem:[%s1 + $0x254] sm:$0xf]
  %v236 = vld [vmem:[%s1 + $0x258] sm:$0xf]
  %v237 = vld [vmem:[%s1 + $0x25c] sm:$0xf]
  %v238 = vld [vmem:[%s1 + $0x260] sm:$0xf]
  %v239 = vld [vmem:[%s1 + $0x264] sm:$0xf]
  %v240 = vld [vmem:[%s1 + $0x268] sm:$0xf]
  %v241 = vld [vmem:[%s1 + $0x26c] sm:$0xf]
  %v242 = vld [vmem:[%s1 + $0x270] sm:$0xf]
  %v243 = vld [vmem:[%s1 + $0x274] sm:$0xf]
  %v244 = vld [vmem:[%s1 + $0x278] sm:$0xf]
  %v245 = vld [vmem:[%s1 + $0x27c] sm:$0xf]
  %v246 = vld [vmem:[%s1 + $0x280] sm:$0xf]
  %v247 = vld [vmem:[%s1 + $0x284] sm:$0xf]
  %v248 = vld [vmem:[%s1 + $0x288] sm:$0xf]
  %v249 = vld [vmem:[%s1 + $0x28c] sm:$0xf]
  %v250 = vld [vmem:[%s1 + $0x290] sm:$0xf]
  %v251 = vld [vmem:[%s1 + $0x294] sm:$0xf]
  %v252 = vld [vmem:[%s1 + $0x298] sm:$0xf]
  %v253 = vld [vmem:[%s1 + $0x29c] sm:$0xf]
  %v254 = vld [vmem:[%s1 + $0x2a0] sm:$0xf]
  %v255 = vld [vmem:[%s1 + $0x2a4] sm:$0xf]
  %v256 = vld [vmem:[%s1 + $0x2a8] sm:$0xf]
  %v257 = vld [vmem:[%s1 + $0x2ac] sm:$0xf]
  %v258 = vld [vmem:[%s1 + $0x2b0] sm:$0xf]
  %v259 = vld [vmem:[%s1 + $0x2b4] sm:$0xf]
  %v260 = vld [vmem:[%s1 + $0x2b8] sm:$0xf]
  %v261 = vld [vmem:[%s1 + $0x2bc] sm:$0xf]
  %v262 = vld [vmem:[%s1 + $0x2c0] sm:$0xf]
  %v263 = vld [vmem:[%s1 + $0x2c4] sm:$0xf]
  %v264 = vld [vmem:[%s1 + $0x2c8] sm:$0xf]
  %v265 = vld [vmem:[%s1 + $0x2cc] sm:$0xf]
  %v266 = vld [vmem:[%s1 + $0x2d0] sm:$0xf]
  %v267 = vld [vmem:[%s1 + $0x2d4] sm:$0xf]
  %v268 = vld [vmem:[%s1 + $0x2d8] sm:$0xf]
  %v269 = vld [vmem:[%s1 + $0x2dc] sm:$0xf]
  %v270 = vld [vmem:[%s1 + $0x2e0] sm:$0xf]
  %v271 = vld [vmem:[%s1 + $0x2e4] sm:$0xf]
  %v272 = vld [vmem:[%s1 + $0x2e8] sm:$0xf]
  %v273 = vld [vmem:[%s1 + $0x2ec] sm:$0xf]
  %v274 = vld [vmem:[%s1 + $0x2f0] sm:$0xf]
  %v275 = vld [vmem:[%s1 + $0x2f4] sm:$0xf]
  %v276 = vld [vmem:[%s1 + $0x2f8] sm:$0xf]
  %v277 = vld [vmem:[%s1 + $0x2fc] sm:$0xf]
  %v278 = vld [vmem:[%s1 + $0x300] sm:$0xf]
  %v279 = vld [vmem:[%s1 + $0x304] sm:$0xf]
  %v280 = vld [vmem:[%s1 + $0x308] sm:$0xf]
  %v281 = vld [vmem:[%s1 + $0x30c] sm:$0xf]
  %v282 = vld [vmem:[%s1 + $0x310] sm:$0xf]
  %v283 = vld [vmem:[%s1 + $0x314] sm:$0xf]
  %v284 = vld [vmem:[%s1 + $0x318] sm:$0xf]
  %v285 = vld [vmem:[%s1 + $0x31c] sm:$0xf]
  %v286 = vld [vmem:[%s1 + $0x320] sm:$0xf]
  %v287 = vld [vmem:[%s1 + $0x324] sm:$0xf]
  %v288 = vld [vmem:[%s1 + $0x328] sm:$0xf]
  %v289 = vld [vmem:[%s1 + $0x32c] sm:$0xf]
  %v290 = vld [vmem:[%s1 + $0x330] sm:$0xf]
  %v291 = vld [vmem:[%s1 + $0x334] sm:$0xf]
  %v292 = vld [vmem:[%s1 + $0x338] sm:$0xf]
  %v293 = vld [vmem:[%s1 + $0x33c] sm:$0xf]
  %v294 = vld [vmem:[%s1 + $0x340] sm:$0xf]
  %v295 = vld [vmem:[%s1 + $0x344] sm:$0xf]
  %v296 = vld [vmem:[%s1 + $0x348] sm:$0xf]
  %v297 = vld [vmem:[%s1 + $0x34c] sm:$0xf]
  %v298 = vld [vmem:[%s1 + $0x350] sm:$0xf]
  %v299 = vld [vmem:[%s1 + $0x354] sm:$0xf]
  %v300 = vld [vmem:[%s1 + $0x358] sm:$0xf]
  %v301 = vld [vmem:[%s1 + $0x35c] sm:$0xf]
  %v302 = vld [vmem:[%s1 + $0x360] sm:$0xf]
  %v303 = vld [vmem:[%s1 + $0x364] sm:$0xf]
  %v304 = vld [vmem:[%s1 + $0x368] sm:$0xf]
  %v305 = vld [vmem:[%s1 + $0x36c] sm:$0xf]
  %v306 = vld [vmem:[%s1 + $0x370] sm:$0xf]
  %v307 = vld [vmem:[%s1 + $0x374] sm:$0xf]
  %v308 = vld [vmem:[%s1 + $0x378] sm:$0xf]
  %v309 = vld [vmem:[%s1 + $0x37c] sm:$0xf]
  %v310 = vld [vmem:[%s1 + $0x380] sm:$0xf]
  %v311 = vld [vmem:[%s1 + $0x384] sm:$0xf]
  %v312 = vld [vmem:[%s1 + $0x388] sm:$0xf]
  %v313 = vld [vmem:[%s1 + $0x38c] sm:$0xf]
  %v314 = vld [vmem:[%s1 + $0x390] sm:$0xf]
  %v315 = vld [vmem:[%s1 + $0x394] sm:$0xf]
  %v316 = vld [vmem:[%s1 + $0x398] sm:$0xf]
  %v317 = vld [vmem:[%s1 + $0x39c] sm:$0xf]
  %v318 = vld [vmem:[%s1 + $0x3a0] sm:$0xf]
  %v319 = vld [vmem:[%s1 + $0x3a4] sm:$0xf]
  %v320 = vld [vmem:[%s1 + $0x3a8] sm:$0xf]
  %v321 = vld [vmem:[%s1 + $0x3ac] sm:$0xf]
  %v322 = vld [vmem:[%s1 + $0x3b0] sm:$0xf]
  %v323 = vld [vmem:[%s1 + $0x3b4] sm:$0xf]
  %v324 = vld [vmem:[%s1 + $0x3b8] sm:$0xf]
  %v325 = vld [vmem:[%s1 + $0x3bc] sm:$0xf]
  %v326 = vld [vmem:[%s1 + $0x3c0] sm:$0xf]
  %v327 = vld [vmem:[%s1 + $0x3c4] sm:$0xf]
  %v328 = vld [vmem:[%s1 + $0x3c8] sm:$0xf]
  %v329 = vld [vmem:[%s1 + $0x3cc] sm:$0xf]
  %v330 = vld [vmem:[%s1 + $0x3d0] sm:$0xf]
  %v331 = vld [vmem:[%s1 + $0x3d4] sm:$0xf]
  %v332 = vld [vmem:[%s1 + $0x3d8] sm:$0xf]
  %v333 = vld [vmem:[%s1 + $0x3dc] sm:$0xf]
  %v334 = vld [vmem:[%s1 + $0x3e0] sm:$0xf]
  %v335 = vld [vmem:[%s1 + $0x3e4] sm:$0xf]
  %v336 = vld [vmem:[%s1 + $0x3e8] sm:$0xf]
  %v337 = vld [vmem:[%s1 + $0x3ec] sm:$0xf]
  %v338 = vld [vmem:[%s1 + $0x3f0] sm:$0xf]
  %v339 = vld [vmem:[%s1 + $0x3f4] sm:$0xf]
  %v340 = vld [vmem:[%s1 + $0x3f8] sm:$0xf]
  %v341 = vld [vmem:[%s1 + $0x3fc] sm:$0xf]
  %v342 = vld [vmem:[%s2] sm:$0x1]
  %v344 = vperm.slane %v342, 0
  %v418 = vunpack.c.l.b16 %v14
  %v419 = vunpack.c.h.b16 %v14
  %v420 = vunpack.c.l.b16 %v15
  %v421 = vunpack.c.h.b16 %v15
  %v422 = vunpack.c.l.b16 %v16
  %v423 = vunpack.c.h.b16 %v16
  %v424 = vunpack.c.l.b16 %v17
  %v425 = vunpack.c.h.b16 %v17
  %v426 = vunpack.c.l.b16 %v18
  %v427 = vunpack.c.h.b16 %v18
  %v428 = vunpack.c.l.b16 %v19
  %v429 = vunpack.c.h.b16 %v19
  %v430 = vunpack.c.l.b16 %v20
  %v431 = vunpack.c.h.b16 %v20
  %v432 = vunpack.c.l.b16 %v21
  %v433 = vunpack.c.h.b16 %v21
  %v434 = vunpack.c.l.b16 %v22
  %v435 = vunpack.c.h.b16 %v22
  %v436 = vunpack.c.l.b16 %v23
  %v437 = vunpack.c.h.b16 %v23
  %v438 = vunpack.c.l.b16 %v24
  %v439 = vunpack.c.h.b16 %v24
  %v440 = vunpack.c.l.b16 %v25
  %v441 = vunpack.c.h.b16 %v25
  %v442 = vunpack.c.l.b16 %v26
  %v443 = vunpack.c.h.b16 %v26
  %v444 = vunpack.c.l.b16 %v27
  %v445 = vunpack.c.h.b16 %v27
  %v446 = vunpack.c.l.b16 %v28
  %v447 = vunpack.c.h.b16 %v28
  %v448 = vunpack.c.l.b16 %v29
  %v449 = vunpack.c.h.b16 %v29
  %v450 = vunpack.c.l.b16 %v30
  %v451 = vunpack.c.h.b16 %v30
  %v452 = vunpack.c.l.b16 %v31
  %v453 = vunpack.c.h.b16 %v31
  %v454 = vunpack.c.l.b16 %v32
  %v455 = vunpack.c.h.b16 %v32
  %v456 = vunpack.c.l.b16 %v33
  %v457 = vunpack.c.h.b16 %v33
  %v458 = vunpack.c.l.b16 %v34
  %v459 = vunpack.c.h.b16 %v34
  %v460 = vunpack.c.l.b16 %v35
  %v461 = vunpack.c.h.b16 %v35
  %v462 = vunpack.c.l.b16 %v36
  %v463 = vunpack.c.h.b16 %v36
  %v464 = vunpack.c.l.b16 %v37
  %v465 = vunpack.c.h.b16 %v37
  %v466 = vunpack.c.l.b16 %v38
  %v467 = vunpack.c.h.b16 %v38
  %v468 = vunpack.c.l.b16 %v39
  %v469 = vunpack.c.h.b16 %v39
  %v470 = vunpack.c.l.b16 %v40
  %v471 = vunpack.c.h.b16 %v40
  %v472 = vunpack.c.l.b16 %v41
  %v473 = vunpack.c.h.b16 %v41
  %v474 = vunpack.c.l.b16 %v42
  %v475 = vunpack.c.h.b16 %v42
  %v476 = vunpack.c.l.b16 %v43
  %v477 = vunpack.c.h.b16 %v43
  %v478 = vunpack.c.l.b16 %v44
  %v479 = vunpack.c.h.b16 %v44
  %v480 = vunpack.c.l.b16 %v45
  %v481 = vunpack.c.h.b16 %v45
  %v482 = vunpack.c.l.b16 %v46
  %v483 = vunpack.c.h.b16 %v46
  %v484 = vunpack.c.l.b16 %v47
  %v485 = vunpack.c.h.b16 %v47
  %v486 = vunpack.c.l.b16 %v48
  %v487 = vunpack.c.h.b16 %v48
  %v488 = vunpack.c.l.b16 %v49
  %v489 = vunpack.c.h.b16 %v49
  %v490 = vunpack.c.l.b16 %v50
  %v491 = vunpack.c.h.b16 %v50
  %v492 = vunpack.c.l.b16 %v51
  %v493 = vunpack.c.h.b16 %v51
  %v494 = vunpack.c.l.b16 %v52
  %v495 = vunpack.c.h.b16 %v52
  %v496 = vunpack.c.l.b16 %v53
  %v497 = vunpack.c.h.b16 %v53
  %v498 = vunpack.c.l.b16 %v54
  %v499 = vunpack.c.h.b16 %v54
  %v500 = vunpack.c.l.b16 %v55
  %v501 = vunpack.c.h.b16 %v55
  %v502 = vunpack.c.l.b16 %v56
  %v503 = vunpack.c.h.b16 %v56
  %v504 = vunpack.c.l.b16 %v57
  %v505 = vunpack.c.h.b16 %v57
  %v506 = vunpack.c.l.b16 %v58
  %v507 = vunpack.c.h.b16 %v58
  %v508 = vunpack.c.l.b16 %v59
  %v509 = vunpack.c.h.b16 %v59
  %v510 = vunpack.c.l.b16 %v60
  %v511 = vunpack.c.h.b16 %v60
  %v512 = vunpack.c.l.b16 %v61
  %v513 = vunpack.c.h.b16 %v61
  %v514 = vunpack.c.l.b16 %v62
  %v515 = vunpack.c.h.b16 %v62
  %v516 = vunpack.c.l.b16 %v63
  %v517 = vunpack.c.h.b16 %v63
  %v518 = vunpack.c.l.b16 %v64
  %v519 = vunpack.c.h.b16 %v64
  %v520 = vunpack.c.l.b16 %v65
  %v521 = vunpack.c.h.b16 %v65
  %v522 = vunpack.c.l.b16 %v66
  %v523 = vunpack.c.h.b16 %v66
  %v524 = vunpack.c.l.b16 %v67
  %v525 = vunpack.c.h.b16 %v67
  %v526 = vunpack.c.l.b16 %v68
  %v527 = vunpack.c.h.b16 %v68
  %v528 = vunpack.c.l.b16 %v69
  %v529 = vunpack.c.h.b16 %v69
  %v530 = vunpack.c.l.b16 %v70
  %v531 = vunpack.c.h.b16 %v70
  %v532 = vunpack.c.l.b16 %v71
  %v533 = vunpack.c.h.b16 %v71
  %v534 = vunpack.c.l.b16 %v72
  %v535 = vunpack.c.h.b16 %v72
  %v536 = vunpack.c.l.b16 %v73
  %v537 = vunpack.c.h.b16 %v73
  %v538 = vunpack.c.l.b16 %v74
  %v539 = vunpack.c.h.b16 %v74
  %v540 = vunpack.c.l.b16 %v75
  %v541 = vunpack.c.h.b16 %v75
  %v542 = vunpack.c.l.b16 %v76
  %v543 = vunpack.c.h.b16 %v76
  %v544 = vunpack.c.l.b16 %v77
  %v545 = vunpack.c.h.b16 %v77
  %v546 = vunpack.c.l.b16 %v78
  %v547 = vunpack.c.h.b16 %v78
  %v548 = vunpack.c.l.b16 %v79
  %v549 = vunpack.c.h.b16 %v79
  %v550 = vunpack.c.l.b16 %v80
  %v551 = vunpack.c.h.b16 %v80
  %v552 = vunpack.c.l.b16 %v81
  %v553 = vunpack.c.h.b16 %v81
  %v554 = vunpack.c.l.b16 %v82
  %v555 = vunpack.c.h.b16 %v82
  %v556 = vunpack.c.l.b16 %v83
  %v557 = vunpack.c.h.b16 %v83
  %v558 = vunpack.c.l.b16 %v84
  %v559 = vunpack.c.h.b16 %v84
  %v560 = vunpack.c.l.b16 %v85
  %v561 = vunpack.c.h.b16 %v85
  %v562 = vpack.c.b16 %v434, %v418
  %v563 = vpack.c.b16 %v435, %v419
  %v564 = vpack.c.b16 %v436, %v420
  %v565 = vpack.c.b16 %v437, %v421
  %v566 = vpack.c.b16 %v438, %v422
  %v567 = vpack.c.b16 %v439, %v423
  %v568 = vpack.c.b16 %v440, %v424
  %v569 = vpack.c.b16 %v441, %v425
  %v570 = vpack.c.b16 %v442, %v426
  %v571 = vpack.c.b16 %v443, %v427
  %v572 = vpack.c.b16 %v444, %v428
  %v573 = vpack.c.b16 %v445, %v429
  %v574 = vpack.c.b16 %v446, %v430
  %v575 = vpack.c.b16 %v447, %v431
  %v576 = vpack.c.b16 %v448, %v432
  %v577 = vpack.c.b16 %v449, %v433
  %v578 = vpack.c.b16 %v466, %v450
  %v579 = vpack.c.b16 %v467, %v451
  %v580 = vpack.c.b16 %v468, %v452
  %v581 = vpack.c.b16 %v469, %v453
  %v582 = vpack.c.b16 %v470, %v454
  %v583 = vpack.c.b16 %v471, %v455
  %v584 = vpack.c.b16 %v472, %v456
  %v585 = vpack.c.b16 %v473, %v457
  %v586 = vpack.c.b16 %v474, %v458
  %v587 = vpack.c.b16 %v475, %v459
  %v588 = vpack.c.b16 %v476, %v460
  %v589 = vpack.c.b16 %v477, %v461
  %v590 = vpack.c.b16 %v478, %v462
  %v591 = vpack.c.b16 %v479, %v463
  %v592 = vpack.c.b16 %v480, %v464
  %v593 = vpack.c.b16 %v481, %v465
  %v594 = vpack.c.b16 %v498, %v482
  %v595 = vpack.c.b16 %v499, %v483
  %v596 = vpack.c.b16 %v500, %v484
  %v597 = vpack.c.b16 %v501, %v485
  %v598 = vpack.c.b16 %v502, %v486
  %v599 = vpack.c.b16 %v503, %v487
  %v600 = vpack.c.b16 %v504, %v488
  %v601 = vpack.c.b16 %v505, %v489
  %v602 = vpack.c.b16 %v506, %v490
  %v603 = vpack.c.b16 %v507, %v491
  %v604 = vpack.c.b16 %v508, %v492
  %v605 = vpack.c.b16 %v509, %v493
  %v606 = vpack.c.b16 %v510, %v494
  %v607 = vpack.c.b16 %v511, %v495
  %v608 = vpack.c.b16 %v512, %v496
  %v609 = vpack.c.b16 %v513, %v497
  %v610 = vpack.c.b16 %v530, %v514
  %v611 = vpack.c.b16 %v531, %v515
  %v612 = vpack.c.b16 %v532, %v516
  %v613 = vpack.c.b16 %v533, %v517
  %v614 = vpack.c.b16 %v534, %v518
  %v615 = vpack.c.b16 %v535, %v519
  %v616 = vpack.c.b16 %v536, %v520
  %v617 = vpack.c.b16 %v537, %v521
  %v618 = vpack.c.b16 %v538, %v522
  %v619 = vpack.c.b16 %v539, %v523
  %v620 = vpack.c.b16 %v540, %v524
  %v621 = vpack.c.b16 %v541, %v525
  %v622 = vpack.c.b16 %v542, %v526
  %v623 = vpack.c.b16 %v543, %v527
  %v624 = vpack.c.b16 %v544, %v528
  %v625 = vpack.c.b16 %v545, %v529
  %v626 = vpack.c.b16 %v546, %v546
  %v627 = vpack.c.b16 %v547, %v547
  %v628 = vpack.c.b16 %v548, %v548
  %v629 = vpack.c.b16 %v549, %v549
  %v630 = vpack.c.b16 %v550, %v550
  %v631 = vpack.c.b16 %v551, %v551
  %v632 = vpack.c.b16 %v552, %v552
  %v633 = vpack.c.b16 %v553, %v553
  %v634 = vpack.c.b16 %v554, %v554
  %v635 = vpack.c.b16 %v555, %v555
  %v636 = vpack.c.b16 %v556, %v556
  %v637 = vpack.c.b16 %v557, %v557
  %v638 = vpack.c.b16 %v558, %v558
  %v639 = vpack.c.b16 %v559, %v559
  %v640 = vpack.c.b16 %v560, %v560
  %v641 = vpack.c.b16 %v561, %v561
  %v978 = vunpack.c.l.b16 %v86
  %v979 = vunpack.c.l.b16 %v87
  %v980 = vunpack.c.l.b16 %v88
  %v981 = vunpack.c.l.b16 %v89
  %v982 = vunpack.c.l.b16 %v90
  %v983 = vunpack.c.l.b16 %v91
  %v984 = vunpack.c.l.b16 %v92
  %v985 = vunpack.c.l.b16 %v93
  %v986 = vunpack.c.l.b16 %v94
  %v987 = vunpack.c.l.b16 %v95
  %v988 = vunpack.c.l.b16 %v96
  %v989 = vunpack.c.l.b16 %v97
  %v990 = vunpack.c.l.b16 %v98
  %v991 = vunpack.c.l.b16 %v99
  %v992 = vunpack.c.l.b16 %v100
  %v993 = vunpack.c.l.b16 %v101
  %v994 = vunpack.c.l.b16 %v102
  %v995 = vunpack.c.l.b16 %v103
  %v996 = vunpack.c.l.b16 %v104
  %v997 = vunpack.c.l.b16 %v105
  %v998 = vunpack.c.l.b16 %v106
  %v999 = vunpack.c.l.b16 %v107
  %v1000 = vunpack.c.l.b16 %v108
  %v1001 = vunpack.c.l.b16 %v109
  %v1002 = vunpack.c.l.b16 %v110
  %v1003 = vunpack.c.l.b16 %v111
  %v1004 = vunpack.c.l.b16 %v112
  %v1005 = vunpack.c.l.b16 %v113
  %v1006 = vunpack.c.l.b16 %v114
  %v1007 = vunpack.c.l.b16 %v115
  %v1008 = vunpack.c.l.b16 %v116
  %v1009 = vunpack.c.l.b16 %v117
  %v1010 = vunpack.c.l.b16 %v118
  %v1011 = vunpack.c.l.b16 %v119
  %v1012 = vunpack.c.l.b16 %v120
  %v1013 = vunpack.c.l.b16 %v121
  %v1014 = vunpack.c.l.b16 %v122
  %v1015 = vunpack.c.l.b16 %v123
  %v1016 = vunpack.c.l.b16 %v124
  %v1017 = vunpack.c.l.b16 %v125
  %v1018 = vunpack.c.l.b16 %v126
  %v1019 = vunpack.c.l.b16 %v127
  %v1020 = vunpack.c.l.b16 %v128
  %v1021 = vunpack.c.l.b16 %v129
  %v1022 = vunpack.c.l.b16 %v130
  %v1023 = vunpack.c.l.b16 %v131
  %v1024 = vunpack.c.l.b16 %v132
  %v1025 = vunpack.c.l.b16 %v133
  %v1026 = vunpack.c.l.b16 %v134
  %v1027 = vunpack.c.l.b16 %v135
  %v1028 = vunpack.c.l.b16 %v136
  %v1029 = vunpack.c.l.b16 %v137
  %v1030 = vunpack.c.l.b16 %v138
  %v1031 = vunpack.c.l.b16 %v139
  %v1032 = vunpack.c.l.b16 %v140
  %v1033 = vunpack.c.l.b16 %v141
  %v1034 = vunpack.c.l.b16 %v142
  %v1035 = vunpack.c.l.b16 %v143
  %v1036 = vunpack.c.l.b16 %v144
  %v1037 = vunpack.c.l.b16 %v145
  %v1038 = vunpack.c.l.b16 %v146
  %v1039 = vunpack.c.l.b16 %v147
  %v1040 = vunpack.c.l.b16 %v148
  %v1041 = vunpack.c.l.b16 %v149
  %v1042 = vunpack.c.l.b16 %v150
  %v1043 = vunpack.c.l.b16 %v151
  %v1044 = vunpack.c.l.b16 %v152
  %v1045 = vunpack.c.l.b16 %v153
  %v1046 = vunpack.c.l.b16 %v154
  %v1047 = vunpack.c.l.b16 %v155
  %v1048 = vunpack.c.l.b16 %v156
  %v1049 = vunpack.c.l.b16 %v157
  %v1050 = vunpack.c.l.b16 %v158
  %v1051 = vunpack.c.l.b16 %v159
  %v1052 = vunpack.c.l.b16 %v160
  %v1053 = vunpack.c.l.b16 %v161
  %v1054 = vunpack.c.l.b16 %v162
  %v1055 = vunpack.c.l.b16 %v163
  %v1056 = vunpack.c.l.b16 %v164
  %v1057 = vunpack.c.l.b16 %v165
  %v1058 = vunpack.c.l.b16 %v166
  %v1059 = vunpack.c.l.b16 %v167
  %v1060 = vunpack.c.l.b16 %v168
  %v1061 = vunpack.c.l.b16 %v169
  %v1062 = vunpack.c.l.b16 %v170
  %v1063 = vunpack.c.l.b16 %v171
  %v1064 = vunpack.c.l.b16 %v172
  %v1065 = vunpack.c.l.b16 %v173
  %v1066 = vunpack.c.l.b16 %v174
  %v1067 = vunpack.c.l.b16 %v175
  %v1068 = vunpack.c.l.b16 %v176
  %v1069 = vunpack.c.l.b16 %v177
  %v1070 = vunpack.c.l.b16 %v178
  %v1071 = vunpack.c.l.b16 %v179
  %v1072 = vunpack.c.l.b16 %v180
  %v1073 = vunpack.c.l.b16 %v181
  %v1074 = vunpack.c.l.b16 %v182
  %v1075 = vunpack.c.l.b16 %v183
  %v1076 = vunpack.c.l.b16 %v184
  %v1077 = vunpack.c.l.b16 %v185
  %v1078 = vunpack.c.l.b16 %v186
  %v1079 = vunpack.c.l.b16 %v187
  %v1080 = vunpack.c.l.b16 %v188
  %v1081 = vunpack.c.l.b16 %v189
  %v1082 = vunpack.c.l.b16 %v190
  %v1083 = vunpack.c.l.b16 %v191
  %v1084 = vunpack.c.l.b16 %v192
  %v1085 = vunpack.c.l.b16 %v193
  %v1086 = vunpack.c.l.b16 %v194
  %v1087 = vunpack.c.l.b16 %v195
  %v1088 = vunpack.c.l.b16 %v196
  %v1089 = vunpack.c.l.b16 %v197
  %v1090 = vunpack.c.l.b16 %v198
  %v1091 = vunpack.c.l.b16 %v199
  %v1092 = vunpack.c.l.b16 %v200
  %v1093 = vunpack.c.l.b16 %v201
  %v1094 = vunpack.c.l.b16 %v202
  %v1095 = vunpack.c.l.b16 %v203
  %v1096 = vunpack.c.l.b16 %v204
  %v1097 = vunpack.c.l.b16 %v205
  %v1098 = vunpack.c.l.b16 %v206
  %v1099 = vunpack.c.l.b16 %v207
  %v1100 = vunpack.c.l.b16 %v208
  %v1101 = vunpack.c.l.b16 %v209
  %v1102 = vunpack.c.l.b16 %v210
  %v1103 = vunpack.c.l.b16 %v211
  %v1104 = vunpack.c.l.b16 %v212
  %v1105 = vunpack.c.l.b16 %v213
  %v1106 = vunpack.c.l.b16 %v214
  %v1107 = vunpack.c.l.b16 %v215
  %v1108 = vunpack.c.l.b16 %v216
  %v1109 = vunpack.c.l.b16 %v217
  %v1110 = vunpack.c.l.b16 %v218
  %v1111 = vunpack.c.l.b16 %v219
  %v1112 = vunpack.c.l.b16 %v220
  %v1113 = vunpack.c.l.b16 %v221
  %v1114 = vunpack.c.l.b16 %v222
  %v1115 = vunpack.c.l.b16 %v223
  %v1116 = vunpack.c.l.b16 %v224
  %v1117 = vunpack.c.l.b16 %v225
  %v1118 = vunpack.c.l.b16 %v226
  %v1119 = vunpack.c.l.b16 %v227
  %v1120 = vunpack.c.l.b16 %v228
  %v1121 = vunpack.c.l.b16 %v229
  %v1122 = vunpack.c.l.b16 %v230
  %v1123 = vunpack.c.l.b16 %v231
  %v1124 = vunpack.c.l.b16 %v232
  %v1125 = vunpack.c.l.b16 %v233
  %v1126 = vunpack.c.l.b16 %v234
  %v1127 = vunpack.c.l.b16 %v235
  %v1128 = vunpack.c.l.b16 %v236
  %v1129 = vunpack.c.l.b16 %v237
  %v1130 = vunpack.c.l.b16 %v238
  %v1131 = vunpack.c.l.b16 %v239
  %v1132 = vunpack.c.l.b16 %v240
  %v1133 = vunpack.c.l.b16 %v241
  %v1134 = vunpack.c.l.b16 %v242
  %v1135 = vunpack.c.l.b16 %v243
  %v1136 = vunpack.c.l.b16 %v244
  %v1137 = vunpack.c.l.b16 %v245
  %v1138 = vunpack.c.l.b16 %v246
  %v1139 = vunpack.c.l.b16 %v247
  %v1140 = vunpack.c.l.b16 %v248
  %v1141 = vunpack.c.l.b16 %v249
  %v1142 = vunpack.c.l.b16 %v250
  %v1143 = vunpack.c.l.b16 %v251
  %v1144 = vunpack.c.l.b16 %v252
  %v1145 = vunpack.c.l.b16 %v253
  %v1146 = vunpack.c.l.b16 %v254
  %v1147 = vunpack.c.l.b16 %v255
  %v1148 = vunpack.c.l.b16 %v256
  %v1149 = vunpack.c.l.b16 %v257
  %v1150 = vunpack.c.l.b16 %v258
  %v1151 = vunpack.c.l.b16 %v259
  %v1152 = vunpack.c.l.b16 %v260
  %v1153 = vunpack.c.l.b16 %v261
  %v1154 = vunpack.c.l.b16 %v262
  %v1155 = vunpack.c.l.b16 %v263
  %v1156 = vunpack.c.l.b16 %v264
  %v1157 = vunpack.c.l.b16 %v265
  %v1158 = vunpack.c.l.b16 %v266
  %v1159 = vunpack.c.l.b16 %v267
  %v1160 = vunpack.c.l.b16 %v268
  %v1161 = vunpack.c.l.b16 %v269
  %v1162 = vunpack.c.l.b16 %v270
  %v1163 = vunpack.c.l.b16 %v271
  %v1164 = vunpack.c.l.b16 %v272
  %v1165 = vunpack.c.l.b16 %v273
  %v1166 = vunpack.c.l.b16 %v274
  %v1167 = vunpack.c.l.b16 %v275
  %v1168 = vunpack.c.l.b16 %v276
  %v1169 = vunpack.c.l.b16 %v277
  %v1170 = vunpack.c.l.b16 %v278
  %v1171 = vunpack.c.l.b16 %v279
  %v1172 = vunpack.c.l.b16 %v280
  %v1173 = vunpack.c.l.b16 %v281
  %v1174 = vunpack.c.l.b16 %v282
  %v1175 = vunpack.c.l.b16 %v283
  %v1176 = vunpack.c.l.b16 %v284
  %v1177 = vunpack.c.l.b16 %v285
  %v1178 = vunpack.c.l.b16 %v286
  %v1179 = vunpack.c.l.b16 %v287
  %v1180 = vunpack.c.l.b16 %v288
  %v1181 = vunpack.c.l.b16 %v289
  %v1182 = vunpack.c.l.b16 %v290
  %v1183 = vunpack.c.l.b16 %v291
  %v1184 = vunpack.c.l.b16 %v292
  %v1185 = vunpack.c.l.b16 %v293
  %v1186 = vunpack.c.l.b16 %v294
  %v1187 = vunpack.c.l.b16 %v295
  %v1188 = vunpack.c.l.b16 %v296
  %v1189 = vunpack.c.l.b16 %v297
  %v1190 = vunpack.c.l.b16 %v298
  %v1191 = vunpack.c.l.b16 %v299
  %v1192 = vunpack.c.l.b16 %v300
  %v1193 = vunpack.c.l.b16 %v301
  %v1194 = vunpack.c.l.b16 %v302
  %v1195 = vunpack.c.l.b16 %v303
  %v1196 = vunpack.c.l.b16 %v304
  %v1197 = vunpack.c.l.b16 %v305
  %v1198 = vunpack.c.l.b16 %v306
  %v1199 = vunpack.c.l.b16 %v307
  %v1200 = vunpack.c.l.b16 %v308
  %v1201 = vunpack.c.l.b16 %v309
  %v1202 = vunpack.c.l.b16 %v310
  %v1203 = vunpack.c.l.b16 %v311
  %v1204 = vunpack.c.l.b16 %v312
  %v1205 = vunpack.c.l.b16 %v313
  %v1206 = vunpack.c.l.b16 %v314
  %v1207 = vunpack.c.l.b16 %v315
  %v1208 = vunpack.c.l.b16 %v316
  %v1209 = vunpack.c.l.b16 %v317
  %v1210 = vunpack.c.l.b16 %v318
  %v1211 = vunpack.c.l.b16 %v319
  %v1212 = vunpack.c.l.b16 %v320
  %v1213 = vunpack.c.l.b16 %v321
  %v1214 = vunpack.c.l.b16 %v322
  %v1215 = vunpack.c.l.b16 %v323
  %v1216 = vunpack.c.l.b16 %v324
  %v1217 = vunpack.c.l.b16 %v325
  %v1218 = vunpack.c.l.b16 %v326
  %v1219 = vunpack.c.l.b16 %v327
  %v1220 = vunpack.c.l.b16 %v328
  %v1221 = vunpack.c.l.b16 %v329
  %v1222 = vunpack.c.l.b16 %v330
  %v1223 = vunpack.c.l.b16 %v331
  %v1224 = vunpack.c.l.b16 %v332
  %v1225 = vunpack.c.l.b16 %v333
  %v1226 = vunpack.c.l.b16 %v334
  %v1227 = vunpack.c.l.b16 %v335
  %v1228 = vunpack.c.l.b16 %v336
  %v1229 = vunpack.c.l.b16 %v337
  %v1230 = vunpack.c.l.b16 %v338
  %v1231 = vunpack.c.l.b16 %v339
  %v1232 = vunpack.c.l.b16 %v340
  %v1233 = vunpack.c.l.b16 %v341
  %v1234 = vpack.c.b16 %v979, %v978
  %v1235 = vpack.c.b16 %v981, %v980
  %v1236 = vpack.c.b16 %v983, %v982
  %v1237 = vpack.c.b16 %v985, %v984
  %v1238 = vpack.c.b16 %v987, %v986
  %v1239 = vpack.c.b16 %v989, %v988
  %v1240 = vpack.c.b16 %v991, %v990
  %v1241 = vpack.c.b16 %v993, %v992
  %v1242 = vpack.c.b16 %v995, %v994
  %v1243 = vpack.c.b16 %v997, %v996
  %v1244 = vpack.c.b16 %v999, %v998
  %v1245 = vpack.c.b16 %v1001, %v1000
  %v1246 = vpack.c.b16 %v1003, %v1002
  %v1247 = vpack.c.b16 %v1005, %v1004
  %v1248 = vpack.c.b16 %v1007, %v1006
  %v1249 = vpack.c.b16 %v1009, %v1008
  %v1250 = vpack.c.b16 %v1011, %v1010
  %v1251 = vpack.c.b16 %v1013, %v1012
  %v1252 = vpack.c.b16 %v1015, %v1014
  %v1253 = vpack.c.b16 %v1017, %v1016
  %v1254 = vpack.c.b16 %v1019, %v1018
  %v1255 = vpack.c.b16 %v1021, %v1020
  %v1256 = vpack.c.b16 %v1023, %v1022
  %v1257 = vpack.c.b16 %v1025, %v1024
  %v1258 = vpack.c.b16 %v1027, %v1026
  %v1259 = vpack.c.b16 %v1029, %v1028
  %v1260 = vpack.c.b16 %v1031, %v1030
  %v1261 = vpack.c.b16 %v1033, %v1032
  %v1262 = vpack.c.b16 %v1035, %v1034
  %v1263 = vpack.c.b16 %v1037, %v1036
  %v1264 = vpack.c.b16 %v1039, %v1038
  %v1265 = vpack.c.b16 %v1041, %v1040
  %v1266 = vpack.c.b16 %v1043, %v1042
  %v1267 = vpack.c.b16 %v1045, %v1044
  %v1268 = vpack.c.b16 %v1047, %v1046
  %v1269 = vpack.c.b16 %v1049, %v1048
  %v1270 = vpack.c.b16 %v1051, %v1050
  %v1271 = vpack.c.b16 %v1053, %v1052
  %v1272 = vpack.c.b16 %v1055, %v1054
  %v1273 = vpack.c.b16 %v1057, %v1056
  %v1274 = vpack.c.b16 %v1059, %v1058
  %v1275 = vpack.c.b16 %v1061, %v1060
  %v1276 = vpack.c.b16 %v1063, %v1062
  %v1277 = vpack.c.b16 %v1065, %v1064
  %v1278 = vpack.c.b16 %v1067, %v1066
  %v1279 = vpack.c.b16 %v1069, %v1068
  %v1280 = vpack.c.b16 %v1071, %v1070
  %v1281 = vpack.c.b16 %v1073, %v1072
  %v1282 = vpack.c.b16 %v1075, %v1074
  %v1283 = vpack.c.b16 %v1077, %v1076
  %v1284 = vpack.c.b16 %v1079, %v1078
  %v1285 = vpack.c.b16 %v1081, %v1080
  %v1286 = vpack.c.b16 %v1083, %v1082
  %v1287 = vpack.c.b16 %v1085, %v1084
  %v1288 = vpack.c.b16 %v1087, %v1086
  %v1289 = vpack.c.b16 %v1089, %v1088
  %v1290 = vpack.c.b16 %v1091, %v1090
  %v1291 = vpack.c.b16 %v1093, %v1092
  %v1292 = vpack.c.b16 %v1095, %v1094
  %v1293 = vpack.c.b16 %v1097, %v1096
  %v1294 = vpack.c.b16 %v1099, %v1098
  %v1295 = vpack.c.b16 %v1101, %v1100
  %v1296 = vpack.c.b16 %v1103, %v1102
  %v1297 = vpack.c.b16 %v1105, %v1104
  %v1298 = vpack.c.b16 %v1107, %v1106
  %v1299 = vpack.c.b16 %v1109, %v1108
  %v1300 = vpack.c.b16 %v1111, %v1110
  %v1301 = vpack.c.b16 %v1113, %v1112
  %v1302 = vpack.c.b16 %v1115, %v1114
  %v1303 = vpack.c.b16 %v1117, %v1116
  %v1304 = vpack.c.b16 %v1119, %v1118
  %v1305 = vpack.c.b16 %v1121, %v1120
  %v1306 = vpack.c.b16 %v1123, %v1122
  %v1307 = vpack.c.b16 %v1125, %v1124
  %v1308 = vpack.c.b16 %v1127, %v1126
  %v1309 = vpack.c.b16 %v1129, %v1128
  %v1310 = vpack.c.b16 %v1131, %v1130
  %v1311 = vpack.c.b16 %v1133, %v1132
  %v1312 = vpack.c.b16 %v1135, %v1134
  %v1313 = vpack.c.b16 %v1137, %v1136
  %v1314 = vpack.c.b16 %v1139, %v1138
  %v1315 = vpack.c.b16 %v1141, %v1140
  %v1316 = vpack.c.b16 %v1143, %v1142
  %v1317 = vpack.c.b16 %v1145, %v1144
  %v1318 = vpack.c.b16 %v1147, %v1146
  %v1319 = vpack.c.b16 %v1149, %v1148
  %v1320 = vpack.c.b16 %v1151, %v1150
  %v1321 = vpack.c.b16 %v1153, %v1152
  %v1322 = vpack.c.b16 %v1155, %v1154
  %v1323 = vpack.c.b16 %v1157, %v1156
  %v1324 = vpack.c.b16 %v1159, %v1158
  %v1325 = vpack.c.b16 %v1161, %v1160
  %v1326 = vpack.c.b16 %v1163, %v1162
  %v1327 = vpack.c.b16 %v1165, %v1164
  %v1328 = vpack.c.b16 %v1167, %v1166
  %v1329 = vpack.c.b16 %v1169, %v1168
  %v1330 = vpack.c.b16 %v1171, %v1170
  %v1331 = vpack.c.b16 %v1173, %v1172
  %v1332 = vpack.c.b16 %v1175, %v1174
  %v1333 = vpack.c.b16 %v1177, %v1176
  %v1334 = vpack.c.b16 %v1179, %v1178
  %v1335 = vpack.c.b16 %v1181, %v1180
  %v1336 = vpack.c.b16 %v1183, %v1182
  %v1337 = vpack.c.b16 %v1185, %v1184
  %v1338 = vpack.c.b16 %v1187, %v1186
  %v1339 = vpack.c.b16 %v1189, %v1188
  %v1340 = vpack.c.b16 %v1191, %v1190
  %v1341 = vpack.c.b16 %v1193, %v1192
  %v1342 = vpack.c.b16 %v1195, %v1194
  %v1343 = vpack.c.b16 %v1197, %v1196
  %v1344 = vpack.c.b16 %v1199, %v1198
  %v1345 = vpack.c.b16 %v1201, %v1200
  %v1346 = vpack.c.b16 %v1203, %v1202
  %v1347 = vpack.c.b16 %v1205, %v1204
  %v1348 = vpack.c.b16 %v1207, %v1206
  %v1349 = vpack.c.b16 %v1209, %v1208
  %v1350 = vpack.c.b16 %v1211, %v1210
  %v1351 = vpack.c.b16 %v1213, %v1212
  %v1352 = vpack.c.b16 %v1215, %v1214
  %v1353 = vpack.c.b16 %v1217, %v1216
  %v1354 = vpack.c.b16 %v1219, %v1218
  %v1355 = vpack.c.b16 %v1221, %v1220
  %v1356 = vpack.c.b16 %v1223, %v1222
  %v1357 = vpack.c.b16 %v1225, %v1224
  %v1358 = vpack.c.b16 %v1227, %v1226
  %v1359 = vpack.c.b16 %v1229, %v1228
  %v1360 = vpack.c.b16 %v1231, %v1230
  %v1361 = vpack.c.b16 %v1233, %v1232
  %1490 = vmatpush.bf16.msra.mxu0 %v1241
  %1491 = vmatpush.bf16.msra.mxu0 %v1240
  %1492 = vmatpush.bf16.msra.mxu0 %v1239
  %1493 = vmatpush.bf16.msra.mxu0 %v1238
  %1494 = vmatpush.bf16.msra.mxu0 %v1237
  %1495 = vmatpush.bf16.msra.mxu0 %v1236
  %1496 = vmatpush.bf16.msra.mxu0 %v1235
  %1497 = vmatpush.bf16.msra.mxu0 %v1234
  %1498 = vmatmul.bf16.gmra.mxu0 %v562
  %v1499 = vpop.f32.mrf.mxu0
  %v1500 = vadd.f32 %v344, %v1499
  %v1501 = vpop.f32.mrf.mxu0
  %v1502 = vadd.f32 %v344, %v1501
  %1503 = vmatmul.bf16.gmra.mxu0 %v578
  %v1504 = vpop.f32.mrf.mxu0
  %v1505 = vadd.f32 %v344, %v1504
  %v1506 = vpop.f32.mrf.mxu0
  %v1507 = vadd.f32 %v344, %v1506
  %1508 = vmatmul.bf16.gmra.mxu0 %v594
  %v1509 = vpop.f32.mrf.mxu0
  %v1510 = vadd.f32 %v344, %v1509
  %v1511 = vpop.f32.mrf.mxu0
  %v1512 = vadd.f32 %v344, %v1511
  %1513 = vmatmul.bf16.gmra.mxu0 %v610
  %v1514 = vpop.f32.mrf.mxu0
  %v1515 = vadd.f32 %v344, %v1514
  %v1516 = vpop.f32.mrf.mxu0
  %v1517 = vadd.f32 %v344, %v1516
  %1518 = vmatmul.bf16.gmra.mxu0 %v626
  %v1519 = vpop.f32.mrf.mxu0
  %v1520 = vadd.f32 %v344, %v1519
  %v1521 = vpop.f32.mrf.mxu0
  %1522 = vdwg.mxu0
  %1523 = vmatpush.bf16.msra.mxu0 %v1249
  %1524 = vmatpush.bf16.msra.mxu0 %v1248
  %1525 = vmatpush.bf16.msra.mxu0 %v1247
  %1526 = vmatpush.bf16.msra.mxu0 %v1246
  %1527 = vmatpush.bf16.msra.mxu0 %v1245
  %1528 = vmatpush.bf16.msra.mxu0 %v1244
  %1529 = vmatpush.bf16.msra.mxu0 %v1243
  %1530 = vmatpush.bf16.msra.mxu0 %v1242
  %1531 = vmatmul.bf16.gmra.mxu0 %v563
  %v1532 = vpop.f32.mrf.mxu0
  %v1533 = vadd.f32 %v1500, %v1532
  %v1534 = vpop.f32.mrf.mxu0
  %v1535 = vadd.f32 %v1502, %v1534
  %1536 = vmatmul.bf16.gmra.mxu0 %v579
  %v1537 = vpop.f32.mrf.mxu0
  %v1538 = vadd.f32 %v1505, %v1537
  %v1539 = vpop.f32.mrf.mxu0
  %v1540 = vadd.f32 %v1507, %v1539
  %1541 = vmatmul.bf16.gmra.mxu0 %v595
  %v1542 = vpop.f32.mrf.mxu0
  %v1543 = vadd.f32 %v1510, %v1542
  %v1544 = vpop.f32.mrf.mxu0
  %v1545 = vadd.f32 %v1512, %v1544
  %1546 = vmatmul.bf16.gmra.mxu0 %v611
  %v1547 = vpop.f32.mrf.mxu0
  %v1548 = vadd.f32 %v1515, %v1547
  %v1549 = vpop.f32.mrf.mxu0
  %v1550 = vadd.f32 %v1517, %v1549
  %1551 = vmatmul.bf16.gmra.mxu0 %v627
  %v1552 = vpop.f32.mrf.mxu0
  %v1553 = vadd.f32 %v1520, %v1552
  %v1554 = vpop.f32.mrf.mxu0
  %1555 = vdwg.mxu0
  %1556 = vmatpush.bf16.msra.mxu0 %v1257
  %1557 = vmatpush.bf16.msra.mxu0 %v1256
  %1558 = vmatpush.bf16.msra.mxu0 %v1255
  %1559 = vmatpush.bf16.msra.mxu0 %v1254
  %1560 = vmatpush.bf16.msra.mxu0 %v1253
  %1561 = vmatpush.bf16.msra.mxu0 %v1252
  %1562 = vmatpush.bf16.msra.mxu0 %v1251
  %1563 = vmatpush.bf16.msra.mxu0 %v1250
  %1564 = vmatmul.bf16.gmra.mxu0 %v564
  %v1565 = vpop.f32.mrf.mxu0
  %v1566 = vadd.f32 %v1533, %v1565
  %v1567 = vpop.f32.mrf.mxu0
  %v1568 = vadd.f32 %v1535, %v1567
  %1569 = vmatmul.bf16.gmra.mxu0 %v580
  %v1570 = vpop.f32.mrf.mxu0
  %v1571 = vadd.f32 %v1538, %v1570
  %v1572 = vpop.f32.mrf.mxu0
  %v1573 = vadd.f32 %v1540, %v1572
  %1574 = vmatmul.bf16.gmra.mxu0 %v596
  %v1575 = vpop.f32.mrf.mxu0
  %v1576 = vadd.f32 %v1543, %v1575
  %v1577 = vpop.f32.mrf.mxu0
  %v1578 = vadd.f32 %v1545, %v1577
  %1579 = vmatmul.bf16.gmra.mxu0 %v612
  %v1580 = vpop.f32.mrf.mxu0
  %v1581 = vadd.f32 %v1548, %v1580
  %v1582 = vpop.f32.mrf.mxu0
  %v1583 = vadd.f32 %v1550, %v1582
  %1584 = vmatmul.bf16.gmra.mxu0 %v628
  %v1585 = vpop.f32.mrf.mxu0
  %v1586 = vadd.f32 %v1553, %v1585
  %v1587 = vpop.f32.mrf.mxu0
  %1588 = vdwg.mxu0
  %1589 = vmatpush.bf16.msra.mxu0 %v1265
  %1590 = vmatpush.bf16.msra.mxu0 %v1264
  %1591 = vmatpush.bf16.msra.mxu0 %v1263
  %1592 = vmatpush.bf16.msra.mxu0 %v1262
  %1593 = vmatpush.bf16.msra.mxu0 %v1261
  %1594 = vmatpush.bf16.msra.mxu0 %v1260
  %1595 = vmatpush.bf16.msra.mxu0 %v1259
  %1596 = vmatpush.bf16.msra.mxu0 %v1258
  %1597 = vmatmul.bf16.gmra.mxu0 %v565
  %v1598 = vpop.f32.mrf.mxu0
  %v1599 = vadd.f32 %v1566, %v1598
  %v1600 = vpop.f32.mrf.mxu0
  %v1601 = vadd.f32 %v1568, %v1600
  %1602 = vmatmul.bf16.gmra.mxu0 %v581
  %v1603 = vpop.f32.mrf.mxu0
  %v1604 = vadd.f32 %v1571, %v1603
  %v1605 = vpop.f32.mrf.mxu0
  %v1606 = vadd.f32 %v1573, %v1605
  %1607 = vmatmul.bf16.gmra.mxu0 %v597
  %v1608 = vpop.f32.mrf.mxu0
  %v1609 = vadd.f32 %v1576, %v1608
  %v1610 = vpop.f32.mrf.mxu0
  %v1611 = vadd.f32 %v1578, %v1610
  %1612 = vmatmul.bf16.gmra.mxu0 %v613
  %v1613 = vpop.f32.mrf.mxu0
  %v1614 = vadd.f32 %v1581, %v1613
  %v1615 = vpop.f32.mrf.mxu0
  %v1616 = vadd.f32 %v1583, %v1615
  %1617 = vmatmul.bf16.gmra.mxu0 %v629
  %v1618 = vpop.f32.mrf.mxu0
  %v1619 = vadd.f32 %v1586, %v1618
  %v1620 = vpop.f32.mrf.mxu0
  %1621 = vdwg.mxu0
  %1622 = vmatpush.bf16.msra.mxu0 %v1273
  %1623 = vmatpush.bf16.msra.mxu0 %v1272
  %1624 = vmatpush.bf16.msra.mxu0 %v1271
  %1625 = vmatpush.bf16.msra.mxu0 %v1270
  %1626 = vmatpush.bf16.msra.mxu0 %v1269
  %1627 = vmatpush.bf16.msra.mxu0 %v1268
  %1628 = vmatpush.bf16.msra.mxu0 %v1267
  %1629 = vmatpush.bf16.msra.mxu0 %v1266
  %1630 = vmatmul.bf16.gmra.mxu0 %v566
  %v1631 = vpop.f32.mrf.mxu0
  %v1632 = vadd.f32 %v1599, %v1631
  %v1633 = vpop.f32.mrf.mxu0
  %v1634 = vadd.f32 %v1601, %v1633
  %1635 = vmatmul.bf16.gmra.mxu0 %v582
  %v1636 = vpop.f32.mrf.mxu0
  %v1637 = vadd.f32 %v1604, %v1636
  %v1638 = vpop.f32.mrf.mxu0
  %v1639 = vadd.f32 %v1606, %v1638
  %1640 = vmatmul.bf16.gmra.mxu0 %v598
  %v1641 = vpop.f32.mrf.mxu0
  %v1642 = vadd.f32 %v1609, %v1641
  %v1643 = vpop.f32.mrf.mxu0
  %v1644 = vadd.f32 %v1611, %v1643
  %1645 = vmatmul.bf16.gmra.mxu0 %v614
  %v1646 = vpop.f32.mrf.mxu0
  %v1647 = vadd.f32 %v1614, %v1646
  %v1648 = vpop.f32.mrf.mxu0
  %v1649 = vadd.f32 %v1616, %v1648
  %1650 = vmatmul.bf16.gmra.mxu0 %v630
  %v1651 = vpop.f32.mrf.mxu0
  %v1652 = vadd.f32 %v1619, %v1651
  %v1653 = vpop.f32.mrf.mxu0
  %1654 = vdwg.mxu0
  %1655 = vmatpush.bf16.msra.mxu0 %v1281
  %1656 = vmatpush.bf16.msra.mxu0 %v1280
  %1657 = vmatpush.bf16.msra.mxu0 %v1279
  %1658 = vmatpush.bf16.msra.mxu0 %v1278
  %1659 = vmatpush.bf16.msra.mxu0 %v1277
  %1660 = vmatpush.bf16.msra.mxu0 %v1276
  %1661 = vmatpush.bf16.msra.mxu0 %v1275
  %1662 = vmatpush.bf16.msra.mxu0 %v1274
  %1663 = vmatmul.bf16.gmra.mxu0 %v567
  %v1664 = vpop.f32.mrf.mxu0
  %v1665 = vadd.f32 %v1632, %v1664
  %v1666 = vpop.f32.mrf.mxu0
  %v1667 = vadd.f32 %v1634, %v1666
  %1668 = vmatmul.bf16.gmra.mxu0 %v583
  %v1669 = vpop.f32.mrf.mxu0
  %v1670 = vadd.f32 %v1637, %v1669
  %v1671 = vpop.f32.mrf.mxu0
  %v1672 = vadd.f32 %v1639, %v1671
  %1673 = vmatmul.bf16.gmra.mxu0 %v599
  %v1674 = vpop.f32.mrf.mxu0
  %v1675 = vadd.f32 %v1642, %v1674
  %v1676 = vpop.f32.mrf.mxu0
  %v1677 = vadd.f32 %v1644, %v1676
  %1678 = vmatmul.bf16.gmra.mxu0 %v615
  %v1679 = vpop.f32.mrf.mxu0
  %v1680 = vadd.f32 %v1647, %v1679
  %v1681 = vpop.f32.mrf.mxu0
  %v1682 = vadd.f32 %v1649, %v1681
  %1683 = vmatmul.bf16.gmra.mxu0 %v631
  %v1684 = vpop.f32.mrf.mxu0
  %v1685 = vadd.f32 %v1652, %v1684
  %v1686 = vpop.f32.mrf.mxu0
  %1687 = vdwg.mxu0
  %1688 = vmatpush.bf16.msra.mxu0 %v1289
  %1689 = vmatpush.bf16.msra.mxu0 %v1288
  %1690 = vmatpush.bf16.msra.mxu0 %v1287
  %1691 = vmatpush.bf16.msra.mxu0 %v1286
  %1692 = vmatpush.bf16.msra.mxu0 %v1285
  %1693 = vmatpush.bf16.msra.mxu0 %v1284
  %1694 = vmatpush.bf16.msra.mxu0 %v1283
  %1695 = vmatpush.bf16.msra.mxu0 %v1282
  %1696 = vmatmul.bf16.gmra.mxu0 %v568
  %v1697 = vpop.f32.mrf.mxu0
  %v1698 = vadd.f32 %v1665, %v1697
  %v1699 = vpop.f32.mrf.mxu0
  %v1700 = vadd.f32 %v1667, %v1699
  %1701 = vmatmul.bf16.gmra.mxu0 %v584
  %v1702 = vpop.f32.mrf.mxu0
  %v1703 = vadd.f32 %v1670, %v1702
  %v1704 = vpop.f32.mrf.mxu0
  %v1705 = vadd.f32 %v1672, %v1704
  %1706 = vmatmul.bf16.gmra.mxu0 %v600
  %v1707 = vpop.f32.mrf.mxu0
  %v1708 = vadd.f32 %v1675, %v1707
  %v1709 = vpop.f32.mrf.mxu0
  %v1710 = vadd.f32 %v1677, %v1709
  %1711 = vmatmul.bf16.gmra.mxu0 %v616
  %v1712 = vpop.f32.mrf.mxu0
  %v1713 = vadd.f32 %v1680, %v1712
  %v1714 = vpop.f32.mrf.mxu0
  %v1715 = vadd.f32 %v1682, %v1714
  %1716 = vmatmul.bf16.gmra.mxu0 %v632
  %v1717 = vpop.f32.mrf.mxu0
  %v1718 = vadd.f32 %v1685, %v1717
  %v1719 = vpop.f32.mrf.mxu0
  %1720 = vdwg.mxu0
  %1721 = vmatpush.bf16.msra.mxu0 %v1297
  %1722 = vmatpush.bf16.msra.mxu0 %v1296
  %1723 = vmatpush.bf16.msra.mxu0 %v1295
  %1724 = vmatpush.bf16.msra.mxu0 %v1294
  %1725 = vmatpush.bf16.msra.mxu0 %v1293
  %1726 = vmatpush.bf16.msra.mxu0 %v1292
  %1727 = vmatpush.bf16.msra.mxu0 %v1291
  %1728 = vmatpush.bf16.msra.mxu0 %v1290
  %1729 = vmatmul.bf16.gmra.mxu0 %v569
  %v1730 = vpop.f32.mrf.mxu0
  %v1731 = vadd.f32 %v1698, %v1730
  %v1732 = vpop.f32.mrf.mxu0
  %v1733 = vadd.f32 %v1700, %v1732
  %1734 = vmatmul.bf16.gmra.mxu0 %v585
  %v1735 = vpop.f32.mrf.mxu0
  %v1736 = vadd.f32 %v1703, %v1735
  %v1737 = vpop.f32.mrf.mxu0
  %v1738 = vadd.f32 %v1705, %v1737
  %1739 = vmatmul.bf16.gmra.mxu0 %v601
  %v1740 = vpop.f32.mrf.mxu0
  %v1741 = vadd.f32 %v1708, %v1740
  %v1742 = vpop.f32.mrf.mxu0
  %v1743 = vadd.f32 %v1710, %v1742
  %1744 = vmatmul.bf16.gmra.mxu0 %v617
  %v1745 = vpop.f32.mrf.mxu0
  %v1746 = vadd.f32 %v1713, %v1745
  %v1747 = vpop.f32.mrf.mxu0
  %v1748 = vadd.f32 %v1715, %v1747
  %1749 = vmatmul.bf16.gmra.mxu0 %v633
  %v1750 = vpop.f32.mrf.mxu0
  %v1751 = vadd.f32 %v1718, %v1750
  %v1752 = vpop.f32.mrf.mxu0
  %1753 = vdwg.mxu0
  %1754 = vmatpush.bf16.msra.mxu0 %v1305
  %1755 = vmatpush.bf16.msra.mxu0 %v1304
  %1756 = vmatpush.bf16.msra.mxu0 %v1303
  %1757 = vmatpush.bf16.msra.mxu0 %v1302
  %1758 = vmatpush.bf16.msra.mxu0 %v1301
  %1759 = vmatpush.bf16.msra.mxu0 %v1300
  %1760 = vmatpush.bf16.msra.mxu0 %v1299
  %1761 = vmatpush.bf16.msra.mxu0 %v1298
  %1762 = vmatmul.bf16.gmra.mxu0 %v570
  %v1763 = vpop.f32.mrf.mxu0
  %v1764 = vadd.f32 %v1731, %v1763
  %v1765 = vpop.f32.mrf.mxu0
  %v1766 = vadd.f32 %v1733, %v1765
  %1767 = vmatmul.bf16.gmra.mxu0 %v586
  %v1768 = vpop.f32.mrf.mxu0
  %v1769 = vadd.f32 %v1736, %v1768
  %v1770 = vpop.f32.mrf.mxu0
  %v1771 = vadd.f32 %v1738, %v1770
  %1772 = vmatmul.bf16.gmra.mxu0 %v602
  %v1773 = vpop.f32.mrf.mxu0
  %v1774 = vadd.f32 %v1741, %v1773
  %v1775 = vpop.f32.mrf.mxu0
  %v1776 = vadd.f32 %v1743, %v1775
  %1777 = vmatmul.bf16.gmra.mxu0 %v618
  %v1778 = vpop.f32.mrf.mxu0
  %v1779 = vadd.f32 %v1746, %v1778
  %v1780 = vpop.f32.mrf.mxu0
  %v1781 = vadd.f32 %v1748, %v1780
  %1782 = vmatmul.bf16.gmra.mxu0 %v634
  %v1783 = vpop.f32.mrf.mxu0
  %v1784 = vadd.f32 %v1751, %v1783
  %v1785 = vpop.f32.mrf.mxu0
  %1786 = vdwg.mxu0
  %1787 = vmatpush.bf16.msra.mxu0 %v1313
  %1788 = vmatpush.bf16.msra.mxu0 %v1312
  %1789 = vmatpush.bf16.msra.mxu0 %v1311
  %1790 = vmatpush.bf16.msra.mxu0 %v1310
  %1791 = vmatpush.bf16.msra.mxu0 %v1309
  %1792 = vmatpush.bf16.msra.mxu0 %v1308
  %1793 = vmatpush.bf16.msra.mxu0 %v1307
  %1794 = vmatpush.bf16.msra.mxu0 %v1306
  %1795 = vmatmul.bf16.gmra.mxu0 %v571
  %v1796 = vpop.f32.mrf.mxu0
  %v1797 = vadd.f32 %v1764, %v1796
  %v1798 = vpop.f32.mrf.mxu0
  %v1799 = vadd.f32 %v1766, %v1798
  %1800 = vmatmul.bf16.gmra.mxu0 %v587
  %v1801 = vpop.f32.mrf.mxu0
  %v1802 = vadd.f32 %v1769, %v1801
  %v1803 = vpop.f32.mrf.mxu0
  %v1804 = vadd.f32 %v1771, %v1803
  %1805 = vmatmul.bf16.gmra.mxu0 %v603
  %v1806 = vpop.f32.mrf.mxu0
  %v1807 = vadd.f32 %v1774, %v1806
  %v1808 = vpop.f32.mrf.mxu0
  %v1809 = vadd.f32 %v1776, %v1808
  %1810 = vmatmul.bf16.gmra.mxu0 %v619
  %v1811 = vpop.f32.mrf.mxu0
  %v1812 = vadd.f32 %v1779, %v1811
  %v1813 = vpop.f32.mrf.mxu0
  %v1814 = vadd.f32 %v1781, %v1813
  %1815 = vmatmul.bf16.gmra.mxu0 %v635
  %v1816 = vpop.f32.mrf.mxu0
  %v1817 = vadd.f32 %v1784, %v1816
  %v1818 = vpop.f32.mrf.mxu0
  %1819 = vdwg.mxu0
  %1820 = vmatpush.bf16.msra.mxu0 %v1321
  %1821 = vmatpush.bf16.msra.mxu0 %v1320
  %1822 = vmatpush.bf16.msra.mxu0 %v1319
  %1823 = vmatpush.bf16.msra.mxu0 %v1318
  %1824 = vmatpush.bf16.msra.mxu0 %v1317
  %1825 = vmatpush.bf16.msra.mxu0 %v1316
  %1826 = vmatpush.bf16.msra.mxu0 %v1315
  %1827 = vmatpush.bf16.msra.mxu0 %v1314
  %1828 = vmatmul.bf16.gmra.mxu0 %v572
  %v1829 = vpop.f32.mrf.mxu0
  %v1830 = vadd.f32 %v1797, %v1829
  %v1831 = vpop.f32.mrf.mxu0
  %v1832 = vadd.f32 %v1799, %v1831
  %1833 = vmatmul.bf16.gmra.mxu0 %v588
  %v1834 = vpop.f32.mrf.mxu0
  %v1835 = vadd.f32 %v1802, %v1834
  %v1836 = vpop.f32.mrf.mxu0
  %v1837 = vadd.f32 %v1804, %v1836
  %1838 = vmatmul.bf16.gmra.mxu0 %v604
  %v1839 = vpop.f32.mrf.mxu0
  %v1840 = vadd.f32 %v1807, %v1839
  %v1841 = vpop.f32.mrf.mxu0
  %v1842 = vadd.f32 %v1809, %v1841
  %1843 = vmatmul.bf16.gmra.mxu0 %v620
  %v1844 = vpop.f32.mrf.mxu0
  %v1845 = vadd.f32 %v1812, %v1844
  %v1846 = vpop.f32.mrf.mxu0
  %v1847 = vadd.f32 %v1814, %v1846
  %1848 = vmatmul.bf16.gmra.mxu0 %v636
  %v1849 = vpop.f32.mrf.mxu0
  %v1850 = vadd.f32 %v1817, %v1849
  %v1851 = vpop.f32.mrf.mxu0
  %1852 = vdwg.mxu0
  %1853 = vmatpush.bf16.msra.mxu0 %v1329
  %1854 = vmatpush.bf16.msra.mxu0 %v1328
  %1855 = vmatpush.bf16.msra.mxu0 %v1327
  %1856 = vmatpush.bf16.msra.mxu0 %v1326
  %1857 = vmatpush.bf16.msra.mxu0 %v1325
  %1858 = vmatpush.bf16.msra.mxu0 %v1324
  %1859 = vmatpush.bf16.msra.mxu0 %v1323
  %1860 = vmatpush.bf16.msra.mxu0 %v1322
  %1861 = vmatmul.bf16.gmra.mxu0 %v573
  %v1862 = vpop.f32.mrf.mxu0
  %v1863 = vadd.f32 %v1830, %v1862
  %v1864 = vpop.f32.mrf.mxu0
  %v1865 = vadd.f32 %v1832, %v1864
  %1866 = vmatmul.bf16.gmra.mxu0 %v589
  %v1867 = vpop.f32.mrf.mxu0
  %v1868 = vadd.f32 %v1835, %v1867
  %v1869 = vpop.f32.mrf.mxu0
  %v1870 = vadd.f32 %v1837, %v1869
  %1871 = vmatmul.bf16.gmra.mxu0 %v605
  %v1872 = vpop.f32.mrf.mxu0
  %v1873 = vadd.f32 %v1840, %v1872
  %v1874 = vpop.f32.mrf.mxu0
  %v1875 = vadd.f32 %v1842, %v1874
  %1876 = vmatmul.bf16.gmra.mxu0 %v621
  %v1877 = vpop.f32.mrf.mxu0
  %v1878 = vadd.f32 %v1845, %v1877
  %v1879 = vpop.f32.mrf.mxu0
  %v1880 = vadd.f32 %v1847, %v1879
  %1881 = vmatmul.bf16.gmra.mxu0 %v637
  %v1882 = vpop.f32.mrf.mxu0
  %v1883 = vadd.f32 %v1850, %v1882
  %v1884 = vpop.f32.mrf.mxu0
  %1885 = vdwg.mxu0
  %1886 = vmatpush.bf16.msra.mxu0 %v1337
  %1887 = vmatpush.bf16.msra.mxu0 %v1336
  %1888 = vmatpush.bf16.msra.mxu0 %v1335
  %1889 = vmatpush.bf16.msra.mxu0 %v1334
  %1890 = vmatpush.bf16.msra.mxu0 %v1333
  %1891 = vmatpush.bf16.msra.mxu0 %v1332
  %1892 = vmatpush.bf16.msra.mxu0 %v1331
  %1893 = vmatpush.bf16.msra.mxu0 %v1330
  %1894 = vmatmul.bf16.gmra.mxu0 %v574
  %v1895 = vpop.f32.mrf.mxu0
  %v1896 = vadd.f32 %v1863, %v1895
  %v1897 = vpop.f32.mrf.mxu0
  %v1898 = vadd.f32 %v1865, %v1897
  %1899 = vmatmul.bf16.gmra.mxu0 %v590
  %v1900 = vpop.f32.mrf.mxu0
  %v1901 = vadd.f32 %v1868, %v1900
  %v1902 = vpop.f32.mrf.mxu0
  %v1903 = vadd.f32 %v1870, %v1902
  %1904 = vmatmul.bf16.gmra.mxu0 %v606
  %v1905 = vpop.f32.mrf.mxu0
  %v1906 = vadd.f32 %v1873, %v1905
  %v1907 = vpop.f32.mrf.mxu0
  %v1908 = vadd.f32 %v1875, %v1907
  %1909 = vmatmul.bf16.gmra.mxu0 %v622
  %v1910 = vpop.f32.mrf.mxu0
  %v1911 = vadd.f32 %v1878, %v1910
  %v1912 = vpop.f32.mrf.mxu0
  %v1913 = vadd.f32 %v1880, %v1912
  %1914 = vmatmul.bf16.gmra.mxu0 %v638
  %v1915 = vpop.f32.mrf.mxu0
  %v1916 = vadd.f32 %v1883, %v1915
  %v1917 = vpop.f32.mrf.mxu0
  %1918 = vdwg.mxu0
  %1919 = vmatpush.bf16.msra.mxu0 %v1345
  %1920 = vmatpush.bf16.msra.mxu0 %v1344
  %1921 = vmatpush.bf16.msra.mxu0 %v1343
  %1922 = vmatpush.bf16.msra.mxu0 %v1342
  %1923 = vmatpush.bf16.msra.mxu0 %v1341
  %1924 = vmatpush.bf16.msra.mxu0 %v1340
  %1925 = vmatpush.bf16.msra.mxu0 %v1339
  %1926 = vmatpush.bf16.msra.mxu0 %v1338
  %1927 = vmatmul.bf16.gmra.mxu0 %v575
  %v1928 = vpop.f32.mrf.mxu0
  %v1929 = vadd.f32 %v1896, %v1928
  %v1930 = vpop.f32.mrf.mxu0
  %v1931 = vadd.f32 %v1898, %v1930
  %1932 = vmatmul.bf16.gmra.mxu0 %v591
  %v1933 = vpop.f32.mrf.mxu0
  %v1934 = vadd.f32 %v1901, %v1933
  %v1935 = vpop.f32.mrf.mxu0
  %v1936 = vadd.f32 %v1903, %v1935
  %1937 = vmatmul.bf16.gmra.mxu0 %v607
  %v1938 = vpop.f32.mrf.mxu0
  %v1939 = vadd.f32 %v1906, %v1938
  %v1940 = vpop.f32.mrf.mxu0
  %v1941 = vadd.f32 %v1908, %v1940
  %1942 = vmatmul.bf16.gmra.mxu0 %v623
  %v1943 = vpop.f32.mrf.mxu0
  %v1944 = vadd.f32 %v1911, %v1943
  %v1945 = vpop.f32.mrf.mxu0
  %v1946 = vadd.f32 %v1913, %v1945
  %1947 = vmatmul.bf16.gmra.mxu0 %v639
  %v1948 = vpop.f32.mrf.mxu0
  %v1949 = vadd.f32 %v1916, %v1948
  %v1950 = vpop.f32.mrf.mxu0
  %1951 = vdwg.mxu0
  %1952 = vmatpush.bf16.msra.mxu0 %v1353
  %1953 = vmatpush.bf16.msra.mxu0 %v1352
  %1954 = vmatpush.bf16.msra.mxu0 %v1351
  %1955 = vmatpush.bf16.msra.mxu0 %v1350
  %1956 = vmatpush.bf16.msra.mxu0 %v1349
  %1957 = vmatpush.bf16.msra.mxu0 %v1348
  %1958 = vmatpush.bf16.msra.mxu0 %v1347
  %1959 = vmatpush.bf16.msra.mxu0 %v1346
  %1960 = vmatmul.bf16.gmra.mxu0 %v576
  %v1961 = vpop.f32.mrf.mxu0
  %v1962 = vadd.f32 %v1929, %v1961
  %v1963 = vpop.f32.mrf.mxu0
  %v1964 = vadd.f32 %v1931, %v1963
  %1965 = vmatmul.bf16.gmra.mxu0 %v592
  %v1966 = vpop.f32.mrf.mxu0
  %v1967 = vadd.f32 %v1934, %v1966
  %v1968 = vpop.f32.mrf.mxu0
  %v1969 = vadd.f32 %v1936, %v1968
  %1970 = vmatmul.bf16.gmra.mxu0 %v608
  %v1971 = vpop.f32.mrf.mxu0
  %v1972 = vadd.f32 %v1939, %v1971
  %v1973 = vpop.f32.mrf.mxu0
  %v1974 = vadd.f32 %v1941, %v1973
  %1975 = vmatmul.bf16.gmra.mxu0 %v624
  %v1976 = vpop.f32.mrf.mxu0
  %v1977 = vadd.f32 %v1944, %v1976
  %v1978 = vpop.f32.mrf.mxu0
  %v1979 = vadd.f32 %v1946, %v1978
  %1980 = vmatmul.bf16.gmra.mxu0 %v640
  %v1981 = vpop.f32.mrf.mxu0
  %v1982 = vadd.f32 %v1949, %v1981
  %v1983 = vpop.f32.mrf.mxu0
  %1984 = vdwg.mxu0
  %1985 = vmatpush.bf16.msra.mxu0 %v1361
  %1986 = vmatpush.bf16.msra.mxu0 %v1360
  %1987 = vmatpush.bf16.msra.mxu0 %v1359
  %1988 = vmatpush.bf16.msra.mxu0 %v1358
  %1989 = vmatpush.bf16.msra.mxu0 %v1357
  %1990 = vmatpush.bf16.msra.mxu0 %v1356
  %1991 = vmatpush.bf16.msra.mxu0 %v1355
  %1992 = vmatpush.bf16.msra.mxu0 %v1354
  %1993 = vmatmul.bf16.gmra.mxu0 %v577
  %v1994 = vpop.f32.mrf.mxu0
  %v1995 = vadd.f32 %v1962, %v1994
  %v1996 = vpop.f32.mrf.mxu0
  %v1997 = vadd.f32 %v1964, %v1996
  %1998 = vmatmul.bf16.gmra.mxu0 %v593
  %v1999 = vpop.f32.mrf.mxu0
  %v2000 = vadd.f32 %v1967, %v1999
  %v2001 = vpop.f32.mrf.mxu0
  %v2002 = vadd.f32 %v1969, %v2001
  %2003 = vmatmul.bf16.gmra.mxu0 %v609
  %v2004 = vpop.f32.mrf.mxu0
  %v2005 = vadd.f32 %v1972, %v2004
  %v2006 = vpop.f32.mrf.mxu0
  %v2007 = vadd.f32 %v1974, %v2006
  %2008 = vmatmul.bf16.gmra.mxu0 %v625
  %v2009 = vpop.f32.mrf.mxu0
  %v2010 = vadd.f32 %v1977, %v2009
  %v2011 = vpop.f32.mrf.mxu0
  %v2012 = vadd.f32 %v1979, %v2011
  %2013 = vmatmul.bf16.gmra.mxu0 %v641
  %v2014 = vpop.f32.mrf.mxu0
  %v2015 = vadd.f32 %v1982, %v2014
  %v2016 = vpop.f32.mrf.mxu0
  %2017 = vdwg.mxu0
  %v2018 = vmax.f32 %v1995, 0.0
  %v2019 = vmax.f32 %v1997, 0.0
  %v2020 = vmax.f32 %v2000, 0.0
  %v2021 = vmax.f32 %v2002, 0.0
  %v2022 = vmax.f32 %v2005, 0.0
  %v2023 = vmax.f32 %v2007, 0.0
  %v2024 = vmax.f32 %v2010, 0.0
  %v2025 = vmax.f32 %v2012, 0.0
  %v2026 = vmax.f32 %v2015, 0.0
  %v2027 = vpack.c.bf16 %v2018, %v2018
  %v2028 = vpack.c.bf16 %v2019, %v2019
  %v2029 = vpack.c.bf16 %v2020, %v2020
  %v2030 = vpack.c.bf16 %v2021, %v2021
  %v2031 = vpack.c.bf16 %v2022, %v2022
  %v2032 = vpack.c.bf16 %v2023, %v2023
  %v2033 = vpack.c.bf16 %v2024, %v2024
  %v2034 = vpack.c.bf16 %v2025, %v2025
  %v2035 = vpack.c.bf16 %v2026, %v2026
  %vm2036 = vcmask 519168
  %2037 = vst.msk [vmem:[%s3] sm:$0xf] %vm2036, %v2027
  %2038 = vst.msk [vmem:[%s3 + $0x4] sm:$0xf] %vm2036, %v2028
  %2039 = vst.msk [vmem:[%s3 + $0x8] sm:$0xf] %vm2036, %v2029
  %2040 = vst.msk [vmem:[%s3 + $0xc] sm:$0xf] %vm2036, %v2030
  %2041 = vst.msk [vmem:[%s3 + $0x10] sm:$0xf] %vm2036, %v2031
  %2042 = vst.msk [vmem:[%s3 + $0x14] sm:$0xf] %vm2036, %v2032
  %2043 = vst.msk [vmem:[%s3 + $0x18] sm:$0xf] %vm2036, %v2033
  %2044 = vst.msk [vmem:[%s3 + $0x1c] sm:$0xf] %vm2036, %v2034
  %2045 = vst.msk [vmem:[%s3 + $0x20] sm:$0xf] %vm2036, %v2035
  // Predicated region
  $region14: #{auto_encoder_forward.6} parent=0 // pred_check
    _
  $region15: #{auto_encoder_forward.6} parent=0 // pred_check_branch
    %2047 = sbr.rel (0) target = $region17
  $region16: #{auto_encoder_forward.6} parent=0 // pred_region
    _
  $region17: #{auto_encoder_forward.6} parent=0 // pred_fallthru
    _
  // Predicated region
  $region18: #{auto_encoder_forward.6} parent=0 // pred_check
    _
  $region19: #{auto_encoder_forward.6} parent=0 // pred_check_branch
    %2049 = sbr.rel (0) target = $region21
  $region20: #{auto_encoder_forward.6} parent=0 // pred_region
    _
  $region21: #{auto_encoder_forward.6} parent=0 // pred_fallthru
    _

// kernel: auto_encoder_forward.7
$region0: #{auto_encoder_forward.7}
  #allocation0 [shape = 'u32[]', space=smem, size = 0x4, offset = 0x4, fixed_abs, tag = 'smem constant byte address 0x4 - core index']
  #allocation1 [shape = 'u32[72,128]{1,0:T(1,128)}', space=vmem, size = 0x9000, scoped, tag = 'internal scratch']
  %s0 = inlined_call_operand.vmem [shape: bf16[8,1024], index: 0, kind: input, shape index: {}]
  %s1 = inlined_call_operand.vmem [shape: bf16[1024,64], index: 1, kind: input, shape index: {}]
  %s2 = inlined_call_operand.vmem [shape: f32[1,64], index: 2, kind: input, shape index: {}]
  %s3 = inlined_call_operand.vmem [shape: bf16[64,1024], index: 3, kind: input, shape index: {}]
  %s4 = inlined_call_operand.vmem [shape: f32[8,1024], index: 4, kind: output, shape index: {}]
  %s5 = sld [smem:[#allocation0]]
  $region26: #{auto_encoder_forward.7} parent=0
    _
  %s7 = ssub.s32 1, %s5
  %s8 = scalar_select 0, %s7, %s5
  // Predicated region
  $region2: #{auto_encoder_forward.7} parent=0 // pred_check
    _
  $region3: #{auto_encoder_forward.7} parent=0 // pred_check_branch
    %10 = sbr.rel (0) target = $region5
  $region4: #{auto_encoder_forward.7} parent=0 // pred_region
    _
  $region5: #{auto_encoder_forward.7} parent=0 // pred_fallthru
    _
  // Predicated region
  $region6: #{auto_encoder_forward.7} parent=0 // pred_check
    _
  $region7: #{auto_encoder_forward.7} parent=0 // pred_check_branch
    %12 = sbr.rel (0) target = $region9
  $region8: #{auto_encoder_forward.7} parent=0 // pred_region
    _
  $region9: #{auto_encoder_forward.7} parent=0 // pred_fallthru
    _
  // Predicated region
  $region10: #{auto_encoder_forward.7} parent=0 // pred_check
    _
  $region11: #{auto_encoder_forward.7} parent=0 // pred_check_branch
    %14 = sbr.rel (0) target = $region13
  $region12: #{auto_encoder_forward.7} parent=0 // pred_region
    _
  $region13: #{auto_encoder_forward.7} parent=0 // pred_fallthru
    _
  // Predicated region
  $region14: #{auto_encoder_forward.7} parent=0 // pred_check
    _
  $region15: #{auto_encoder_forward.7} parent=0 // pred_check_branch
    %16 = sbr.rel (0) target = $region17
  $region16: #{auto_encoder_forward.7} parent=0 // pred_region
    _
  $region17: #{auto_encoder_forward.7} parent=0 // pred_fallthru
    _
  %v18 = vld [vmem:[%s0] sm:$0xff]
  %v19 = vld [vmem:[%s0 + $0x8] sm:$0xff]
  %v20 = vld [vmem:[%s0 + $0x10] sm:$0xff]
  %v21 = vld [vmem:[%s0 + $0x18] sm:$0xff]
  %v22 = vld [vmem:[%s1] sm:$0xf]
  %v23 = vld [vmem:[%s1 + $0x4] sm:$0xf]
  %v24 = vld [vmem:[%s1 + $0x8] sm:$0xf]
  %v25 = vld [vmem:[%s1 + $0xc] sm:$0xf]
  %v26 = vld [vmem:[%s1 + $0x10] sm:$0xf]
  %v27 = vld [vmem:[%s1 + $0x14] sm:$0xf]
  %v28 = vld [vmem:[%s1 + $0x18] sm:$0xf]
  %v29 = vld [vmem:[%s1 + $0x1c] sm:$0xf]
  %v30 = vld [vmem:[%s1 + $0x20] sm:$0xf]
  %v31 = vld [vmem:[%s1 + $0x24] sm:$0xf]
  %v32 = vld [vmem:[%s1 + $0x28] sm:$0xf]
  %v33 = vld [vmem:[%s1 + $0x2c] sm:$0xf]
  %v34 = vld [vmem:[%s1 + $0x30] sm:$0xf]
  %v35 = vld [vmem:[%s1 + $0x34] sm:$0xf]
  %v36 = vld [vmem:[%s1 + $0x38] sm:$0xf]
  %v37 = vld [vmem:[%s1 + $0x3c] sm:$0xf]
  %v38 = vld [vmem:[%s1 + $0x40] sm:$0xf]
  %v39 = vld [vmem:[%s1 + $0x44] sm:$0xf]
  %v40 = vld [vmem:[%s1 + $0x48] sm:$0xf]
  %v41 = vld [vmem:[%s1 + $0x4c] sm:$0xf]
  %v42 = vld [vmem:[%s1 + $0x50] sm:$0xf]
  %v43 = vld [vmem:[%s1 + $0x54] sm:$0xf]
  %v44 = vld [vmem:[%s1 + $0x58] sm:$0xf]
  %v45 = vld [vmem:[%s1 + $0x5c] sm:$0xf]
  %v46 = vld [vmem:[%s1 + $0x60] sm:$0xf]
  %v47 = vld [vmem:[%s1 + $0x64] sm:$0xf]
  %v48 = vld [vmem:[%s1 + $0x68] sm:$0xf]
  %v49 = vld [vmem:[%s1 + $0x6c] sm:$0xf]
  %v50 = vld [vmem:[%s1 + $0x70] sm:$0xf]
  %v51 = vld [vmem:[%s1 + $0x74] sm:$0xf]
  %v52 = vld [vmem:[%s1 + $0x78] sm:$0xf]
  %v53 = vld [vmem:[%s1 + $0x7c] sm:$0xf]
  %v54 = vld [vmem:[%s1 + $0x80] sm:$0xf]
  %v55 = vld [vmem:[%s1 + $0x84] sm:$0xf]
  %v56 = vld [vmem:[%s1 + $0x88] sm:$0xf]
  %v57 = vld [vmem:[%s1 + $0x8c] sm:$0xf]
  %v58 = vld [vmem:[%s1 + $0x90] sm:$0xf]
  %v59 = vld [vmem:[%s1 + $0x94] sm:$0xf]
  %v60 = vld [vmem:[%s1 + $0x98] sm:$0xf]
  %v61 = vld [vmem:[%s1 + $0x9c] sm:$0xf]
  %v62 = vld [vmem:[%s1 + $0xa0] sm:$0xf]
  %v63 = vld [vmem:[%s1 + $0xa4] sm:$0xf]
  %v64 = vld [vmem:[%s1 + $0xa8] sm:$0xf]
  %v65 = vld [vmem:[%s1 + $0xac] sm:$0xf]
  %v66 = vld [vmem:[%s1 + $0xb0] sm:$0xf]
  %v67 = vld [vmem:[%s1 + $0xb4] sm:$0xf]
  %v68 = vld [vmem:[%s1 + $0xb8] sm:$0xf]
  %v69 = vld [vmem:[%s1 + $0xbc] sm:$0xf]
  %v70 = vld [vmem:[%s1 + $0xc0] sm:$0xf]
  %v71 = vld [vmem:[%s1 + $0xc4] sm:$0xf]
  %v72 = vld [vmem:[%s1 + $0xc8] sm:$0xf]
  %v73 = vld [vmem:[%s1 + $0xcc] sm:$0xf]
  %v74 = vld [vmem:[%s1 + $0xd0] sm:$0xf]
  %v75 = vld [vmem:[%s1 + $0xd4] sm:$0xf]
  %v76 = vld [vmem:[%s1 + $0xd8] sm:$0xf]
  %v77 = vld [vmem:[%s1 + $0xdc] sm:$0xf]
  %v78 = vld [vmem:[%s1 + $0xe0] sm:$0xf]
  %v79 = vld [vmem:[%s1 + $0xe4] sm:$0xf]
  %v80 = vld [vmem:[%s1 + $0xe8] sm:$0xf]
  %v81 = vld [vmem:[%s1 + $0xec] sm:$0xf]
  %v82 = vld [vmem:[%s1 + $0xf0] sm:$0xf]
  %v83 = vld [vmem:[%s1 + $0xf4] sm:$0xf]
  %v84 = vld [vmem:[%s1 + $0xf8] sm:$0xf]
  %v85 = vld [vmem:[%s1 + $0xfc] sm:$0xf]
  %v86 = vld [vmem:[%s1 + $0x100] sm:$0xf]
  %v87 = vld [vmem:[%s1 + $0x104] sm:$0xf]
  %v88 = vld [vmem:[%s1 + $0x108] sm:$0xf]
  %v89 = vld [vmem:[%s1 + $0x10c] sm:$0xf]
  %v90 = vld [vmem:[%s1 + $0x110] sm:$0xf]
  %v91 = vld [vmem:[%s1 + $0x114] sm:$0xf]
  %v92 = vld [vmem:[%s1 + $0x118] sm:$0xf]
  %v93 = vld [vmem:[%s1 + $0x11c] sm:$0xf]
  %v94 = vld [vmem:[%s1 + $0x120] sm:$0xf]
  %v95 = vld [vmem:[%s1 + $0x124] sm:$0xf]
  %v96 = vld [vmem:[%s1 + $0x128] sm:$0xf]
  %v97 = vld [vmem:[%s1 + $0x12c] sm:$0xf]
  %v98 = vld [vmem:[%s1 + $0x130] sm:$0xf]
  %v99 = vld [vmem:[%s1 + $0x134] sm:$0xf]
  %v100 = vld [vmem:[%s1 + $0x138] sm:$0xf]
  %v101 = vld [vmem:[%s1 + $0x13c] sm:$0xf]
  %v102 = vld [vmem:[%s1 + $0x140] sm:$0xf]
  %v103 = vld [vmem:[%s1 + $0x144] sm:$0xf]
  %v104 = vld [vmem:[%s1 + $0x148] sm:$0xf]
  %v105 = vld [vmem:[%s1 + $0x14c] sm:$0xf]
  %v106 = vld [vmem:[%s1 + $0x150] sm:$0xf]
  %v107 = vld [vmem:[%s1 + $0x154] sm:$0xf]
  %v108 = vld [vmem:[%s1 + $0x158] sm:$0xf]
  %v109 = vld [vmem:[%s1 + $0x15c] sm:$0xf]
  %v110 = vld [vmem:[%s1 + $0x160] sm:$0xf]
  %v111 = vld [vmem:[%s1 + $0x164] sm:$0xf]
  %v112 = vld [vmem:[%s1 + $0x168] sm:$0xf]
  %v113 = vld [vmem:[%s1 + $0x16c] sm:$0xf]
  %v114 = vld [vmem:[%s1 + $0x170] sm:$0xf]
  %v115 = vld [vmem:[%s1 + $0x174] sm:$0xf]
  %v116 = vld [vmem:[%s1 + $0x178] sm:$0xf]
  %v117 = vld [vmem:[%s1 + $0x17c] sm:$0xf]
  %v118 = vld [vmem:[%s1 + $0x180] sm:$0xf]
  %v119 = vld [vmem:[%s1 + $0x184] sm:$0xf]
  %v120 = vld [vmem:[%s1 + $0x188] sm:$0xf]
  %v121 = vld [vmem:[%s1 + $0x18c] sm:$0xf]
  %v122 = vld [vmem:[%s1 + $0x190] sm:$0xf]
  %v123 = vld [vmem:[%s1 + $0x194] sm:$0xf]
  %v124 = vld [vmem:[%s1 + $0x198] sm:$0xf]
  %v125 = vld [vmem:[%s1 + $0x19c] sm:$0xf]
  %v126 = vld [vmem:[%s1 + $0x1a0] sm:$0xf]
  %v127 = vld [vmem:[%s1 + $0x1a4] sm:$0xf]
  %v128 = vld [vmem:[%s1 + $0x1a8] sm:$0xf]
  %v129 = vld [vmem:[%s1 + $0x1ac] sm:$0xf]
  %v130 = vld [vmem:[%s1 + $0x1b0] sm:$0xf]
  %v131 = vld [vmem:[%s1 + $0x1b4] sm:$0xf]
  %v132 = vld [vmem:[%s1 + $0x1b8] sm:$0xf]
  %v133 = vld [vmem:[%s1 + $0x1bc] sm:$0xf]
  %v134 = vld [vmem:[%s1 + $0x1c0] sm:$0xf]
  %v135 = vld [vmem:[%s1 + $0x1c4] sm:$0xf]
  %v136 = vld [vmem:[%s1 + $0x1c8] sm:$0xf]
  %v137 = vld [vmem:[%s1 + $0x1cc] sm:$0xf]
  %v138 = vld [vmem:[%s1 + $0x1d0] sm:$0xf]
  %v139 = vld [vmem:[%s1 + $0x1d4] sm:$0xf]
  %v140 = vld [vmem:[%s1 + $0x1d8] sm:$0xf]
  %v141 = vld [vmem:[%s1 + $0x1dc] sm:$0xf]
  %v142 = vld [vmem:[%s1 + $0x1e0] sm:$0xf]
  %v143 = vld [vmem:[%s1 + $0x1e4] sm:$0xf]
  %v144 = vld [vmem:[%s1 + $0x1e8] sm:$0xf]
  %v145 = vld [vmem:[%s1 + $0x1ec] sm:$0xf]
  %v146 = vld [vmem:[%s1 + $0x1f0] sm:$0xf]
  %v147 = vld [vmem:[%s1 + $0x1f4] sm:$0xf]
  %v148 = vld [vmem:[%s1 + $0x1f8] sm:$0xf]
  %v149 = vld [vmem:[%s1 + $0x1fc] sm:$0xf]
  %v150 = vld [vmem:[%s2] sm:$0x1]
  %v152 = vperm.slane %v150, 0
  %v158 = vunpack.c.l.b16 %v18
  %v159 = vunpack.c.h.b16 %v18
  %v160 = vunpack.c.l.b16 %v19
  %v161 = vunpack.c.h.b16 %v19
  %v162 = vunpack.c.l.b16 %v20
  %v163 = vunpack.c.h.b16 %v20
  %v164 = vunpack.c.l.b16 %v21
  %v165 = vunpack.c.h.b16 %v21
  %v166 = vpack.c.b16 %v158, %v158
  %v167 = vpack.c.b16 %v159, %v159
  %v168 = vpack.c.b16 %v160, %v160
  %v169 = vpack.c.b16 %v161, %v161
  %v170 = vpack.c.b16 %v162, %v162
  %v171 = vpack.c.b16 %v163, %v163
  %v172 = vpack.c.b16 %v164, %v164
  %v173 = vpack.c.b16 %v165, %v165
  %v310 = vunpack.c.l.b16 %v22
  %v311 = vunpack.c.l.b16 %v23
  %v312 = vunpack.c.l.b16 %v24
  %v313 = vunpack.c.l.b16 %v25
  %v314 = vunpack.c.l.b16 %v26
  %v315 = vunpack.c.l.b16 %v27
  %v316 = vunpack.c.l.b16 %v28
  %v317 = vunpack.c.l.b16 %v29
  %v318 = vunpack.c.l.b16 %v30
  %v319 = vunpack.c.l.b16 %v31
  %v320 = vunpack.c.l.b16 %v32
  %v321 = vunpack.c.l.b16 %v33
  %v322 = vunpack.c.l.b16 %v34
  %v323 = vunpack.c.l.b16 %v35
  %v324 = vunpack.c.l.b16 %v36
  %v325 = vunpack.c.l.b16 %v37
  %v326 = vunpack.c.l.b16 %v38
  %v327 = vunpack.c.l.b16 %v39
  %v328 = vunpack.c.l.b16 %v40
  %v329 = vunpack.c.l.b16 %v41
  %v330 = vunpack.c.l.b16 %v42
  %v331 = vunpack.c.l.b16 %v43
  %v332 = vunpack.c.l.b16 %v44
  %v333 = vunpack.c.l.b16 %v45
  %v334 = vunpack.c.l.b16 %v46
  %v335 = vunpack.c.l.b16 %v47
  %v336 = vunpack.c.l.b16 %v48
  %v337 = vunpack.c.l.b16 %v49
  %v338 = vunpack.c.l.b16 %v50
  %v339 = vunpack.c.l.b16 %v51
  %v340 = vunpack.c.l.b16 %v52
  %v341 = vunpack.c.l.b16 %v53
  %v342 = vunpack.c.l.b16 %v54
  %v343 = vunpack.c.l.b16 %v55
  %v344 = vunpack.c.l.b16 %v56
  %v345 = vunpack.c.l.b16 %v57
  %v346 = vunpack.c.l.b16 %v58
  %v347 = vunpack.c.l.b16 %v59
  %v348 = vunpack.c.l.b16 %v60
  %v349 = vunpack.c.l.b16 %v61
  %v350 = vunpack.c.l.b16 %v62
  %v351 = vunpack.c.l.b16 %v63
  %v352 = vunpack.c.l.b16 %v64
  %v353 = vunpack.c.l.b16 %v65
  %v354 = vunpack.c.l.b16 %v66
  %v355 = vunpack.c.l.b16 %v67
  %v356 = vunpack.c.l.b16 %v68
  %v357 = vunpack.c.l.b16 %v69
  %v358 = vunpack.c.l.b16 %v70
  %v359 = vunpack.c.l.b16 %v71
  %v360 = vunpack.c.l.b16 %v72
  %v361 = vunpack.c.l.b16 %v73
  %v362 = vunpack.c.l.b16 %v74
  %v363 = vunpack.c.l.b16 %v75
  %v364 = vunpack.c.l.b16 %v76
  %v365 = vunpack.c.l.b16 %v77
  %v366 = vunpack.c.l.b16 %v78
  %v367 = vunpack.c.l.b16 %v79
  %v368 = vunpack.c.l.b16 %v80
  %v369 = vunpack.c.l.b16 %v81
  %v370 = vunpack.c.l.b16 %v82
  %v371 = vunpack.c.l.b16 %v83
  %v372 = vunpack.c.l.b16 %v84
  %v373 = vunpack.c.l.b16 %v85
  %v374 = vunpack.c.l.b16 %v86
  %v375 = vunpack.c.l.b16 %v87
  %v376 = vunpack.c.l.b16 %v88
  %v377 = vunpack.c.l.b16 %v89
  %v378 = vunpack.c.l.b16 %v90
  %v379 = vunpack.c.l.b16 %v91
  %v380 = vunpack.c.l.b16 %v92
  %v381 = vunpack.c.l.b16 %v93
  %v382 = vunpack.c.l.b16 %v94
  %v383 = vunpack.c.l.b16 %v95
  %v384 = vunpack.c.l.b16 %v96
  %v385 = vunpack.c.l.b16 %v97
  %v386 = vunpack.c.l.b16 %v98
  %v387 = vunpack.c.l.b16 %v99
  %v388 = vunpack.c.l.b16 %v100
  %v389 = vunpack.c.l.b16 %v101
  %v390 = vunpack.c.l.b16 %v102
  %v391 = vunpack.c.l.b16 %v103
  %v392 = vunpack.c.l.b16 %v104
  %v393 = vunpack.c.l.b16 %v105
  %v394 = vunpack.c.l.b16 %v106
  %v395 = vunpack.c.l.b16 %v107
  %v396 = vunpack.c.l.b16 %v108
  %v397 = vunpack.c.l.b16 %v109
  %v398 = vunpack.c.l.b16 %v110
  %v399 = vunpack.c.l.b16 %v111
  %v400 = vunpack.c.l.b16 %v112
  %v401 = vunpack.c.l.b16 %v113
  %v402 = vunpack.c.l.b16 %v114
  %v403 = vunpack.c.l.b16 %v115
  %v404 = vunpack.c.l.b16 %v116
  %v405 = vunpack.c.l.b16 %v117
  %v406 = vunpack.c.l.b16 %v118
  %v407 = vunpack.c.l.b16 %v119
  %v408 = vunpack.c.l.b16 %v120
  %v409 = vunpack.c.l.b16 %v121
  %v410 = vunpack.c.l.b16 %v122
  %v411 = vunpack.c.l.b16 %v123
  %v412 = vunpack.c.l.b16 %v124
  %v413 = vunpack.c.l.b16 %v125
  %v414 = vunpack.c.l.b16 %v126
  %v415 = vunpack.c.l.b16 %v127
  %v416 = vunpack.c.l.b16 %v128
  %v417 = vunpack.c.l.b16 %v129
  %v418 = vunpack.c.l.b16 %v130
  %v419 = vunpack.c.l.b16 %v131
  %v420 = vunpack.c.l.b16 %v132
  %v421 = vunpack.c.l.b16 %v133
  %v422 = vunpack.c.l.b16 %v134
  %v423 = vunpack.c.l.b16 %v135
  %v424 = vunpack.c.l.b16 %v136
  %v425 = vunpack.c.l.b16 %v137
  %v426 = vunpack.c.l.b16 %v138
  %v427 = vunpack.c.l.b16 %v139
  %v428 = vunpack.c.l.b16 %v140
  %v429 = vunpack.c.l.b16 %v141
  %v430 = vunpack.c.l.b16 %v142
  %v431 = vunpack.c.l.b16 %v143
  %v432 = vunpack.c.l.b16 %v144
  %v433 = vunpack.c.l.b16 %v145
  %v434 = vunpack.c.l.b16 %v146
  %v435 = vunpack.c.l.b16 %v147
  %v436 = vunpack.c.l.b16 %v148
  %v437 = vunpack.c.l.b16 %v149
  %v438 = vpack.c.b16 %v311, %v310
  %v439 = vpack.c.b16 %v313, %v312
  %v440 = vpack.c.b16 %v315, %v314
  %v441 = vpack.c.b16 %v317, %v316
  %v442 = vpack.c.b16 %v319, %v318
  %v443 = vpack.c.b16 %v321, %v320
  %v444 = vpack.c.b16 %v323, %v322
  %v445 = vpack.c.b16 %v325, %v324
  %v446 = vpack.c.b16 %v327, %v326
  %v447 = vpack.c.b16 %v329, %v328
  %v448 = vpack.c.b16 %v331, %v330
  %v449 = vpack.c.b16 %v333, %v332
  %v450 = vpack.c.b16 %v335, %v334
  %v451 = vpack.c.b16 %v337, %v336
  %v452 = vpack.c.b16 %v339, %v338
  %v453 = vpack.c.b16 %v341, %v340
  %v454 = vpack.c.b16 %v343, %v342
  %v455 = vpack.c.b16 %v345, %v344
  %v456 = vpack.c.b16 %v347, %v346
  %v457 = vpack.c.b16 %v349, %v348
  %v458 = vpack.c.b16 %v351, %v350
  %v459 = vpack.c.b16 %v353, %v352
  %v460 = vpack.c.b16 %v355, %v354
  %v461 = vpack.c.b16 %v357, %v356
  %v462 = vpack.c.b16 %v359, %v358
  %v463 = vpack.c.b16 %v361, %v360
  %v464 = vpack.c.b16 %v363, %v362
  %v465 = vpack.c.b16 %v365, %v364
  %v466 = vpack.c.b16 %v367, %v366
  %v467 = vpack.c.b16 %v369, %v368
  %v468 = vpack.c.b16 %v371, %v370
  %v469 = vpack.c.b16 %v373, %v372
  %v470 = vpack.c.b16 %v375, %v374
  %v471 = vpack.c.b16 %v377, %v376
  %v472 = vpack.c.b16 %v379, %v378
  %v473 = vpack.c.b16 %v381, %v380
  %v474 = vpack.c.b16 %v383, %v382
  %v475 = vpack.c.b16 %v385, %v384
  %v476 = vpack.c.b16 %v387, %v386
  %v477 = vpack.c.b16 %v389, %v388
  %v478 = vpack.c.b16 %v391, %v390
  %v479 = vpack.c.b16 %v393, %v392
  %v480 = vpack.c.b16 %v395, %v394
  %v481 = vpack.c.b16 %v397, %v396
  %v482 = vpack.c.b16 %v399, %v398
  %v483 = vpack.c.b16 %v401, %v400
  %v484 = vpack.c.b16 %v403, %v402
  %v485 = vpack.c.b16 %v405, %v404
  %v486 = vpack.c.b16 %v407, %v406
  %v487 = vpack.c.b16 %v409, %v408
  %v488 = vpack.c.b16 %v411, %v410
  %v489 = vpack.c.b16 %v413, %v412
  %v490 = vpack.c.b16 %v415, %v414
  %v491 = vpack.c.b16 %v417, %v416
  %v492 = vpack.c.b16 %v419, %v418
  %v493 = vpack.c.b16 %v421, %v420
  %v494 = vpack.c.b16 %v423, %v422
  %v495 = vpack.c.b16 %v425, %v424
  %v496 = vpack.c.b16 %v427, %v426
  %v497 = vpack.c.b16 %v429, %v428
  %v498 = vpack.c.b16 %v431, %v430
  %v499 = vpack.c.b16 %v433, %v432
  %v500 = vpack.c.b16 %v435, %v434
  %v501 = vpack.c.b16 %v437, %v436
  %566 = vmatpush.bf16.msra.mxu0 %v445
  %567 = vmatpush.bf16.msra.mxu0 %v444
  %568 = vmatpush.bf16.msra.mxu0 %v443
  %569 = vmatpush.bf16.msra.mxu0 %v442
  %570 = vmatpush.bf16.msra.mxu0 %v441
  %571 = vmatpush.bf16.msra.mxu0 %v440
  %572 = vmatpush.bf16.msra.mxu0 %v439
  %573 = vmatpush.bf16.msra.mxu0 %v438
  %574 = vmatmul.bf16.gmra.mxu0 %v166
  %v575 = vpop.f32.mrf.mxu0
  %v576 = vadd.f32 %v152, %v575
  %v577 = vpop.f32.mrf.mxu0
  %578 = vdwg.mxu0
  %579 = vmatpush.bf16.msra.mxu0 %v453
  %580 = vmatpush.bf16.msra.mxu0 %v452
  %581 = vmatpush.bf16.msra.mxu0 %v451
  %582 = vmatpush.bf16.msra.mxu0 %v450
  %583 = vmatpush.bf16.msra.mxu0 %v449
  %584 = vmatpush.bf16.msra.mxu0 %v448
  %585 = vmatpush.bf16.msra.mxu0 %v447
  %586 = vmatpush.bf16.msra.mxu0 %v446
  %587 = vmatmul.bf16.gmra.mxu0 %v167
  %v588 = vpop.f32.mrf.mxu0
  %v589 = vadd.f32 %v576, %v588
  %v590 = vpop.f32.mrf.mxu0
  %591 = vdwg.mxu0
  %592 = vmatpush.bf16.msra.mxu0 %v461
  %593 = vmatpush.bf16.msra.mxu0 %v460
  %594 = vmatpush.bf16.msra.mxu0 %v459
  %595 = vmatpush.bf16.msra.mxu0 %v458
  %596 = vmatpush.bf16.msra.mxu0 %v457
  %597 = vmatpush.bf16.msra.mxu0 %v456
  %598 = vmatpush.bf16.msra.mxu0 %v455
  %599 = vmatpush.bf16.msra.mxu0 %v454
  %600 = vmatmul.bf16.gmra.mxu0 %v168
  %v601 = vpop.f32.mrf.mxu0
  %v602 = vadd.f32 %v589, %v601
  %v603 = vpop.f32.mrf.mxu0
  %604 = vdwg.mxu0
  %605 = vmatpush.bf16.msra.mxu0 %v469
  %606 = vmatpush.bf16.msra.mxu0 %v468
  %607 = vmatpush.bf16.msra.mxu0 %v467
  %608 = vmatpush.bf16.msra.mxu0 %v466
  %609 = vmatpush.bf16.msra.mxu0 %v465
  %610 = vmatpush.bf16.msra.mxu0 %v464
  %611 = vmatpush.bf16.msra.mxu0 %v463
  %612 = vmatpush.bf16.msra.mxu0 %v462
  %613 = vmatmul.bf16.gmra.mxu0 %v169
  %v614 = vpop.f32.mrf.mxu0
  %v615 = vadd.f32 %v602, %v614
  %v616 = vpop.f32.mrf.mxu0
  %617 = vdwg.mxu0
  %618 = vmatpush.bf16.msra.mxu0 %v477
  %619 = vmatpush.bf16.msra.mxu0 %v476
  %620 = vmatpush.bf16.msra.mxu0 %v475
  %621 = vmatpush.bf16.msra.mxu0 %v474
  %622 = vmatpush.bf16.msra.mxu0 %v473
  %623 = vmatpush.bf16.msra.mxu0 %v472
  %624 = vmatpush.bf16.msra.mxu0 %v471
  %625 = vmatpush.bf16.msra.mxu0 %v470
  %626 = vmatmul.bf16.gmra.mxu0 %v170
  %v627 = vpop.f32.mrf.mxu0
  %v628 = vadd.f32 %v615, %v627
  %v629 = vpop.f32.mrf.mxu0
  %630 = vdwg.mxu0
  %631 = vmatpush.bf16.msra.mxu0 %v485
  %632 = vmatpush.bf16.msra.mxu0 %v484
  %633 = vmatpush.bf16.msra.mxu0 %v483
  %634 = vmatpush.bf16.msra.mxu0 %v482
  %635 = vmatpush.bf16.msra.mxu0 %v481
  %636 = vmatpush.bf16.msra.mxu0 %v480
  %637 = vmatpush.bf16.msra.mxu0 %v479
  %638 = vmatpush.bf16.msra.mxu0 %v478
  %639 = vmatmul.bf16.gmra.mxu0 %v171
  %v640 = vpop.f32.mrf.mxu0
  %v641 = vadd.f32 %v628, %v640
  %v642 = vpop.f32.mrf.mxu0
  %643 = vdwg.mxu0
  %644 = vmatpush.bf16.msra.mxu0 %v493
  %645 = vmatpush.bf16.msra.mxu0 %v492
  %646 = vmatpush.bf16.msra.mxu0 %v491
  %647 = vmatpush.bf16.msra.mxu0 %v490
  %648 = vmatpush.bf16.msra.mxu0 %v489
  %649 = vmatpush.bf16.msra.mxu0 %v488
  %650 = vmatpush.bf16.msra.mxu0 %v487
  %651 = vmatpush.bf16.msra.mxu0 %v486
  %652 = vmatmul.bf16.gmra.mxu0 %v172
  %v653 = vpop.f32.mrf.mxu0
  %v654 = vadd.f32 %v641, %v653
  %v655 = vpop.f32.mrf.mxu0
  %656 = vdwg.mxu0
  %657 = vmatpush.bf16.msra.mxu0 %v501
  %658 = vmatpush.bf16.msra.mxu0 %v500
  %659 = vmatpush.bf16.msra.mxu0 %v499
  %660 = vmatpush.bf16.msra.mxu0 %v498
  %661 = vmatpush.bf16.msra.mxu0 %v497
  %662 = vmatpush.bf16.msra.mxu0 %v496
  %663 = vmatpush.bf16.msra.mxu0 %v495
  %664 = vmatpush.bf16.msra.mxu0 %v494
  %665 = vmatmul.bf16.gmra.mxu0 %v173
  %v666 = vpop.f32.mrf.mxu0
  %v667 = vadd.f32 %v654, %v666
  %v668 = vpop.f32.mrf.mxu0
  %669 = vdwg.mxu0
  %v670 = vmax.f32 %v667, 0.0
  %v671 = vpack.c.bf16 %v670, %v670
  %v672 = vld [vmem:[%s3] sm:$0xff]
  %v673 = vld [vmem:[%s3 + $0x8] sm:$0xff]
  %v674 = vld [vmem:[%s3 + $0x10] sm:$0xff]
  %v675 = vld [vmem:[%s3 + $0x18] sm:$0xff]
  %v676 = vld [vmem:[%s3 + $0x20] sm:$0xff]
  %v677 = vld [vmem:[%s3 + $0x28] sm:$0xff]
  %v678 = vld [vmem:[%s3 + $0x30] sm:$0xff]
  %v679 = vld [vmem:[%s3 + $0x38] sm:$0xff]
  %v680 = vld [vmem:[%s3 + $0x40] sm:$0xff]
  %v681 = vld [vmem:[%s3 + $0x48] sm:$0xff]
  %v682 = vld [vmem:[%s3 + $0x50] sm:$0xff]
  %v683 = vld [vmem:[%s3 + $0x58] sm:$0xff]
  %v684 = vld [vmem:[%s3 + $0x60] sm:$0xff]
  %v685 = vld [vmem:[%s3 + $0x68] sm:$0xff]
  %v686 = vld [vmem:[%s3 + $0x70] sm:$0xff]
  %v687 = vld [vmem:[%s3 + $0x78] sm:$0xff]
  %v688 = vld [vmem:[%s3 + $0x80] sm:$0xff]
  %v689 = vld [vmem:[%s3 + $0x88] sm:$0xff]
  %v690 = vld [vmem:[%s3 + $0x90] sm:$0xff]
  %v691 = vld [vmem:[%s3 + $0x98] sm:$0xff]
  %v692 = vld [vmem:[%s3 + $0xa0] sm:$0xff]
  %v693 = vld [vmem:[%s3 + $0xa8] sm:$0xff]
  %v694 = vld [vmem:[%s3 + $0xb0] sm:$0xff]
  %v695 = vld [vmem:[%s3 + $0xb8] sm:$0xff]
  %v696 = vld [vmem:[%s3 + $0xc0] sm:$0xff]
  %v697 = vld [vmem:[%s3 + $0xc8] sm:$0xff]
  %v698 = vld [vmem:[%s3 + $0xd0] sm:$0xff]
  %v699 = vld [vmem:[%s3 + $0xd8] sm:$0xff]
  %v700 = vld [vmem:[%s3 + $0xe0] sm:$0xff]
  %v701 = vld [vmem:[%s3 + $0xe8] sm:$0xff]
  %v702 = vld [vmem:[%s3 + $0xf0] sm:$0xff]
  %v703 = vld [vmem:[%s3 + $0xf8] sm:$0xff]
  %v736 = vunpack.c.l.b16 %v672
  %v737 = vunpack.c.h.b16 %v672
  %v738 = vunpack.c.l.b16 %v673
  %v739 = vunpack.c.h.b16 %v673
  %v740 = vunpack.c.l.b16 %v674
  %v741 = vunpack.c.h.b16 %v674
  %v742 = vunpack.c.l.b16 %v675
  %v743 = vunpack.c.h.b16 %v675
  %v744 = vunpack.c.l.b16 %v676
  %v745 = vunpack.c.h.b16 %v676
  %v746 = vunpack.c.l.b16 %v677
  %v747 = vunpack.c.h.b16 %v677
  %v748 = vunpack.c.l.b16 %v678
  %v749 = vunpack.c.h.b16 %v678
  %v750 = vunpack.c.l.b16 %v679
  %v751 = vunpack.c.h.b16 %v679
  %v752 = vunpack.c.l.b16 %v680
  %v753 = vunpack.c.h.b16 %v680
  %v754 = vunpack.c.l.b16 %v681
  %v755 = vunpack.c.h.b16 %v681
  %v756 = vunpack.c.l.b16 %v682
  %v757 = vunpack.c.h.b16 %v682
  %v758 = vunpack.c.l.b16 %v683
  %v759 = vunpack.c.h.b16 %v683
  %v760 = vunpack.c.l.b16 %v684
  %v761 = vunpack.c.h.b16 %v684
  %v762 = vunpack.c.l.b16 %v685
  %v763 = vunpack.c.h.b16 %v685
  %v764 = vunpack.c.l.b16 %v686
  %v765 = vunpack.c.h.b16 %v686
  %v766 = vunpack.c.l.b16 %v687
  %v767 = vunpack.c.h.b16 %v687
  %v768 = vunpack.c.l.b16 %v688
  %v769 = vunpack.c.h.b16 %v688
  %v770 = vunpack.c.l.b16 %v689
  %v771 = vunpack.c.h.b16 %v689
  %v772 = vunpack.c.l.b16 %v690
  %v773 = vunpack.c.h.b16 %v690
  %v774 = vunpack.c.l.b16 %v691
  %v775 = vunpack.c.h.b16 %v691
  %v776 = vunpack.c.l.b16 %v692
  %v777 = vunpack.c.h.b16 %v692
  %v778 = vunpack.c.l.b16 %v693
  %v779 = vunpack.c.h.b16 %v693
  %v780 = vunpack.c.l.b16 %v694
  %v781 = vunpack.c.h.b16 %v694
  %v782 = vunpack.c.l.b16 %v695
  %v783 = vunpack.c.h.b16 %v695
  %v784 = vunpack.c.l.b16 %v696
  %v785 = vunpack.c.h.b16 %v696
  %v786 = vunpack.c.l.b16 %v697
  %v787 = vunpack.c.h.b16 %v697
  %v788 = vunpack.c.l.b16 %v698
  %v789 = vunpack.c.h.b16 %v698
  %v790 = vunpack.c.l.b16 %v699
  %v791 = vunpack.c.h.b16 %v699
  %v792 = vunpack.c.l.b16 %v700
  %v793 = vunpack.c.h.b16 %v700
  %v794 = vunpack.c.l.b16 %v701
  %v795 = vunpack.c.h.b16 %v701
  %v796 = vunpack.c.l.b16 %v702
  %v797 = vunpack.c.h.b16 %v702
  %v798 = vunpack.c.l.b16 %v703
  %v799 = vunpack.c.h.b16 %v703
  %v800 = vpack.c.b16 %v744, %v736
  %v801 = vpack.c.b16 %v745, %v737
  %v802 = vpack.c.b16 %v746, %v738
  %v803 = vpack.c.b16 %v747, %v739
  %v804 = vpack.c.b16 %v748, %v740
  %v805 = vpack.c.b16 %v749, %v741
  %v806 = vpack.c.b16 %v750, %v742
  %v807 = vpack.c.b16 %v751, %v743
  %v808 = vpack.c.b16 %v760, %v752
  %v809 = vpack.c.b16 %v761, %v753
  %v810 = vpack.c.b16 %v762, %v754
  %v811 = vpack.c.b16 %v763, %v755
  %v812 = vpack.c.b16 %v764, %v756
  %v813 = vpack.c.b16 %v765, %v757
  %v814 = vpack.c.b16 %v766, %v758
  %v815 = vpack.c.b16 %v767, %v759
  %v816 = vpack.c.b16 %v776, %v768
  %v817 = vpack.c.b16 %v777, %v769
  %v818 = vpack.c.b16 %v778, %v770
  %v819 = vpack.c.b16 %v779, %v771
  %v820 = vpack.c.b16 %v780, %v772
  %v821 = vpack.c.b16 %v781, %v773
  %v822 = vpack.c.b16 %v782, %v774
  %v823 = vpack.c.b16 %v783, %v775
  %v824 = vpack.c.b16 %v792, %v784
  %v825 = vpack.c.b16 %v793, %v785
  %v826 = vpack.c.b16 %v794, %v786
  %v827 = vpack.c.b16 %v795, %v787
  %v828 = vpack.c.b16 %v796, %v788
  %v829 = vpack.c.b16 %v797, %v789
  %v830 = vpack.c.b16 %v798, %v790
  %v831 = vpack.c.b16 %v799, %v791
  %vm864 = vcmask 523264
  %v866 = vsel %vm864, %v671, 0
  %868 = vmatpush.bf16.msra.mxu0 0
  %869 = vmatpush.bf16.msra.mxu0 0
  %870 = vmatpush.bf16.msra.mxu0 0
  %871 = vmatpush.bf16.msra.mxu0 0
  %872 = vmatpush.bf16.msra.mxu0 %v824
  %873 = vmatpush.bf16.msra.mxu0 %v816
  %874 = vmatpush.bf16.msra.mxu0 %v808
  %875 = vmatpush.bf16.msra.mxu0 %v800
  %876 = vmatmul.bf16.gmra.mxu0 %v866
  %v877 = vpop.f32.mrf.mxu0
  %v878 = vadd.f32 0.0, %v877
  %v879 = vpop.f32.mrf.mxu0
  %880 = vdwg.mxu0
  %881 = vmatpush.bf16.msra.mxu0 0
  %882 = vmatpush.bf16.msra.mxu0 0
  %883 = vmatpush.bf16.msra.mxu0 0
  %884 = vmatpush.bf16.msra.mxu0 0
  %885 = vmatpush.bf16.msra.mxu0 %v825
  %886 = vmatpush.bf16.msra.mxu0 %v817
  %887 = vmatpush.bf16.msra.mxu0 %v809
  %888 = vmatpush.bf16.msra.mxu0 %v801
  %889 = vmatmul.bf16.gmra.mxu0 %v866
  %v890 = vpop.f32.mrf.mxu0
  %v891 = vadd.f32 0.0, %v890
  %v892 = vpop.f32.mrf.mxu0
  %893 = vdwg.mxu0
  %894 = vmatpush.bf16.msra.mxu0 0
  %895 = vmatpush.bf16.msra.mxu0 0
  %896 = vmatpush.bf16.msra.mxu0 0
  %897 = vmatpush.bf16.msra.mxu0 0
  %898 = vmatpush.bf16.msra.mxu0 %v826
  %899 = vmatpush.bf16.msra.mxu0 %v818
  %900 = vmatpush.bf16.msra.mxu0 %v810
  %901 = vmatpush.bf16.msra.mxu0 %v802
  %902 = vmatmul.bf16.gmra.mxu0 %v866
  %v903 = vpop.f32.mrf.mxu0
  %v904 = vadd.f32 0.0, %v903
  %v905 = vpop.f32.mrf.mxu0
  %906 = vdwg.mxu0
  %907 = vmatpush.bf16.msra.mxu0 0
  %908 = vmatpush.bf16.msra.mxu0 0
  %909 = vmatpush.bf16.msra.mxu0 0
  %910 = vmatpush.bf16.msra.mxu0 0
  %911 = vmatpush.bf16.msra.mxu0 %v827
  %912 = vmatpush.bf16.msra.mxu0 %v819
  %913 = vmatpush.bf16.msra.mxu0 %v811
  %914 = vmatpush.bf16.msra.mxu0 %v803
  %915 = vmatmul.bf16.gmra.mxu0 %v866
  %v916 = vpop.f32.mrf.mxu0
  %v917 = vadd.f32 0.0, %v916
  %v918 = vpop.f32.mrf.mxu0
  %919 = vdwg.mxu0
  %920 = vmatpush.bf16.msra.mxu0 0
  %921 = vmatpush.bf16.msra.mxu0 0
  %922 = vmatpush.bf16.msra.mxu0 0
  %923 = vmatpush.bf16.msra.mxu0 0
  %924 = vmatpush.bf16.msra.mxu0 %v828
  %925 = vmatpush.bf16.msra.mxu0 %v820
  %926 = vmatpush.bf16.msra.mxu0 %v812
  %927 = vmatpush.bf16.msra.mxu0 %v804
  %928 = vmatmul.bf16.gmra.mxu0 %v866
  %v929 = vpop.f32.mrf.mxu0
  %v930 = vadd.f32 0.0, %v929
  %v931 = vpop.f32.mrf.mxu0
  %932 = vdwg.mxu0
  %933 = vmatpush.bf16.msra.mxu0 0
  %934 = vmatpush.bf16.msra.mxu0 0
  %935 = vmatpush.bf16.msra.mxu0 0
  %936 = vmatpush.bf16.msra.mxu0 0
  %937 = vmatpush.bf16.msra.mxu0 %v829
  %938 = vmatpush.bf16.msra.mxu0 %v821
  %939 = vmatpush.bf16.msra.mxu0 %v813
  %940 = vmatpush.bf16.msra.mxu0 %v805
  %941 = vmatmul.bf16.gmra.mxu0 %v866
  %v942 = vpop.f32.mrf.mxu0
  %v943 = vadd.f32 0.0, %v942
  %v944 = vpop.f32.mrf.mxu0
  %945 = vdwg.mxu0
  %946 = vmatpush.bf16.msra.mxu0 0
  %947 = vmatpush.bf16.msra.mxu0 0
  %948 = vmatpush.bf16.msra.mxu0 0
  %949 = vmatpush.bf16.msra.mxu0 0
  %950 = vmatpush.bf16.msra.mxu0 %v830
  %951 = vmatpush.bf16.msra.mxu0 %v822
  %952 = vmatpush.bf16.msra.mxu0 %v814
  %953 = vmatpush.bf16.msra.mxu0 %v806
  %954 = vmatmul.bf16.gmra.mxu0 %v866
  %v955 = vpop.f32.mrf.mxu0
  %v956 = vadd.f32 0.0, %v955
  %v957 = vpop.f32.mrf.mxu0
  %958 = vdwg.mxu0
  %959 = vmatpush.bf16.msra.mxu0 0
  %960 = vmatpush.bf16.msra.mxu0 0
  %961 = vmatpush.bf16.msra.mxu0 0
  %962 = vmatpush.bf16.msra.mxu0 0
  %963 = vmatpush.bf16.msra.mxu0 %v831
  %964 = vmatpush.bf16.msra.mxu0 %v823
  %965 = vmatpush.bf16.msra.mxu0 %v815
  %966 = vmatpush.bf16.msra.mxu0 %v807
  %967 = vmatmul.bf16.gmra.mxu0 %v866
  %v968 = vpop.f32.mrf.mxu0
  %v969 = vadd.f32 0.0, %v968
  %v970 = vpop.f32.mrf.mxu0
  %971 = vdwg.mxu0
  %972 = vst [vmem:[%s4] sm:$0xff] %v878
  %973 = vst [vmem:[%s4 + $0x8] sm:$0xff] %v891
  %974 = vst [vmem:[%s4 + $0x10] sm:$0xff] %v904
  %975 = vst [vmem:[%s4 + $0x18] sm:$0xff] %v917
  %976 = vst [vmem:[%s4 + $0x20] sm:$0xff] %v930
  %977 = vst [vmem:[%s4 + $0x28] sm:$0xff] %v943
  %978 = vst [vmem:[%s4 + $0x30] sm:$0xff] %v956
  %979 = vst [vmem:[%s4 + $0x38] sm:$0xff] %v969
  // Predicated region
  $region18: #{auto_encoder_forward.7} parent=0 // pred_check
    _
  $region19: #{auto_encoder_forward.7} parent=0 // pred_check_branch
    %981 = sbr.rel (0) target = $region21
  $region20: #{auto_encoder_forward.7} parent=0 // pred_region
    _
  $region21: #{auto_encoder_forward.7} parent=0 // pred_fallthru
    _
  // Predicated region
  $region22: #{auto_encoder_forward.7} parent=0 // pred_check
    _
  $region23: #{auto_encoder_forward.7} parent=0 // pred_check_branch
    %983 = sbr.rel (0) target = $region25
  $region24: #{auto_encoder_forward.7} parent=0 // pred_region
    _
  $region25: #{auto_encoder_forward.7} parent=0 // pred_fallthru
    _

// kernel: auto_encoder_forward.8
$region0: #{auto_encoder_forward.8}
  #allocation0 [shape = 'u32[]', space=smem, size = 0x4, offset = 0x4, fixed_abs, tag = 'smem constant byte address 0x4 - core index']
  #allocation1 [shape = 'u32[72,128]{1,0:T(1,128)}', space=vmem, size = 0x9000, scoped, tag = 'internal scratch']
  %s0 = inlined_call_operand.vmem [shape: f32[72,64], index: 0, kind: input, shape index: {}]
  %s1 = inlined_call_operand.vmem [shape: f32[1,64], index: 1, kind: input, shape index: {}]
  %s2 = inlined_call_operand.vmem [shape: bf16[64,2048], index: 2, kind: input, shape index: {}]
  %s3 = inlined_call_operand.vmem [shape: f32[72,2048], index: 3, kind: output, shape index: {}]
  %s4 = sld [smem:[#allocation0]]
  $region22: #{auto_encoder_forward.8} parent=0
    _
  %s6 = ssub.s32 1, %s4
  %s7 = scalar_select 0, %s6, %s4
  // Predicated region
  $region2: #{auto_encoder_forward.8} parent=0 // pred_check
    _
  $region3: #{auto_encoder_forward.8} parent=0 // pred_check_branch
    %9 = sbr.rel (0) target = $region5
  $region4: #{auto_encoder_forward.8} parent=0 // pred_region
    _
  $region5: #{auto_encoder_forward.8} parent=0 // pred_fallthru
    _
  // Predicated region
  $region6: #{auto_encoder_forward.8} parent=0 // pred_check
    _
  $region7: #{auto_encoder_forward.8} parent=0 // pred_check_branch
    %11 = sbr.rel (0) target = $region9
  $region8: #{auto_encoder_forward.8} parent=0 // pred_region
    _
  $region9: #{auto_encoder_forward.8} parent=0 // pred_fallthru
    _
  // Predicated region
  $region10: #{auto_encoder_forward.8} parent=0 // pred_check
    _
  $region11: #{auto_encoder_forward.8} parent=0 // pred_check_branch
    %13 = sbr.rel (0) target = $region13
  $region12: #{auto_encoder_forward.8} parent=0 // pred_region
    _
  $region13: #{auto_encoder_forward.8} parent=0 // pred_fallthru
    _
  %v15 = vld [vmem:[%s0] sm:$0xff]
  %v16 = vld [vmem:[%s0 + $0x8] sm:$0xff]
  %v17 = vld [vmem:[%s0 + $0x10] sm:$0xff]
  %v18 = vld [vmem:[%s0 + $0x18] sm:$0xff]
  %v19 = vld [vmem:[%s0 + $0x20] sm:$0xff]
  %v20 = vld [vmem:[%s0 + $0x28] sm:$0xff]
  %v21 = vld [vmem:[%s0 + $0x30] sm:$0xff]
  %v22 = vld [vmem:[%s0 + $0x38] sm:$0xff]
  %v23 = vld [vmem:[%s0 + $0x40] sm:$0xff]
  %v24 = vld [vmem:[%s1] sm:$0x1]
  %v26 = vperm.slane %v24, 0
  %v28 = vadd.f32 %v15, %v26
  %v29 = vadd.f32 %v16, %v26
  %v30 = vadd.f32 %v17, %v26
  %v31 = vadd.f32 %v18, %v26
  %v32 = vadd.f32 %v19, %v26
  %v33 = vadd.f32 %v20, %v26
  %v34 = vadd.f32 %v21, %v26
  %v35 = vadd.f32 %v22, %v26
  %v36 = vadd.f32 %v23, %v26
  %v37 = vmax.f32 %v28, 0.0
  %v38 = vmax.f32 %v29, 0.0
  %v39 = vmax.f32 %v30, 0.0
  %v40 = vmax.f32 %v31, 0.0
  %v41 = vmax.f32 %v32, 0.0
  %v42 = vmax.f32 %v33, 0.0
  %v43 = vmax.f32 %v34, 0.0
  %v44 = vmax.f32 %v35, 0.0
  %v45 = vmax.f32 %v36, 0.0
  %v46 = vpack.c.bf16 %v38, %v37
  %v47 = vpack.c.bf16 %v40, %v39
  %v48 = vpack.c.bf16 %v42, %v41
  %v49 = vpack.c.bf16 %v44, %v43
  %v50 = vpack.c.bf16 %v45, %v45
  %v51 = vld [vmem:[%s2] sm:$0xff]
  %v52 = vld [vmem:[%s2 + $0x8] sm:$0xff]
  %v53 = vld [vmem:[%s2 + $0x10] sm:$0xff]
  %v54 = vld [vmem:[%s2 + $0x18] sm:$0xff]
  %v55 = vld [vmem:[%s2 + $0x20] sm:$0xff]
  %v56 = vld [vmem:[%s2 + $0x28] sm:$0xff]
  %v57 = vld [vmem:[%s2 + $0x30] sm:$0xff]
  %v58 = vld [vmem:[%s2 + $0x38] sm:$0xff]
  %v59 = vld [vmem:[%s2 + $0x40] sm:$0xff]
  %v60 = vld [vmem:[%s2 + $0x48] sm:$0xff]
  %v61 = vld [vmem:[%s2 + $0x50] sm:$0xff]
  %v62 = vld [vmem:[%s2 + $0x58] sm:$0xff]
  %v63 = vld [vmem:[%s2 + $0x60] sm:$0xff]
  %v64 = vld [vmem:[%s2 + $0x68] sm:$0xff]
  %v65 = vld [vmem:[%s2 + $0x70] sm:$0xff]
  %v66 = vld [vmem:[%s2 + $0x78] sm:$0xff]
  %v67 = vld [vmem:[%s2 + $0x80] sm:$0xff]
  %v68 = vld [vmem:[%s2 + $0x88] sm:$0xff]
  %v69 = vld [vmem:[%s2 + $0x90] sm:$0xff]
  %v70 = vld [vmem:[%s2 + $0x98] sm:$0xff]
  %v71 = vld [vmem:[%s2 + $0xa0] sm:$0xff]
  %v72 = vld [vmem:[%s2 + $0xa8] sm:$0xff]
  %v73 = vld [vmem:[%s2 + $0xb0] sm:$0xff]
  %v74 = vld [vmem:[%s2 + $0xb8] sm:$0xff]
  %v75 = vld [vmem:[%s2 + $0xc0] sm:$0xff]
  %v76 = vld [vmem:[%s2 + $0xc8] sm:$0xff]
  %v77 = vld [vmem:[%s2 + $0xd0] sm:$0xff]
  %v78 = vld [vmem:[%s2 + $0xd8] sm:$0xff]
  %v79 = vld [vmem:[%s2 + $0xe0] sm:$0xff]
  %v80 = vld [vmem:[%s2 + $0xe8] sm:$0xff]
  %v81 = vld [vmem:[%s2 + $0xf0] sm:$0xff]
  %v82 = vld [vmem:[%s2 + $0xf8] sm:$0xff]
  %v83 = vld [vmem:[%s2 + $0x100] sm:$0xff]
  %v84 = vld [vmem:[%s2 + $0x108] sm:$0xff]
  %v85 = vld [vmem:[%s2 + $0x110] sm:$0xff]
  %v86 = vld [vmem:[%s2 + $0x118] sm:$0xff]
  %v87 = vld [vmem:[%s2 + $0x120] sm:$0xff]
  %v88 = vld [vmem:[%s2 + $0x128] sm:$0xff]
  %v89 = vld [vmem:[%s2 + $0x130] sm:$0xff]
  %v90 = vld [vmem:[%s2 + $0x138] sm:$0xff]
  %v91 = vld [vmem:[%s2 + $0x140] sm:$0xff]
  %v92 = vld [vmem:[%s2 + $0x148] sm:$0xff]
  %v93 = vld [vmem:[%s2 + $0x150] sm:$0xff]
  %v94 = vld [vmem:[%s2 + $0x158] sm:$0xff]
  %v95 = vld [vmem:[%s2 + $0x160] sm:$0xff]
  %v96 = vld [vmem:[%s2 + $0x168] sm:$0xff]
  %v97 = vld [vmem:[%s2 + $0x170] sm:$0xff]
  %v98 = vld [vmem:[%s2 + $0x178] sm:$0xff]
  %v99 = vld [vmem:[%s2 + $0x180] sm:$0xff]
  %v100 = vld [vmem:[%s2 + $0x188] sm:$0xff]
  %v101 = vld [vmem:[%s2 + $0x190] sm:$0xff]
  %v102 = vld [vmem:[%s2 + $0x198] sm:$0xff]
  %v103 = vld [vmem:[%s2 + $0x1a0] sm:$0xff]
  %v104 = vld [vmem:[%s2 + $0x1a8] sm:$0xff]
  %v105 = vld [vmem:[%s2 + $0x1b0] sm:$0xff]
  %v106 = vld [vmem:[%s2 + $0x1b8] sm:$0xff]
  %v107 = vld [vmem:[%s2 + $0x1c0] sm:$0xff]
  %v108 = vld [vmem:[%s2 + $0x1c8] sm:$0xff]
  %v109 = vld [vmem:[%s2 + $0x1d0] sm:$0xff]
  %v110 = vld [vmem:[%s2 + $0x1d8] sm:$0xff]
  %v111 = vld [vmem:[%s2 + $0x1e0] sm:$0xff]
  %v112 = vld [vmem:[%s2 + $0x1e8] sm:$0xff]
  %v113 = vld [vmem:[%s2 + $0x1f0] sm:$0xff]
  %v114 = vld [vmem:[%s2 + $0x1f8] sm:$0xff]
  %v179 = vunpack.c.l.b16 %v51
  %v180 = vunpack.c.h.b16 %v51
  %v181 = vunpack.c.l.b16 %v52
  %v182 = vunpack.c.h.b16 %v52
  %v183 = vunpack.c.l.b16 %v53
  %v184 = vunpack.c.h.b16 %v53
  %v185 = vunpack.c.l.b16 %v54
  %v186 = vunpack.c.h.b16 %v54
  %v187 = vunpack.c.l.b16 %v55
  %v188 = vunpack.c.h.b16 %v55
  %v189 = vunpack.c.l.b16 %v56
  %v190 = vunpack.c.h.b16 %v56
  %v191 = vunpack.c.l.b16 %v57
  %v192 = vunpack.c.h.b16 %v57
  %v193 = vunpack.c.l.b16 %v58
  %v194 = vunpack.c.h.b16 %v58
  %v195 = vunpack.c.l.b16 %v59
  %v196 = vunpack.c.h.b16 %v59
  %v197 = vunpack.c.l.b16 %v60
  %v198 = vunpack.c.h.b16 %v60
  %v199 = vunpack.c.l.b16 %v61
  %v200 = vunpack.c.h.b16 %v61
  %v201 = vunpack.c.l.b16 %v62
  %v202 = vunpack.c.h.b16 %v62
  %v203 = vunpack.c.l.b16 %v63
  %v204 = vunpack.c.h.b16 %v63
  %v205 = vunpack.c.l.b16 %v64
  %v206 = vunpack.c.h.b16 %v64
  %v207 = vunpack.c.l.b16 %v65
  %v208 = vunpack.c.h.b16 %v65
  %v209 = vunpack.c.l.b16 %v66
  %v210 = vunpack.c.h.b16 %v66
  %v211 = vunpack.c.l.b16 %v67
  %v212 = vunpack.c.h.b16 %v67
  %v213 = vunpack.c.l.b16 %v68
  %v214 = vunpack.c.h.b16 %v68
  %v215 = vunpack.c.l.b16 %v69
  %v216 = vunpack.c.h.b16 %v69
  %v217 = vunpack.c.l.b16 %v70
  %v218 = vunpack.c.h.b16 %v70
  %v219 = vunpack.c.l.b16 %v71
  %v220 = vunpack.c.h.b16 %v71
  %v221 = vunpack.c.l.b16 %v72
  %v222 = vunpack.c.h.b16 %v72
  %v223 = vunpack.c.l.b16 %v73
  %v224 = vunpack.c.h.b16 %v73
  %v225 = vunpack.c.l.b16 %v74
  %v226 = vunpack.c.h.b16 %v74
  %v227 = vunpack.c.l.b16 %v75
  %v228 = vunpack.c.h.b16 %v75
  %v229 = vunpack.c.l.b16 %v76
  %v230 = vunpack.c.h.b16 %v76
  %v231 = vunpack.c.l.b16 %v77
  %v232 = vunpack.c.h.b16 %v77
  %v233 = vunpack.c.l.b16 %v78
  %v234 = vunpack.c.h.b16 %v78
  %v235 = vunpack.c.l.b16 %v79
  %v236 = vunpack.c.h.b16 %v79
  %v237 = vunpack.c.l.b16 %v80
  %v238 = vunpack.c.h.b16 %v80
  %v239 = vunpack.c.l.b16 %v81
  %v240 = vunpack.c.h.b16 %v81
  %v241 = vunpack.c.l.b16 %v82
  %v242 = vunpack.c.h.b16 %v82
  %v243 = vunpack.c.l.b16 %v83
  %v244 = vunpack.c.h.b16 %v83
  %v245 = vunpack.c.l.b16 %v84
  %v246 = vunpack.c.h.b16 %v84
  %v247 = vunpack.c.l.b16 %v85
  %v248 = vunpack.c.h.b16 %v85
  %v249 = vunpack.c.l.b16 %v86
  %v250 = vunpack.c.h.b16 %v86
  %v251 = vunpack.c.l.b16 %v87
  %v252 = vunpack.c.h.b16 %v87
  %v253 = vunpack.c.l.b16 %v88
  %v254 = vunpack.c.h.b16 %v88
  %v255 = vunpack.c.l.b16 %v89
  %v256 = vunpack.c.h.b16 %v89
  %v257 = vunpack.c.l.b16 %v90
  %v258 = vunpack.c.h.b16 %v90
  %v259 = vunpack.c.l.b16 %v91
  %v260 = vunpack.c.h.b16 %v91
  %v261 = vunpack.c.l.b16 %v92
  %v262 = vunpack.c.h.b16 %v92
  %v263 = vunpack.c.l.b16 %v93
  %v264 = vunpack.c.h.b16 %v93
  %v265 = vunpack.c.l.b16 %v94
  %v266 = vunpack.c.h.b16 %v94
  %v267 = vunpack.c.l.b16 %v95
  %v268 = vunpack.c.h.b16 %v95
  %v269 = vunpack.c.l.b16 %v96
  %v270 = vunpack.c.h.b16 %v96
  %v271 = vunpack.c.l.b16 %v97
  %v272 = vunpack.c.h.b16 %v97
  %v273 = vunpack.c.l.b16 %v98
  %v274 = vunpack.c.h.b16 %v98
  %v275 = vunpack.c.l.b16 %v99
  %v276 = vunpack.c.h.b16 %v99
  %v277 = vunpack.c.l.b16 %v100
  %v278 = vunpack.c.h.b16 %v100
  %v279 = vunpack.c.l.b16 %v101
  %v280 = vunpack.c.h.b16 %v101
  %v281 = vunpack.c.l.b16 %v102
  %v282 = vunpack.c.h.b16 %v102
  %v283 = vunpack.c.l.b16 %v103
  %v284 = vunpack.c.h.b16 %v103
  %v285 = vunpack.c.l.b16 %v104
  %v286 = vunpack.c.h.b16 %v104
  %v287 = vunpack.c.l.b16 %v105
  %v288 = vunpack.c.h.b16 %v105
  %v289 = vunpack.c.l.b16 %v106
  %v290 = vunpack.c.h.b16 %v106
  %v291 = vunpack.c.l.b16 %v107
  %v292 = vunpack.c.h.b16 %v107
  %v293 = vunpack.c.l.b16 %v108
  %v294 = vunpack.c.h.b16 %v108
  %v295 = vunpack.c.l.b16 %v109
  %v296 = vunpack.c.h.b16 %v109
  %v297 = vunpack.c.l.b16 %v110
  %v298 = vunpack.c.h.b16 %v110
  %v299 = vunpack.c.l.b16 %v111
  %v300 = vunpack.c.h.b16 %v111
  %v301 = vunpack.c.l.b16 %v112
  %v302 = vunpack.c.h.b16 %v112
  %v303 = vunpack.c.l.b16 %v113
  %v304 = vunpack.c.h.b16 %v113
  %v305 = vunpack.c.l.b16 %v114
  %v306 = vunpack.c.h.b16 %v114
  %v307 = vpack.c.b16 %v195, %v179
  %v308 = vpack.c.b16 %v196, %v180
  %v309 = vpack.c.b16 %v197, %v181
  %v310 = vpack.c.b16 %v198, %v182
  %v311 = vpack.c.b16 %v199, %v183
  %v312 = vpack.c.b16 %v200, %v184
  %v313 = vpack.c.b16 %v201, %v185
  %v314 = vpack.c.b16 %v202, %v186
  %v315 = vpack.c.b16 %v203, %v187
  %v316 = vpack.c.b16 %v204, %v188
  %v317 = vpack.c.b16 %v205, %v189
  %v318 = vpack.c.b16 %v206, %v190
  %v319 = vpack.c.b16 %v207, %v191
  %v320 = vpack.c.b16 %v208, %v192
  %v321 = vpack.c.b16 %v209, %v193
  %v322 = vpack.c.b16 %v210, %v194
  %v323 = vpack.c.b16 %v227, %v211
  %v324 = vpack.c.b16 %v228, %v212
  %v325 = vpack.c.b16 %v229, %v213
  %v326 = vpack.c.b16 %v230, %v214
  %v327 = vpack.c.b16 %v231, %v215
  %v328 = vpack.c.b16 %v232, %v216
  %v329 = vpack.c.b16 %v233, %v217
  %v330 = vpack.c.b16 %v234, %v218
  %v331 = vpack.c.b16 %v235, %v219
  %v332 = vpack.c.b16 %v236, %v220
  %v333 = vpack.c.b16 %v237, %v221
  %v334 = vpack.c.b16 %v238, %v222
  %v335 = vpack.c.b16 %v239, %v223
  %v336 = vpack.c.b16 %v240, %v224
  %v337 = vpack.c.b16 %v241, %v225
  %v338 = vpack.c.b16 %v242, %v226
  %v339 = vpack.c.b16 %v259, %v243
  %v340 = vpack.c.b16 %v260, %v244
  %v341 = vpack.c.b16 %v261, %v245
  %v342 = vpack.c.b16 %v262, %v246
  %v343 = vpack.c.b16 %v263, %v247
  %v344 = vpack.c.b16 %v264, %v248
  %v345 = vpack.c.b16 %v265, %v249
  %v346 = vpack.c.b16 %v266, %v250
  %v347 = vpack.c.b16 %v267, %v251
  %v348 = vpack.c.b16 %v268, %v252
  %v349 = vpack.c.b16 %v269, %v253
  %v350 = vpack.c.b16 %v270, %v254
  %v351 = vpack.c.b16 %v271, %v255
  %v352 = vpack.c.b16 %v272, %v256
  %v353 = vpack.c.b16 %v273, %v257
  %v354 = vpack.c.b16 %v274, %v258
  %v355 = vpack.c.b16 %v291, %v275
  %v356 = vpack.c.b16 %v292, %v276
  %v357 = vpack.c.b16 %v293, %v277
  %v358 = vpack.c.b16 %v294, %v278
  %v359 = vpack.c.b16 %v295, %v279
  %v360 = vpack.c.b16 %v296, %v280
  %v361 = vpack.c.b16 %v297, %v281
  %v362 = vpack.c.b16 %v298, %v282
  %v363 = vpack.c.b16 %v299, %v283
  %v364 = vpack.c.b16 %v300, %v284
  %v365 = vpack.c.b16 %v301, %v285
  %v366 = vpack.c.b16 %v302, %v286
  %v367 = vpack.c.b16 %v303, %v287
  %v368 = vpack.c.b16 %v304, %v288
  %v369 = vpack.c.b16 %v305, %v289
  %v370 = vpack.c.b16 %v306, %v290
  %vm435 = vcmask 523264
  %v437 = vsel %vm435, %v46, 0
  %v440 = vsel %vm435, %v47, 0
  %v443 = vsel %vm435, %v48, 0
  %v446 = vsel %vm435, %v49, 0
  %v449 = vsel %vm435, %v50, 0
  %451 = vmatpush.bf16.msra.mxu0 0
  %452 = vmatpush.bf16.msra.mxu0 0
  %453 = vmatpush.bf16.msra.mxu0 0
  %454 = vmatpush.bf16.msra.mxu0 0
  %455 = vmatpush.bf16.msra.mxu0 %v355
  %456 = vmatpush.bf16.msra.mxu0 %v339
  %457 = vmatpush.bf16.msra.mxu0 %v323
  %458 = vmatpush.bf16.msra.mxu0 %v307
  %459 = vmatmul.bf16.gmra.mxu0 %v437
  %v460 = vpop.f32.mrf.mxu0
  %v461 = vadd.f32 0.0, %v460
  %v462 = vpop.f32.mrf.mxu0
  %v463 = vadd.f32 0.0, %v462
  %464 = vmatmul.bf16.gmra.mxu0 %v440
  %v465 = vpop.f32.mrf.mxu0
  %v466 = vadd.f32 0.0, %v465
  %v467 = vpop.f32.mrf.mxu0
  %v468 = vadd.f32 0.0, %v467
  %469 = vmatmul.bf16.gmra.mxu0 %v443
  %v470 = vpop.f32.mrf.mxu0
  %v471 = vadd.f32 0.0, %v470
  %v472 = vpop.f32.mrf.mxu0
  %v473 = vadd.f32 0.0, %v472
  %474 = vmatmul.bf16.gmra.mxu0 %v446
  %v475 = vpop.f32.mrf.mxu0
  %v476 = vadd.f32 0.0, %v475
  %v477 = vpop.f32.mrf.mxu0
  %v478 = vadd.f32 0.0, %v477
  %479 = vmatmul.bf16.gmra.mxu0 %v449
  %v480 = vpop.f32.mrf.mxu0
  %v481 = vadd.f32 0.0, %v480
  %v482 = vpop.f32.mrf.mxu0
  %483 = vdwg.mxu0
  %484 = vmatpush.bf16.msra.mxu0 0
  %485 = vmatpush.bf16.msra.mxu0 0
  %486 = vmatpush.bf16.msra.mxu0 0
  %487 = vmatpush.bf16.msra.mxu0 0
  %488 = vmatpush.bf16.msra.mxu0 %v356
  %489 = vmatpush.bf16.msra.mxu0 %v340
  %490 = vmatpush.bf16.msra.mxu0 %v324
  %491 = vmatpush.bf16.msra.mxu0 %v308
  %492 = vmatmul.bf16.gmra.mxu0 %v437
  %v493 = vpop.f32.mrf.mxu0
  %v494 = vadd.f32 0.0, %v493
  %v495 = vpop.f32.mrf.mxu0
  %v496 = vadd.f32 0.0, %v495
  %497 = vmatmul.bf16.gmra.mxu0 %v440
  %v498 = vpop.f32.mrf.mxu0
  %v499 = vadd.f32 0.0, %v498
  %v500 = vpop.f32.mrf.mxu0
  %v501 = vadd.f32 0.0, %v500
  %502 = vmatmul.bf16.gmra.mxu0 %v443
  %v503 = vpop.f32.mrf.mxu0
  %v504 = vadd.f32 0.0, %v503
  %v505 = vpop.f32.mrf.mxu0
  %v506 = vadd.f32 0.0, %v505
  %507 = vmatmul.bf16.gmra.mxu0 %v446
  %v508 = vpop.f32.mrf.mxu0
  %v509 = vadd.f32 0.0, %v508
  %v510 = vpop.f32.mrf.mxu0
  %v511 = vadd.f32 0.0, %v510
  %512 = vmatmul.bf16.gmra.mxu0 %v449
  %v513 = vpop.f32.mrf.mxu0
  %v514 = vadd.f32 0.0, %v513
  %v515 = vpop.f32.mrf.mxu0
  %516 = vdwg.mxu0
  %517 = vmatpush.bf16.msra.mxu0 0
  %518 = vmatpush.bf16.msra.mxu0 0
  %519 = vmatpush.bf16.msra.mxu0 0
  %520 = vmatpush.bf16.msra.mxu0 0
  %521 = vmatpush.bf16.msra.mxu0 %v357
  %522 = vmatpush.bf16.msra.mxu0 %v341
  %523 = vmatpush.bf16.msra.mxu0 %v325
  %524 = vmatpush.bf16.msra.mxu0 %v309
  %525 = vmatmul.bf16.gmra.mxu0 %v437
  %v526 = vpop.f32.mrf.mxu0
  %v527 = vadd.f32 0.0, %v526
  %v528 = vpop.f32.mrf.mxu0
  %v529 = vadd.f32 0.0, %v528
  %530 = vmatmul.bf16.gmra.mxu0 %v440
  %v531 = vpop.f32.mrf.mxu0
  %v532 = vadd.f32 0.0, %v531
  %v533 = vpop.f32.mrf.mxu0
  %v534 = vadd.f32 0.0, %v533
  %535 = vmatmul.bf16.gmra.mxu0 %v443
  %v536 = vpop.f32.mrf.mxu0
  %v537 = vadd.f32 0.0, %v536
  %v538 = vpop.f32.mrf.mxu0
  %v539 = vadd.f32 0.0, %v538
  %540 = vmatmul.bf16.gmra.mxu0 %v446
  %v541 = vpop.f32.mrf.mxu0
  %v542 = vadd.f32 0.0, %v541
  %v543 = vpop.f32.mrf.mxu0
  %v544 = vadd.f32 0.0, %v543
  %545 = vmatmul.bf16.gmra.mxu0 %v449
  %v546 = vpop.f32.mrf.mxu0
  %v547 = vadd.f32 0.0, %v546
  %v548 = vpop.f32.mrf.mxu0
  %549 = vdwg.mxu0
  %550 = vmatpush.bf16.msra.mxu0 0
  %551 = vmatpush.bf16.msra.mxu0 0
  %552 = vmatpush.bf16.msra.mxu0 0
  %553 = vmatpush.bf16.msra.mxu0 0
  %554 = vmatpush.bf16.msra.mxu0 %v358
  %555 = vmatpush.bf16.msra.mxu0 %v342
  %556 = vmatpush.bf16.msra.mxu0 %v326
  %557 = vmatpush.bf16.msra.mxu0 %v310
  %558 = vmatmul.bf16.gmra.mxu0 %v437
  %v559 = vpop.f32.mrf.mxu0
  %v560 = vadd.f32 0.0, %v559
  %v561 = vpop.f32.mrf.mxu0
  %v562 = vadd.f32 0.0, %v561
  %563 = vmatmul.bf16.gmra.mxu0 %v440
  %v564 = vpop.f32.mrf.mxu0
  %v565 = vadd.f32 0.0, %v564
  %v566 = vpop.f32.mrf.mxu0
  %v567 = vadd.f32 0.0, %v566
  %568 = vmatmul.bf16.gmra.mxu0 %v443
  %v569 = vpop.f32.mrf.mxu0
  %v570 = vadd.f32 0.0, %v569
  %v571 = vpop.f32.mrf.mxu0
  %v572 = vadd.f32 0.0, %v571
  %573 = vmatmul.bf16.gmra.mxu0 %v446
  %v574 = vpop.f32.mrf.mxu0
  %v575 = vadd.f32 0.0, %v574
  %v576 = vpop.f32.mrf.mxu0
  %v577 = vadd.f32 0.0, %v576
  %578 = vmatmul.bf16.gmra.mxu0 %v449
  %v579 = vpop.f32.mrf.mxu0
  %v580 = vadd.f32 0.0, %v579
  %v581 = vpop.f32.mrf.mxu0
  %582 = vdwg.mxu0
  %583 = vmatpush.bf16.msra.mxu0 0
  %584 = vmatpush.bf16.msra.mxu0 0
  %585 = vmatpush.bf16.msra.mxu0 0
  %586 = vmatpush.bf16.msra.mxu0 0
  %587 = vmatpush.bf16.msra.mxu0 %v359
  %588 = vmatpush.bf16.msra.mxu0 %v343
  %589 = vmatpush.bf16.msra.mxu0 %v327
  %590 = vmatpush.bf16.msra.mxu0 %v311
  %591 = vmatmul.bf16.gmra.mxu0 %v437
  %v592 = vpop.f32.mrf.mxu0
  %v593 = vadd.f32 0.0, %v592
  %v594 = vpop.f32.mrf.mxu0
  %v595 = vadd.f32 0.0, %v594
  %596 = vmatmul.bf16.gmra.mxu0 %v440
  %v597 = vpop.f32.mrf.mxu0
  %v598 = vadd.f32 0.0, %v597
  %v599 = vpop.f32.mrf.mxu0
  %v600 = vadd.f32 0.0, %v599
  %601 = vmatmul.bf16.gmra.mxu0 %v443
  %v602 = vpop.f32.mrf.mxu0
  %v603 = vadd.f32 0.0, %v602
  %v604 = vpop.f32.mrf.mxu0
  %v605 = vadd.f32 0.0, %v604
  %606 = vmatmul.bf16.gmra.mxu0 %v446
  %v607 = vpop.f32.mrf.mxu0
  %v608 = vadd.f32 0.0, %v607
  %v609 = vpop.f32.mrf.mxu0
  %v610 = vadd.f32 0.0, %v609
  %611 = vmatmul.bf16.gmra.mxu0 %v449
  %v612 = vpop.f32.mrf.mxu0
  %v613 = vadd.f32 0.0, %v612
  %v614 = vpop.f32.mrf.mxu0
  %615 = vdwg.mxu0
  %616 = vmatpush.bf16.msra.mxu0 0
  %617 = vmatpush.bf16.msra.mxu0 0
  %618 = vmatpush.bf16.msra.mxu0 0
  %619 = vmatpush.bf16.msra.mxu0 0
  %620 = vmatpush.bf16.msra.mxu0 %v360
  %621 = vmatpush.bf16.msra.mxu0 %v344
  %622 = vmatpush.bf16.msra.mxu0 %v328
  %623 = vmatpush.bf16.msra.mxu0 %v312
  %624 = vmatmul.bf16.gmra.mxu0 %v437
  %v625 = vpop.f32.mrf.mxu0
  %v626 = vadd.f32 0.0, %v625
  %v627 = vpop.f32.mrf.mxu0
  %v628 = vadd.f32 0.0, %v627
  %629 = vmatmul.bf16.gmra.mxu0 %v440
  %v630 = vpop.f32.mrf.mxu0
  %v631 = vadd.f32 0.0, %v630
  %v632 = vpop.f32.mrf.mxu0
  %v633 = vadd.f32 0.0, %v632
  %634 = vmatmul.bf16.gmra.mxu0 %v443
  %v635 = vpop.f32.mrf.mxu0
  %v636 = vadd.f32 0.0, %v635
  %v637 = vpop.f32.mrf.mxu0
  %v638 = vadd.f32 0.0, %v637
  %639 = vmatmul.bf16.gmra.mxu0 %v446
  %v640 = vpop.f32.mrf.mxu0
  %v641 = vadd.f32 0.0, %v640
  %v642 = vpop.f32.mrf.mxu0
  %v643 = vadd.f32 0.0, %v642
  %644 = vmatmul.bf16.gmra.mxu0 %v449
  %v645 = vpop.f32.mrf.mxu0
  %v646 = vadd.f32 0.0, %v645
  %v647 = vpop.f32.mrf.mxu0
  %648 = vdwg.mxu0
  %649 = vmatpush.bf16.msra.mxu0 0
  %650 = vmatpush.bf16.msra.mxu0 0
  %651 = vmatpush.bf16.msra.mxu0 0
  %652 = vmatpush.bf16.msra.mxu0 0
  %653 = vmatpush.bf16.msra.mxu0 %v361
  %654 = vmatpush.bf16.msra.mxu0 %v345
  %655 = vmatpush.bf16.msra.mxu0 %v329
  %656 = vmatpush.bf16.msra.mxu0 %v313
  %657 = vmatmul.bf16.gmra.mxu0 %v437
  %v658 = vpop.f32.mrf.mxu0
  %v659 = vadd.f32 0.0, %v658
  %v660 = vpop.f32.mrf.mxu0
  %v661 = vadd.f32 0.0, %v660
  %662 = vmatmul.bf16.gmra.mxu0 %v440
  %v663 = vpop.f32.mrf.mxu0
  %v664 = vadd.f32 0.0, %v663
  %v665 = vpop.f32.mrf.mxu0
  %v666 = vadd.f32 0.0, %v665
  %667 = vmatmul.bf16.gmra.mxu0 %v443
  %v668 = vpop.f32.mrf.mxu0
  %v669 = vadd.f32 0.0, %v668
  %v670 = vpop.f32.mrf.mxu0
  %v671 = vadd.f32 0.0, %v670
  %672 = vmatmul.bf16.gmra.mxu0 %v446
  %v673 = vpop.f32.mrf.mxu0
  %v674 = vadd.f32 0.0, %v673
  %v675 = vpop.f32.mrf.mxu0
  %v676 = vadd.f32 0.0, %v675
  %677 = vmatmul.bf16.gmra.mxu0 %v449
  %v678 = vpop.f32.mrf.mxu0
  %v679 = vadd.f32 0.0, %v678
  %v680 = vpop.f32.mrf.mxu0
  %681 = vdwg.mxu0
  %682 = vmatpush.bf16.msra.mxu0 0
  %683 = vmatpush.bf16.msra.mxu0 0
  %684 = vmatpush.bf16.msra.mxu0 0
  %685 = vmatpush.bf16.msra.mxu0 0
  %686 = vmatpush.bf16.msra.mxu0 %v362
  %687 = vmatpush.bf16.msra.mxu0 %v346
  %688 = vmatpush.bf16.msra.mxu0 %v330
  %689 = vmatpush.bf16.msra.mxu0 %v314
  %690 = vmatmul.bf16.gmra.mxu0 %v437
  %v691 = vpop.f32.mrf.mxu0
  %v692 = vadd.f32 0.0, %v691
  %v693 = vpop.f32.mrf.mxu0
  %v694 = vadd.f32 0.0, %v693
  %695 = vmatmul.bf16.gmra.mxu0 %v440
  %v696 = vpop.f32.mrf.mxu0
  %v697 = vadd.f32 0.0, %v696
  %v698 = vpop.f32.mrf.mxu0
  %v699 = vadd.f32 0.0, %v698
  %700 = vmatmul.bf16.gmra.mxu0 %v443
  %v701 = vpop.f32.mrf.mxu0
  %v702 = vadd.f32 0.0, %v701
  %v703 = vpop.f32.mrf.mxu0
  %v704 = vadd.f32 0.0, %v703
  %705 = vmatmul.bf16.gmra.mxu0 %v446
  %v706 = vpop.f32.mrf.mxu0
  %v707 = vadd.f32 0.0, %v706
  %v708 = vpop.f32.mrf.mxu0
  %v709 = vadd.f32 0.0, %v708
  %710 = vmatmul.bf16.gmra.mxu0 %v449
  %v711 = vpop.f32.mrf.mxu0
  %v712 = vadd.f32 0.0, %v711
  %v713 = vpop.f32.mrf.mxu0
  %714 = vdwg.mxu0
  %715 = vmatpush.bf16.msra.mxu0 0
  %716 = vmatpush.bf16.msra.mxu0 0
  %717 = vmatpush.bf16.msra.mxu0 0
  %718 = vmatpush.bf16.msra.mxu0 0
  %719 = vmatpush.bf16.msra.mxu0 %v363
  %720 = vmatpush.bf16.msra.mxu0 %v347
  %721 = vmatpush.bf16.msra.mxu0 %v331
  %722 = vmatpush.bf16.msra.mxu0 %v315
  %723 = vmatmul.bf16.gmra.mxu0 %v437
  %v724 = vpop.f32.mrf.mxu0
  %v725 = vadd.f32 0.0, %v724
  %v726 = vpop.f32.mrf.mxu0
  %v727 = vadd.f32 0.0, %v726
  %728 = vmatmul.bf16.gmra.mxu0 %v440
  %v729 = vpop.f32.mrf.mxu0
  %v730 = vadd.f32 0.0, %v729
  %v731 = vpop.f32.mrf.mxu0
  %v732 = vadd.f32 0.0, %v731
  %733 = vmatmul.bf16.gmra.mxu0 %v443
  %v734 = vpop.f32.mrf.mxu0
  %v735 = vadd.f32 0.0, %v734
  %v736 = vpop.f32.mrf.mxu0
  %v737 = vadd.f32 0.0, %v736
  %738 = vmatmul.bf16.gmra.mxu0 %v446
  %v739 = vpop.f32.mrf.mxu0
  %v740 = vadd.f32 0.0, %v739
  %v741 = vpop.f32.mrf.mxu0
  %v742 = vadd.f32 0.0, %v741
  %743 = vmatmul.bf16.gmra.mxu0 %v449
  %v744 = vpop.f32.mrf.mxu0
  %v745 = vadd.f32 0.0, %v744
  %v746 = vpop.f32.mrf.mxu0
  %747 = vdwg.mxu0
  %748 = vmatpush.bf16.msra.mxu0 0
  %749 = vmatpush.bf16.msra.mxu0 0
  %750 = vmatpush.bf16.msra.mxu0 0
  %751 = vmatpush.bf16.msra.mxu0 0
  %752 = vmatpush.bf16.msra.mxu0 %v364
  %753 = vmatpush.bf16.msra.mxu0 %v348
  %754 = vmatpush.bf16.msra.mxu0 %v332
  %755 = vmatpush.bf16.msra.mxu0 %v316
  %756 = vmatmul.bf16.gmra.mxu0 %v437
  %v757 = vpop.f32.mrf.mxu0
  %v758 = vadd.f32 0.0, %v757
  %v759 = vpop.f32.mrf.mxu0
  %v760 = vadd.f32 0.0, %v759
  %761 = vmatmul.bf16.gmra.mxu0 %v440
  %v762 = vpop.f32.mrf.mxu0
  %v763 = vadd.f32 0.0, %v762
  %v764 = vpop.f32.mrf.mxu0
  %v765 = vadd.f32 0.0, %v764
  %766 = vmatmul.bf16.gmra.mxu0 %v443
  %v767 = vpop.f32.mrf.mxu0
  %v768 = vadd.f32 0.0, %v767
  %v769 = vpop.f32.mrf.mxu0
  %v770 = vadd.f32 0.0, %v769
  %771 = vmatmul.bf16.gmra.mxu0 %v446
  %v772 = vpop.f32.mrf.mxu0
  %v773 = vadd.f32 0.0, %v772
  %v774 = vpop.f32.mrf.mxu0
  %v775 = vadd.f32 0.0, %v774
  %776 = vmatmul.bf16.gmra.mxu0 %v449
  %v777 = vpop.f32.mrf.mxu0
  %v778 = vadd.f32 0.0, %v777
  %v779 = vpop.f32.mrf.mxu0
  %780 = vdwg.mxu0
  %781 = vmatpush.bf16.msra.mxu0 0
  %782 = vmatpush.bf16.msra.mxu0 0
  %783 = vmatpush.bf16.msra.mxu0 0
  %784 = vmatpush.bf16.msra.mxu0 0
  %785 = vmatpush.bf16.msra.mxu0 %v365
  %786 = vmatpush.bf16.msra.mxu0 %v349
  %787 = vmatpush.bf16.msra.mxu0 %v333
  %788 = vmatpush.bf16.msra.mxu0 %v317
  %789 = vmatmul.bf16.gmra.mxu0 %v437
  %v790 = vpop.f32.mrf.mxu0
  %v791 = vadd.f32 0.0, %v790
  %v792 = vpop.f32.mrf.mxu0
  %v793 = vadd.f32 0.0, %v792
  %794 = vmatmul.bf16.gmra.mxu0 %v440
  %v795 = vpop.f32.mrf.mxu0
  %v796 = vadd.f32 0.0, %v795
  %v797 = vpop.f32.mrf.mxu0
  %v798 = vadd.f32 0.0, %v797
  %799 = vmatmul.bf16.gmra.mxu0 %v443
  %v800 = vpop.f32.mrf.mxu0
  %v801 = vadd.f32 0.0, %v800
  %v802 = vpop.f32.mrf.mxu0
  %v803 = vadd.f32 0.0, %v802
  %804 = vmatmul.bf16.gmra.mxu0 %v446
  %v805 = vpop.f32.mrf.mxu0
  %v806 = vadd.f32 0.0, %v805
  %v807 = vpop.f32.mrf.mxu0
  %v808 = vadd.f32 0.0, %v807
  %809 = vmatmul.bf16.gmra.mxu0 %v449
  %v810 = vpop.f32.mrf.mxu0
  %v811 = vadd.f32 0.0, %v810
  %v812 = vpop.f32.mrf.mxu0
  %813 = vdwg.mxu0
  %814 = vmatpush.bf16.msra.mxu0 0
  %815 = vmatpush.bf16.msra.mxu0 0
  %816 = vmatpush.bf16.msra.mxu0 0
  %817 = vmatpush.bf16.msra.mxu0 0
  %818 = vmatpush.bf16.msra.mxu0 %v366
  %819 = vmatpush.bf16.msra.mxu0 %v350
  %820 = vmatpush.bf16.msra.mxu0 %v334
  %821 = vmatpush.bf16.msra.mxu0 %v318
  %822 = vmatmul.bf16.gmra.mxu0 %v437
  %v823 = vpop.f32.mrf.mxu0
  %v824 = vadd.f32 0.0, %v823
  %v825 = vpop.f32.mrf.mxu0
  %v826 = vadd.f32 0.0, %v825
  %827 = vmatmul.bf16.gmra.mxu0 %v440
  %v828 = vpop.f32.mrf.mxu0
  %v829 = vadd.f32 0.0, %v828
  %v830 = vpop.f32.mrf.mxu0
  %v831 = vadd.f32 0.0, %v830
  %832 = vmatmul.bf16.gmra.mxu0 %v443
  %v833 = vpop.f32.mrf.mxu0
  %v834 = vadd.f32 0.0, %v833
  %v835 = vpop.f32.mrf.mxu0
  %v836 = vadd.f32 0.0, %v835
  %837 = vmatmul.bf16.gmra.mxu0 %v446
  %v838 = vpop.f32.mrf.mxu0
  %v839 = vadd.f32 0.0, %v838
  %v840 = vpop.f32.mrf.mxu0
  %v841 = vadd.f32 0.0, %v840
  %842 = vmatmul.bf16.gmra.mxu0 %v449
  %v843 = vpop.f32.mrf.mxu0
  %v844 = vadd.f32 0.0, %v843
  %v845 = vpop.f32.mrf.mxu0
  %846 = vdwg.mxu0
  %847 = vmatpush.bf16.msra.mxu0 0
  %848 = vmatpush.bf16.msra.mxu0 0
  %849 = vmatpush.bf16.msra.mxu0 0
  %850 = vmatpush.bf16.msra.mxu0 0
  %851 = vmatpush.bf16.msra.mxu0 %v367
  %852 = vmatpush.bf16.msra.mxu0 %v351
  %853 = vmatpush.bf16.msra.mxu0 %v335
  %854 = vmatpush.bf16.msra.mxu0 %v319
  %855 = vmatmul.bf16.gmra.mxu0 %v437
  %v856 = vpop.f32.mrf.mxu0
  %v857 = vadd.f32 0.0, %v856
  %v858 = vpop.f32.mrf.mxu0
  %v859 = vadd.f32 0.0, %v858
  %860 = vmatmul.bf16.gmra.mxu0 %v440
  %v861 = vpop.f32.mrf.mxu0
  %v862 = vadd.f32 0.0, %v861
  %v863 = vpop.f32.mrf.mxu0
  %v864 = vadd.f32 0.0, %v863
  %865 = vmatmul.bf16.gmra.mxu0 %v443
  %v866 = vpop.f32.mrf.mxu0
  %v867 = vadd.f32 0.0, %v866
  %v868 = vpop.f32.mrf.mxu0
  %v869 = vadd.f32 0.0, %v868
  %870 = vmatmul.bf16.gmra.mxu0 %v446
  %v871 = vpop.f32.mrf.mxu0
  %v872 = vadd.f32 0.0, %v871
  %v873 = vpop.f32.mrf.mxu0
  %v874 = vadd.f32 0.0, %v873
  %875 = vmatmul.bf16.gmra.mxu0 %v449
  %v876 = vpop.f32.mrf.mxu0
  %v877 = vadd.f32 0.0, %v876
  %v878 = vpop.f32.mrf.mxu0
  %879 = vdwg.mxu0
  %880 = vmatpush.bf16.msra.mxu0 0
  %881 = vmatpush.bf16.msra.mxu0 0
  %882 = vmatpush.bf16.msra.mxu0 0
  %883 = vmatpush.bf16.msra.mxu0 0
  %884 = vmatpush.bf16.msra.mxu0 %v368
  %885 = vmatpush.bf16.msra.mxu0 %v352
  %886 = vmatpush.bf16.msra.mxu0 %v336
  %887 = vmatpush.bf16.msra.mxu0 %v320
  %888 = vmatmul.bf16.gmra.mxu0 %v437
  %v889 = vpop.f32.mrf.mxu0
  %v890 = vadd.f32 0.0, %v889
  %v891 = vpop.f32.mrf.mxu0
  %v892 = vadd.f32 0.0, %v891
  %893 = vmatmul.bf16.gmra.mxu0 %v440
  %v894 = vpop.f32.mrf.mxu0
  %v895 = vadd.f32 0.0, %v894
  %v896 = vpop.f32.mrf.mxu0
  %v897 = vadd.f32 0.0, %v896
  %898 = vmatmul.bf16.gmra.mxu0 %v443
  %v899 = vpop.f32.mrf.mxu0
  %v900 = vadd.f32 0.0, %v899
  %v901 = vpop.f32.mrf.mxu0
  %v902 = vadd.f32 0.0, %v901
  %903 = vmatmul.bf16.gmra.mxu0 %v446
  %v904 = vpop.f32.mrf.mxu0
  %v905 = vadd.f32 0.0, %v904
  %v906 = vpop.f32.mrf.mxu0
  %v907 = vadd.f32 0.0, %v906
  %908 = vmatmul.bf16.gmra.mxu0 %v449
  %v909 = vpop.f32.mrf.mxu0
  %v910 = vadd.f32 0.0, %v909
  %v911 = vpop.f32.mrf.mxu0
  %912 = vdwg.mxu0
  %913 = vmatpush.bf16.msra.mxu0 0
  %914 = vmatpush.bf16.msra.mxu0 0
  %915 = vmatpush.bf16.msra.mxu0 0
  %916 = vmatpush.bf16.msra.mxu0 0
  %917 = vmatpush.bf16.msra.mxu0 %v369
  %918 = vmatpush.bf16.msra.mxu0 %v353
  %919 = vmatpush.bf16.msra.mxu0 %v337
  %920 = vmatpush.bf16.msra.mxu0 %v321
  %921 = vmatmul.bf16.gmra.mxu0 %v437
  %v922 = vpop.f32.mrf.mxu0
  %v923 = vadd.f32 0.0, %v922
  %v924 = vpop.f32.mrf.mxu0
  %v925 = vadd.f32 0.0, %v924
  %926 = vmatmul.bf16.gmra.mxu0 %v440
  %v927 = vpop.f32.mrf.mxu0
  %v928 = vadd.f32 0.0, %v927
  %v929 = vpop.f32.mrf.mxu0
  %v930 = vadd.f32 0.0, %v929
  %931 = vmatmul.bf16.gmra.mxu0 %v443
  %v932 = vpop.f32.mrf.mxu0
  %v933 = vadd.f32 0.0, %v932
  %v934 = vpop.f32.mrf.mxu0
  %v935 = vadd.f32 0.0, %v934
  %936 = vmatmul.bf16.gmra.mxu0 %v446
  %v937 = vpop.f32.mrf.mxu0
  %v938 = vadd.f32 0.0, %v937
  %v939 = vpop.f32.mrf.mxu0
  %v940 = vadd.f32 0.0, %v939
  %941 = vmatmul.bf16.gmra.mxu0 %v449
  %v942 = vpop.f32.mrf.mxu0
  %v943 = vadd.f32 0.0, %v942
  %v944 = vpop.f32.mrf.mxu0
  %945 = vdwg.mxu0
  %946 = vmatpush.bf16.msra.mxu0 0
  %947 = vmatpush.bf16.msra.mxu0 0
  %948 = vmatpush.bf16.msra.mxu0 0
  %949 = vmatpush.bf16.msra.mxu0 0
  %950 = vmatpush.bf16.msra.mxu0 %v370
  %951 = vmatpush.bf16.msra.mxu0 %v354
  %952 = vmatpush.bf16.msra.mxu0 %v338
  %953 = vmatpush.bf16.msra.mxu0 %v322
  %954 = vmatmul.bf16.gmra.mxu0 %v437
  %v955 = vpop.f32.mrf.mxu0
  %v956 = vadd.f32 0.0, %v955
  %v957 = vpop.f32.mrf.mxu0
  %v958 = vadd.f32 0.0, %v957
  %959 = vmatmul.bf16.gmra.mxu0 %v440
  %v960 = vpop.f32.mrf.mxu0
  %v961 = vadd.f32 0.0, %v960
  %v962 = vpop.f32.mrf.mxu0
  %v963 = vadd.f32 0.0, %v962
  %964 = vmatmul.bf16.gmra.mxu0 %v443
  %v965 = vpop.f32.mrf.mxu0
  %v966 = vadd.f32 0.0, %v965
  %v967 = vpop.f32.mrf.mxu0
  %v968 = vadd.f32 0.0, %v967
  %969 = vmatmul.bf16.gmra.mxu0 %v446
  %v970 = vpop.f32.mrf.mxu0
  %v971 = vadd.f32 0.0, %v970
  %v972 = vpop.f32.mrf.mxu0
  %v973 = vadd.f32 0.0, %v972
  %974 = vmatmul.bf16.gmra.mxu0 %v449
  %v975 = vpop.f32.mrf.mxu0
  %v976 = vadd.f32 0.0, %v975
  %v977 = vpop.f32.mrf.mxu0
  %978 = vdwg.mxu0
  %979 = vst [vmem:[%s3] sm:$0xff] %v461
  %980 = vst [vmem:[%s3 + $0x8] sm:$0xff] %v494
  %981 = vst [vmem:[%s3 + $0x10] sm:$0xff] %v527
  %982 = vst [vmem:[%s3 + $0x18] sm:$0xff] %v560
  %983 = vst [vmem:[%s3 + $0x20] sm:$0xff] %v593
  %984 = vst [vmem:[%s3 + $0x28] sm:$0xff] %v626
  %985 = vst [vmem:[%s3 + $0x30] sm:$0xff] %v659
  %986 = vst [vmem:[%s3 + $0x38] sm:$0xff] %v692
  %987 = vst [vmem:[%s3 + $0x40] sm:$0xff] %v725
  %988 = vst [vmem:[%s3 + $0x48] sm:$0xff] %v758
  %989 = vst [vmem:[%s3 + $0x50] sm:$0xff] %v791
  %990 = vst [vmem:[%s3 + $0x58] sm:$0xff] %v824
  %991 = vst [vmem:[%s3 + $0x60] sm:$0xff] %v857
  %992 = vst [vmem:[%s3 + $0x68] sm:$0xff] %v890
  %993 = vst [vmem:[%s3 + $0x70] sm:$0xff] %v923
  %994 = vst [vmem:[%s3 + $0x78] sm:$0xff] %v956
  %995 = vst [vmem:[%s3 + $0x80] sm:$0xff] %v463
  %996 = vst [vmem:[%s3 + $0x88] sm:$0xff] %v496
  %997 = vst [vmem:[%s3 + $0x90] sm:$0xff] %v529
  %998 = vst [vmem:[%s3 + $0x98] sm:$0xff] %v562
  %999 = vst [vmem:[%s3 + $0xa0] sm:$0xff] %v595
  %1000 = vst [vmem:[%s3 + $0xa8] sm:$0xff] %v628
  %1001 = vst [vmem:[%s3 + $0xb0] sm:$0xff] %v661
  %1002 = vst [vmem:[%s3 + $0xb8] sm:$0xff] %v694
  %1003 = vst [vmem:[%s3 + $0xc0] sm:$0xff] %v727
  %1004 = vst [vmem:[%s3 + $0xc8] sm:$0xff] %v760
  %1005 = vst [vmem:[%s3 + $0xd0] sm:$0xff] %v793
  %1006 = vst [vmem:[%s3 + $0xd8] sm:$0xff] %v826
  %1007 = vst [vmem:[%s3 + $0xe0] sm:$0xff] %v859
  %1008 = vst [vmem:[%s3 + $0xe8] sm:$0xff] %v892
  %1009 = vst [vmem:[%s3 + $0xf0] sm:$0xff] %v925
  %1010 = vst [vmem:[%s3 + $0xf8] sm:$0xff] %v958
  %1011 = vst [vmem:[%s3 + $0x100] sm:$0xff] %v466
  %1012 = vst [vmem:[%s3 + $0x108] sm:$0xff] %v499
  %1013 = vst [vmem:[%s3 + $0x110] sm:$0xff] %v532
  %1014 = vst [vmem:[%s3 + $0x118] sm:$0xff] %v565
  %1015 = vst [vmem:[%s3 + $0x120] sm:$0xff] %v598
  %1016 = vst [vmem:[%s3 + $0x128] sm:$0xff] %v631
  %1017 = vst [vmem:[%s3 + $0x130] sm:$0xff] %v664
  %1018 = vst [vmem:[%s3 + $0x138] sm:$0xff] %v697
  %1019 = vst [vmem:[%s3 + $0x140] sm:$0xff] %v730
  %1020 = vst [vmem:[%s3 + $0x148] sm:$0xff] %v763
  %1021 = vst [vmem:[%s3 + $0x150] sm:$0xff] %v796
  %1022 = vst [vmem:[%s3 + $0x158] sm:$0xff] %v829
  %1023 = vst [vmem:[%s3 + $0x160] sm:$0xff] %v862
  %1024 = vst [vmem:[%s3 + $0x168] sm:$0xff] %v895
  %1025 = vst [vmem:[%s3 + $0x170] sm:$0xff] %v928
  %1026 = vst [vmem:[%s3 + $0x178] sm:$0xff] %v961
  %1027 = vst [vmem:[%s3 + $0x180] sm:$0xff] %v468
  %1028 = vst [vmem:[%s3 + $0x188] sm:$0xff] %v501
  %1029 = vst [vmem:[%s3 + $0x190] sm:$0xff] %v534
  %1030 = vst [vmem:[%s3 + $0x198] sm:$0xff] %v567
  %1031 = vst [vmem:[%s3 + $0x1a0] sm:$0xff] %v600
  %1032 = vst [vmem:[%s3 + $0x1a8] sm:$0xff] %v633
  %1033 = vst [vmem:[%s3 + $0x1b0] sm:$0xff] %v666
  %1034 = vst [vmem:[%s3 + $0x1b8] sm:$0xff] %v699
  %1035 = vst [vmem:[%s3 + $0x1c0] sm:$0xff] %v732
  %1036 = vst [vmem:[%s3 + $0x1c8] sm:$0xff] %v765
  %1037 = vst [vmem:[%s3 + $0x1d0] sm:$0xff] %v798
  %1038 = vst [vmem:[%s3 + $0x1d8] sm:$0xff] %v831
  %1039 = vst [vmem:[%s3 + $0x1e0] sm:$0xff] %v864
  %1040 = vst [vmem:[%s3 + $0x1e8] sm:$0xff] %v897
  %1041 = vst [vmem:[%s3 + $0x1f0] sm:$0xff] %v930
  %1042 = vst [vmem:[%s3 + $0x1f8] sm:$0xff] %v963
  %1043 = vst [vmem:[%s3 + $0x200] sm:$0xff] %v471
  %1044 = vst [vmem:[%s3 + $0x208] sm:$0xff] %v504
  %1045 = vst [vmem:[%s3 + $0x210] sm:$0xff] %v537
  %1046 = vst [vmem:[%s3 + $0x218] sm:$0xff] %v570
  %1047 = vst [vmem:[%s3 + $0x220] sm:$0xff] %v603
  %1048 = vst [vmem:[%s3 + $0x228] sm:$0xff] %v636
  %1049 = vst [vmem:[%s3 + $0x230] sm:$0xff] %v669
  %1050 = vst [vmem:[%s3 + $0x238] sm:$0xff] %v702
  %1051 = vst [vmem:[%s3 + $0x240] sm:$0xff] %v735
  %1052 = vst [vmem:[%s3 + $0x248] sm:$0xff] %v768
  %1053 = vst [vmem:[%s3 + $0x250] sm:$0xff] %v801
  %1054 = vst [vmem:[%s3 + $0x258] sm:$0xff] %v834
  %1055 = vst [vmem:[%s3 + $0x260] sm:$0xff] %v867
  %1056 = vst [vmem:[%s3 + $0x268] sm:$0xff] %v900
  %1057 = vst [vmem:[%s3 + $0x270] sm:$0xff] %v933
  %1058 = vst [vmem:[%s3 + $0x278] sm:$0xff] %v966
  %1059 = vst [vmem:[%s3 + $0x280] sm:$0xff] %v473
  %1060 = vst [vmem:[%s3 + $0x288] sm:$0xff] %v506
  %1061 = vst [vmem:[%s3 + $0x290] sm:$0xff] %v539
  %1062 = vst [vmem:[%s3 + $0x298] sm:$0xff] %v572
  %1063 = vst [vmem:[%s3 + $0x2a0] sm:$0xff] %v605
  %1064 = vst [vmem:[%s3 + $0x2a8] sm:$0xff] %v638
  %1065 = vst [vmem:[%s3 + $0x2b0] sm:$0xff] %v671
  %1066 = vst [vmem:[%s3 + $0x2b8] sm:$0xff] %v704
  %1067 = vst [vmem:[%s3 + $0x2c0] sm:$0xff] %v737
  %1068 = vst [vmem:[%s3 + $0x2c8] sm:$0xff] %v770
  %1069 = vst [vmem:[%s3 + $0x2d0] sm:$0xff] %v803
  %1070 = vst [vmem:[%s3 + $0x2d8] sm:$0xff] %v836
  %1071 = vst [vmem:[%s3 + $0x2e0] sm:$0xff] %v869
  %1072 = vst [vmem:[%s3 + $0x2e8] sm:$0xff] %v902
  %1073 = vst [vmem:[%s3 + $0x2f0] sm:$0xff] %v935
  %1074 = vst [vmem:[%s3 + $0x2f8] sm:$0xff] %v968
  %1075 = vst [vmem:[%s3 + $0x300] sm:$0xff] %v476
  %1076 = vst [vmem:[%s3 + $0x308] sm:$0xff] %v509
  %1077 = vst [vmem:[%s3 + $0x310] sm:$0xff] %v542
  %1078 = vst [vmem:[%s3 + $0x318] sm:$0xff] %v575
  %1079 = vst [vmem:[%s3 + $0x320] sm:$0xff] %v608
  %1080 = vst [vmem:[%s3 + $0x328] sm:$0xff] %v641
  %1081 = vst [vmem:[%s3 + $0x330] sm:$0xff] %v674
  %1082 = vst [vmem:[%s3 + $0x338] sm:$0xff] %v707
  %1083 = vst [vmem:[%s3 + $0x340] sm:$0xff] %v740
  %1084 = vst [vmem:[%s3 + $0x348] sm:$0xff] %v773
  %1085 = vst [vmem:[%s3 + $0x350] sm:$0xff] %v806
  %1086 = vst [vmem:[%s3 + $0x358] sm:$0xff] %v839
  %1087 = vst [vmem:[%s3 + $0x360] sm:$0xff] %v872
  %1088 = vst [vmem:[%s3 + $0x368] sm:$0xff] %v905
  %1089 = vst [vmem:[%s3 + $0x370] sm:$0xff] %v938
  %1090 = vst [vmem:[%s3 + $0x378] sm:$0xff] %v971
  %1091 = vst [vmem:[%s3 + $0x380] sm:$0xff] %v478
  %1092 = vst [vmem:[%s3 + $0x388] sm:$0xff] %v511
  %1093 = vst [vmem:[%s3 + $0x390] sm:$0xff] %v544
  %1094 = vst [vmem:[%s3 + $0x398] sm:$0xff] %v577
  %1095 = vst [vmem:[%s3 + $0x3a0] sm:$0xff] %v610
  %1096 = vst [vmem:[%s3 + $0x3a8] sm:$0xff] %v643
  %1097 = vst [vmem:[%s3 + $0x3b0] sm:$0xff] %v676
  %1098 = vst [vmem:[%s3 + $0x3b8] sm:$0xff] %v709
  %1099 = vst [vmem:[%s3 + $0x3c0] sm:$0xff] %v742
  %1100 = vst [vmem:[%s3 + $0x3c8] sm:$0xff] %v775
  %1101 = vst [vmem:[%s3 + $0x3d0] sm:$0xff] %v808
  %1102 = vst [vmem:[%s3 + $0x3d8] sm:$0xff] %v841
  %1103 = vst [vmem:[%s3 + $0x3e0] sm:$0xff] %v874
  %1104 = vst [vmem:[%s3 + $0x3e8] sm:$0xff] %v907
  %1105 = vst [vmem:[%s3 + $0x3f0] sm:$0xff] %v940
  %1106 = vst [vmem:[%s3 + $0x3f8] sm:$0xff] %v973
  %1107 = vst [vmem:[%s3 + $0x400] sm:$0xff] %v481
  %1108 = vst [vmem:[%s3 + $0x408] sm:$0xff] %v514
  %1109 = vst [vmem:[%s3 + $0x410] sm:$0xff] %v547
  %1110 = vst [vmem:[%s3 + $0x418] sm:$0xff] %v580
  %1111 = vst [vmem:[%s3 + $0x420] sm:$0xff] %v613
  %1112 = vst [vmem:[%s3 + $0x428] sm:$0xff] %v646
  %1113 = vst [vmem:[%s3 + $0x430] sm:$0xff] %v679
  %1114 = vst [vmem:[%s3 + $0x438] sm:$0xff] %v712
  %1115 = vst [vmem:[%s3 + $0x440] sm:$0xff] %v745
  %1116 = vst [vmem:[%s3 + $0x448] sm:$0xff] %v778
  %1117 = vst [vmem:[%s3 + $0x450] sm:$0xff] %v811
  %1118 = vst [vmem:[%s3 + $0x458] sm:$0xff] %v844
  %1119 = vst [vmem:[%s3 + $0x460] sm:$0xff] %v877
  %1120 = vst [vmem:[%s3 + $0x468] sm:$0xff] %v910
  %1121 = vst [vmem:[%s3 + $0x470] sm:$0xff] %v943
  %1122 = vst [vmem:[%s3 + $0x478] sm:$0xff] %v976
  // Predicated region
  $region14: #{auto_encoder_forward.8} parent=0 // pred_check
    _
  $region15: #{auto_encoder_forward.8} parent=0 // pred_check_branch
    %1124 = sbr.rel (0) target = $region17
  $region16: #{auto_encoder_forward.8} parent=0 // pred_region
    _
  $region17: #{auto_encoder_forward.8} parent=0 // pred_fallthru
    _
  // Predicated region
  $region18: #{auto_encoder_forward.8} parent=0 // pred_check
    _
  $region19: #{auto_encoder_forward.8} parent=0 // pred_check_branch
    %1126 = sbr.rel (0) target = $region21
  $region20: #{auto_encoder_forward.8} parent=0 // pred_region
    _
  $region21: #{auto_encoder_forward.8} parent=0 // pred_fallthru
    _

// kernel: auto_encoder_forward.9
$region0: #{auto_encoder_forward.9}
  #allocation0 [shape = 'u32[]', space=smem, size = 0x4, offset = 0x4, fixed_abs, tag = 'smem constant byte address 0x4 - core index']
  #allocation1 [shape = 'u32[72,128]{1,0:T(1,128)}', space=vmem, size = 0x9000, scoped, tag = 'internal scratch']
  %s0 = inlined_call_operand.vmem [shape: f32[450,128], index: 0, kind: input, shape index: {}]
  %s1 = inlined_call_operand.vmem [shape: f32[1,128], index: 1, kind: input, shape index: {}]
  %s2 = inlined_call_operand.vmem [shape: bf16[128,192], index: 2, kind: input, shape index: {}]
  %s3 = inlined_call_operand.vmem [shape: f32[450,192], index: 3, kind: output, shape index: {}]
  %s4 = sld [smem:[#allocation0]]
  $region22: #{auto_encoder_forward.9} parent=0
    _
  %s6 = ssub.s32 1, %s4
  %s7 = scalar_select 0, %s6, %s4
  // Predicated region
  $region2: #{auto_encoder_forward.9} parent=0 // pred_check
    _
  $region3: #{auto_encoder_forward.9} parent=0 // pred_check_branch
    %9 = sbr.rel (0) target = $region5
  $region4: #{auto_encoder_forward.9} parent=0 // pred_region
    _
  $region5: #{auto_encoder_forward.9} parent=0 // pred_fallthru
    _
  // Predicated region
  $region6: #{auto_encoder_forward.9} parent=0 // pred_check
    _
  $region7: #{auto_encoder_forward.9} parent=0 // pred_check_branch
    %11 = sbr.rel (0) target = $region9
  $region8: #{auto_encoder_forward.9} parent=0 // pred_region
    _
  $region9: #{auto_encoder_forward.9} parent=0 // pred_fallthru
    _
  // Predicated region
  $region10: #{auto_encoder_forward.9} parent=0 // pred_check
    _
  $region11: #{auto_encoder_forward.9} parent=0 // pred_check_branch
    %13 = sbr.rel (0) target = $region13
  $region12: #{auto_encoder_forward.9} parent=0 // pred_region
    _
  $region13: #{auto_encoder_forward.9} parent=0 // pred_fallthru
    _
  %v14 = vld [vmem:[%s0] sm:$0xff]
  %v15 = vld [vmem:[%s0 + $0x8] sm:$0xff]
  %v16 = vld [vmem:[%s0 + $0x10] sm:$0xff]
  %v17 = vld [vmem:[%s0 + $0x18] sm:$0xff]
  %v18 = vld [vmem:[%s0 + $0x20] sm:$0xff]
  %v19 = vld [vmem:[%s0 + $0x28] sm:$0xff]
  %v20 = vld [vmem:[%s0 + $0x30] sm:$0xff]
  %v21 = vld [vmem:[%s0 + $0x38] sm:$0xff]
  %v22 = vld [vmem:[%s0 + $0x40] sm:$0xff]
  %v23 = vld [vmem:[%s0 + $0x48] sm:$0xff]
  %v24 = vld [vmem:[%s0 + $0x50] sm:$0xff]
  %v25 = vld [vmem:[%s0 + $0x58] sm:$0xff]
  %v26 = vld [vmem:[%s0 + $0x60] sm:$0xff]
  %v27 = vld [vmem:[%s0 + $0x68] sm:$0xff]
  %v28 = vld [vmem:[%s0 + $0x70] sm:$0xff]
  %v29 = vld [vmem:[%s0 + $0x78] sm:$0xff]
  %v30 = vld [vmem:[%s0 + $0x80] sm:$0xff]
  %v31 = vld [vmem:[%s0 + $0x88] sm:$0xff]
  %v32 = vld [vmem:[%s0 + $0x90] sm:$0xff]
  %v33 = vld [vmem:[%s0 + $0x98] sm:$0xff]
  %v34 = vld [vmem:[%s0 + $0xa0] sm:$0xff]
  %v35 = vld [vmem:[%s0 + $0xa8] sm:$0xff]
  %v36 = vld [vmem:[%s0 + $0xb0] sm:$0xff]
  %v37 = vld [vmem:[%s0 + $0xb8] sm:$0xff]
  %v38 = vld [vmem:[%s0 + $0xc0] sm:$0xff]
  %v39 = vld [vmem:[%s0 + $0xc8] sm:$0xff]
  %v40 = vld [vmem:[%s0 + $0xd0] sm:$0xff]
  %v41 = vld [vmem:[%s0 + $0xd8] sm:$0xff]
  %v42 = vld [vmem:[%s0 + $0xe0] sm:$0xff]
  %v43 = vld [vmem:[%s0 + $0xe8] sm:$0xff]
  %v44 = vld [vmem:[%s0 + $0xf0] sm:$0xff]
  %v45 = vld [vmem:[%s0 + $0xf8] sm:$0xff]
  %v46 = vld [vmem:[%s0 + $0x100] sm:$0xff]
  %v47 = vld [vmem:[%s0 + $0x108] sm:$0xff]
  %v48 = vld [vmem:[%s0 + $0x110] sm:$0xff]
  %v49 = vld [vmem:[%s0 + $0x118] sm:$0xff]
  %v50 = vld [vmem:[%s0 + $0x120] sm:$0xff]
  %v51 = vld [vmem:[%s0 + $0x128] sm:$0xff]
  %v52 = vld [vmem:[%s0 + $0x130] sm:$0xff]
  %v53 = vld [vmem:[%s0 + $0x138] sm:$0xff]
  %v54 = vld [vmem:[%s0 + $0x140] sm:$0xff]
  %v55 = vld [vmem:[%s0 + $0x148] sm:$0xff]
  %v56 = vld [vmem:[%s0 + $0x150] sm:$0xff]
  %v57 = vld [vmem:[%s0 + $0x158] sm:$0xff]
  %v58 = vld [vmem:[%s0 + $0x160] sm:$0xff]
  %v59 = vld [vmem:[%s0 + $0x168] sm:$0xff]
  %v60 = vld [vmem:[%s0 + $0x170] sm:$0xff]
  %v61 = vld [vmem:[%s0 + $0x178] sm:$0xff]
  %v62 = vld [vmem:[%s0 + $0x180] sm:$0xff]
  %v63 = vld [vmem:[%s0 + $0x188] sm:$0xff]
  %v64 = vld [vmem:[%s0 + $0x190] sm:$0xff]
  %v65 = vld [vmem:[%s0 + $0x198] sm:$0xff]
  %v66 = vld [vmem:[%s0 + $0x1a0] sm:$0xff]
  %v67 = vld [vmem:[%s0 + $0x1a8] sm:$0xff]
  %v68 = vld [vmem:[%s0 + $0x1b0] sm:$0xff]
  %v69 = vld [vmem:[%s0 + $0x1b8] sm:$0xff]
  %v70 = vld [vmem:[%s0 + $0x1c0] sm:$0x3]
  %v71 = vld [vmem:[%s1] sm:$0x1]
  %v73 = vperm.slane %v71, 0
  %v75 = vadd.f32 %v14, %v73
  %v76 = vadd.f32 %v15, %v73
  %v77 = vadd.f32 %v16, %v73
  %v78 = vadd.f32 %v17, %v73
  %v79 = vadd.f32 %v18, %v73
  %v80 = vadd.f32 %v19, %v73
  %v81 = vadd.f32 %v20, %v73
  %v82 = vadd.f32 %v21, %v73
  %v83 = vadd.f32 %v22, %v73
  %v84 = vadd.f32 %v23, %v73
  %v85 = vadd.f32 %v24, %v73
  %v86 = vadd.f32 %v25, %v73
  %v87 = vadd.f32 %v26, %v73
  %v88 = vadd.f32 %v27, %v73
  %v89 = vadd.f32 %v28, %v73
  %v90 = vadd.f32 %v29, %v73
  %v91 = vadd.f32 %v30, %v73
  %v92 = vadd.f32 %v31, %v73
  %v93 = vadd.f32 %v32, %v73
  %v94 = vadd.f32 %v33, %v73
  %v95 = vadd.f32 %v34, %v73
  %v96 = vadd.f32 %v35, %v73
  %v97 = vadd.f32 %v36, %v73
  %v98 = vadd.f32 %v37, %v73
  %v99 = vadd.f32 %v38, %v73
  %v100 = vadd.f32 %v39, %v73
  %v101 = vadd.f32 %v40, %v73
  %v102 = vadd.f32 %v41, %v73
  %v103 = vadd.f32 %v42, %v73
  %v104 = vadd.f32 %v43, %v73
  %v105 = vadd.f32 %v44, %v73
  %v106 = vadd.f32 %v45, %v73
  %v107 = vadd.f32 %v46, %v73
  %v108 = vadd.f32 %v47, %v73
  %v109 = vadd.f32 %v48, %v73
  %v110 = vadd.f32 %v49, %v73
  %v111 = vadd.f32 %v50, %v73
  %v112 = vadd.f32 %v51, %v73
  %v113 = vadd.f32 %v52, %v73
  %v114 = vadd.f32 %v53, %v73
  %v115 = vadd.f32 %v54, %v73
  %v116 = vadd.f32 %v55, %v73
  %v117 = vadd.f32 %v56, %v73
  %v118 = vadd.f32 %v57, %v73
  %v119 = vadd.f32 %v58, %v73
  %v120 = vadd.f32 %v59, %v73
  %v121 = vadd.f32 %v60, %v73
  %v122 = vadd.f32 %v61, %v73
  %v123 = vadd.f32 %v62, %v73
  %v124 = vadd.f32 %v63, %v73
  %v125 = vadd.f32 %v64, %v73
  %v126 = vadd.f32 %v65, %v73
  %v127 = vadd.f32 %v66, %v73
  %v128 = vadd.f32 %v67, %v73
  %v129 = vadd.f32 %v68, %v73
  %v130 = vadd.f32 %v69, %v73
  %v131 = vadd.f32 %v70, %v73
  %v132 = vmax.f32 %v75, 0.0
  %v133 = vmax.f32 %v76, 0.0
  %v134 = vmax.f32 %v77, 0.0
  %v135 = vmax.f32 %v78, 0.0
  %v136 = vmax.f32 %v79, 0.0
  %v137 = vmax.f32 %v80, 0.0
  %v138 = vmax.f32 %v81, 0.0
  %v139 = vmax.f32 %v82, 0.0
  %v140 = vmax.f32 %v83, 0.0
  %v141 = vmax.f32 %v84, 0.0
  %v142 = vmax.f32 %v85, 0.0
  %v143 = vmax.f32 %v86, 0.0
  %v144 = vmax.f32 %v87, 0.0
  %v145 = vmax.f32 %v88, 0.0
  %v146 = vmax.f32 %v89, 0.0
  %v147 = vmax.f32 %v90, 0.0
  %v148 = vmax.f32 %v91, 0.0
  %v149 = vmax.f32 %v92, 0.0
  %v150 = vmax.f32 %v93, 0.0
  %v151 = vmax.f32 %v94, 0.0
  %v152 = vmax.f32 %v95, 0.0
  %v153 = vmax.f32 %v96, 0.0
  %v154 = vmax.f32 %v97, 0.0
  %v155 = vmax.f32 %v98, 0.0
  %v156 = vmax.f32 %v99, 0.0
  %v157 = vmax.f32 %v100, 0.0
  %v158 = vmax.f32 %v101, 0.0
  %v159 = vmax.f32 %v102, 0.0
  %v160 = vmax.f32 %v103, 0.0
  %v161 = vmax.f32 %v104, 0.0
  %v162 = vmax.f32 %v105, 0.0
  %v163 = vmax.f32 %v106, 0.0
  %v164 = vmax.f32 %v107, 0.0
  %v165 = vmax.f32 %v108, 0.0
  %v166 = vmax.f32 %v109, 0.0
  %v167 = vmax.f32 %v110, 0.0
  %v168 = vmax.f32 %v111, 0.0
  %v169 = vmax.f32 %v112, 0.0
  %v170 = vmax.f32 %v113, 0.0
  %v171 = vmax.f32 %v114, 0.0
  %v172 = vmax.f32 %v115, 0.0
  %v173 = vmax.f32 %v116, 0.0
  %v174 = vmax.f32 %v117, 0.0
  %v175 = vmax.f32 %v118, 0.0
  %v176 = vmax.f32 %v119, 0.0
  %v177 = vmax.f32 %v120, 0.0
  %v178 = vmax.f32 %v121, 0.0
  %v179 = vmax.f32 %v122, 0.0
  %v180 = vmax.f32 %v123, 0.0
  %v181 = vmax.f32 %v124, 0.0
  %v182 = vmax.f32 %v125, 0.0
  %v183 = vmax.f32 %v126, 0.0
  %v184 = vmax.f32 %v127, 0.0
  %v185 = vmax.f32 %v128, 0.0
  %v186 = vmax.f32 %v129, 0.0
  %v187 = vmax.f32 %v130, 0.0
  %v188 = vmax.f32 %v131, 0.0
  %v189 = vpack.c.bf16 %v133, %v132
  %v190 = vpack.c.bf16 %v135, %v134
  %v191 = vpack.c.bf16 %v137, %v136
  %v192 = vpack.c.bf16 %v139, %v138
  %v193 = vpack.c.bf16 %v141, %v140
  %v194 = vpack.c.bf16 %v143, %v142
  %v195 = vpack.c.bf16 %v145, %v144
  %v196 = vpack.c.bf16 %v147, %v146
  %v197 = vpack.c.bf16 %v149, %v148
  %v198 = vpack.c.bf16 %v151, %v150
  %v199 = vpack.c.bf16 %v153, %v152
  %v200 = vpack.c.bf16 %v155, %v154
  %v201 = vpack.c.bf16 %v157, %v156
  %v202 = vpack.c.bf16 %v159, %v158
  %v203 = vpack.c.bf16 %v161, %v160
  %v204 = vpack.c.bf16 %v163, %v162
  %v205 = vpack.c.bf16 %v165, %v164
  %v206 = vpack.c.bf16 %v167, %v166
  %v207 = vpack.c.bf16 %v169, %v168
  %v208 = vpack.c.bf16 %v171, %v170
  %v209 = vpack.c.bf16 %v173, %v172
  %v210 = vpack.c.bf16 %v175, %v174
  %v211 = vpack.c.bf16 %v177, %v176
  %v212 = vpack.c.bf16 %v179, %v178
  %v213 = vpack.c.bf16 %v181, %v180
  %v214 = vpack.c.bf16 %v183, %v182
  %v215 = vpack.c.bf16 %v185, %v184
  %v216 = vpack.c.bf16 %v187, %v186
  %v217 = vpack.c.bf16 %v188, %v188
  %v218 = vld [vmem:[%s2] sm:$0xff]
  %v219 = vld [vmem:[%s2 + $0x8] sm:$0xff]
  %v220 = vld [vmem:[%s2 + $0x10] sm:$0xff]
  %v221 = vld [vmem:[%s2 + $0x18] sm:$0xff]
  %v222 = vld [vmem:[%s2 + $0x20] sm:$0xff]
  %v223 = vld [vmem:[%s2 + $0x28] sm:$0xff]
  %v224 = vld [vmem:[%s2 + $0x30] sm:$0xff]
  %v225 = vld [vmem:[%s2 + $0x38] sm:$0xff]
  %v226 = vld [vmem:[%s2 + $0x40] sm:$0xff]
  %v227 = vld [vmem:[%s2 + $0x48] sm:$0xff]
  %v228 = vld [vmem:[%s2 + $0x50] sm:$0xff]
  %v229 = vld [vmem:[%s2 + $0x58] sm:$0xff]
  %v230 = vld [vmem:[%s2 + $0x60] sm:$0xff]
  %v231 = vld [vmem:[%s2 + $0x68] sm:$0xff]
  %v232 = vld [vmem:[%s2 + $0x70] sm:$0xff]
  %v233 = vld [vmem:[%s2 + $0x78] sm:$0xff]
  %v250 = vunpack.c.l.b16 %v218
  %v251 = vunpack.c.h.b16 %v218
  %v252 = vunpack.c.l.b16 %v219
  %v253 = vunpack.c.h.b16 %v219
  %v254 = vunpack.c.l.b16 %v220
  %v255 = vunpack.c.h.b16 %v220
  %v256 = vunpack.c.l.b16 %v221
  %v257 = vunpack.c.h.b16 %v221
  %v258 = vunpack.c.l.b16 %v222
  %v259 = vunpack.c.h.b16 %v222
  %v260 = vunpack.c.l.b16 %v223
  %v261 = vunpack.c.h.b16 %v223
  %v262 = vunpack.c.l.b16 %v224
  %v263 = vunpack.c.h.b16 %v224
  %v264 = vunpack.c.l.b16 %v225
  %v265 = vunpack.c.h.b16 %v225
  %v266 = vunpack.c.l.b16 %v226
  %v267 = vunpack.c.h.b16 %v226
  %v268 = vunpack.c.l.b16 %v227
  %v269 = vunpack.c.h.b16 %v227
  %v270 = vunpack.c.l.b16 %v228
  %v271 = vunpack.c.h.b16 %v228
  %v272 = vunpack.c.l.b16 %v229
  %v273 = vunpack.c.h.b16 %v229
  %v274 = vunpack.c.l.b16 %v230
  %v275 = vunpack.c.h.b16 %v230
  %v276 = vunpack.c.l.b16 %v231
  %v277 = vunpack.c.h.b16 %v231
  %v278 = vunpack.c.l.b16 %v232
  %v279 = vunpack.c.h.b16 %v232
  %v280 = vunpack.c.l.b16 %v233
  %v281 = vunpack.c.h.b16 %v233
  %v282 = vpack.c.b16 %v252, %v250
  %v283 = vpack.c.b16 %v253, %v251
  %v284 = vpack.c.b16 %v256, %v254
  %v285 = vpack.c.b16 %v257, %v255
  %v286 = vpack.c.b16 %v260, %v258
  %v287 = vpack.c.b16 %v261, %v259
  %v288 = vpack.c.b16 %v264, %v262
  %v289 = vpack.c.b16 %v265, %v263
  %v290 = vpack.c.b16 %v268, %v266
  %v291 = vpack.c.b16 %v269, %v267
  %v292 = vpack.c.b16 %v272, %v270
  %v293 = vpack.c.b16 %v273, %v271
  %v294 = vpack.c.b16 %v276, %v274
  %v295 = vpack.c.b16 %v277, %v275
  %v296 = vpack.c.b16 %v280, %v278
  %v297 = vpack.c.b16 %v281, %v279
  %314 = vmatpush.bf16.msra.mxu0 %v296
  %315 = vmatpush.bf16.msra.mxu0 %v294
  %316 = vmatpush.bf16.msra.mxu0 %v292
  %317 = vmatpush.bf16.msra.mxu0 %v290
  %318 = vmatpush.bf16.msra.mxu0 %v288
  %319 = vmatpush.bf16.msra.mxu0 %v286
  %320 = vmatpush.bf16.msra.mxu0 %v284
  %321 = vmatpush.bf16.msra.mxu0 %v282
  %322 = vmatmul.bf16.gmra.mxu0 %v189
  %v323 = vpop.f32.mrf.mxu0
  %v324 = vadd.f32 0.0, %v323
  %v325 = vpop.f32.mrf.mxu0
  %v326 = vadd.f32 0.0, %v325
  %327 = vmatmul.bf16.gmra.mxu0 %v190
  %v328 = vpop.f32.mrf.mxu0
  %v329 = vadd.f32 0.0, %v328
  %v330 = vpop.f32.mrf.mxu0
  %v331 = vadd.f32 0.0, %v330
  %332 = vmatmul.bf16.gmra.mxu0 %v191
  %v333 = vpop.f32.mrf.mxu0
  %v334 = vadd.f32 0.0, %v333
  %v335 = vpop.f32.mrf.mxu0
  %v336 = vadd.f32 0.0, %v335
  %337 = vmatmul.bf16.gmra.mxu0 %v192
  %v338 = vpop.f32.mrf.mxu0
  %v339 = vadd.f32 0.0, %v338
  %v340 = vpop.f32.mrf.mxu0
  %v341 = vadd.f32 0.0, %v340
  %342 = vmatmul.bf16.gmra.mxu0 %v193
  %v343 = vpop.f32.mrf.mxu0
  %v344 = vadd.f32 0.0, %v343
  %v345 = vpop.f32.mrf.mxu0
  %v346 = vadd.f32 0.0, %v345
  %347 = vmatmul.bf16.gmra.mxu0 %v194
  %v348 = vpop.f32.mrf.mxu0
  %v349 = vadd.f32 0.0, %v348
  %v350 = vpop.f32.mrf.mxu0
  %v351 = vadd.f32 0.0, %v350
  %352 = vmatmul.bf16.gmra.mxu0 %v195
  %v353 = vpop.f32.mrf.mxu0
  %v354 = vadd.f32 0.0, %v353
  %v355 = vpop.f32.mrf.mxu0
  %v356 = vadd.f32 0.0, %v355
  %357 = vmatmul.bf16.gmra.mxu0 %v196
  %v358 = vpop.f32.mrf.mxu0
  %v359 = vadd.f32 0.0, %v358
  %v360 = vpop.f32.mrf.mxu0
  %v361 = vadd.f32 0.0, %v360
  %362 = vmatmul.bf16.gmra.mxu0 %v197
  %v363 = vpop.f32.mrf.mxu0
  %v364 = vadd.f32 0.0, %v363
  %v365 = vpop.f32.mrf.mxu0
  %v366 = vadd.f32 0.0, %v365
  %367 = vmatmul.bf16.gmra.mxu0 %v198
  %v368 = vpop.f32.mrf.mxu0
  %v369 = vadd.f32 0.0, %v368
  %v370 = vpop.f32.mrf.mxu0
  %v371 = vadd.f32 0.0, %v370
  %372 = vmatmul.bf16.gmra.mxu0 %v199
  %v373 = vpop.f32.mrf.mxu0
  %v374 = vadd.f32 0.0, %v373
  %v375 = vpop.f32.mrf.mxu0
  %v376 = vadd.f32 0.0, %v375
  %377 = vmatmul.bf16.gmra.mxu0 %v200
  %v378 = vpop.f32.mrf.mxu0
  %v379 = vadd.f32 0.0, %v378
  %v380 = vpop.f32.mrf.mxu0
  %v381 = vadd.f32 0.0, %v380
  %382 = vmatmul.bf16.gmra.mxu0 %v201
  %v383 = vpop.f32.mrf.mxu0
  %v384 = vadd.f32 0.0, %v383
  %v385 = vpop.f32.mrf.mxu0
  %v386 = vadd.f32 0.0, %v385
  %387 = vmatmul.bf16.gmra.mxu0 %v202
  %v388 = vpop.f32.mrf.mxu0
  %v389 = vadd.f32 0.0, %v388
  %v390 = vpop.f32.mrf.mxu0
  %v391 = vadd.f32 0.0, %v390
  %392 = vmatmul.bf16.gmra.mxu0 %v203
  %v393 = vpop.f32.mrf.mxu0
  %v394 = vadd.f32 0.0, %v393
  %v395 = vpop.f32.mrf.mxu0
  %v396 = vadd.f32 0.0, %v395
  %397 = vmatmul.bf16.gmra.mxu0 %v204
  %v398 = vpop.f32.mrf.mxu0
  %v399 = vadd.f32 0.0, %v398
  %v400 = vpop.f32.mrf.mxu0
  %v401 = vadd.f32 0.0, %v400
  %402 = vmatmul.bf16.gmra.mxu0 %v205
  %v403 = vpop.f32.mrf.mxu0
  %v404 = vadd.f32 0.0, %v403
  %v405 = vpop.f32.mrf.mxu0
  %v406 = vadd.f32 0.0, %v405
  %407 = vmatmul.bf16.gmra.mxu0 %v206
  %v408 = vpop.f32.mrf.mxu0
  %v409 = vadd.f32 0.0, %v408
  %v410 = vpop.f32.mrf.mxu0
  %v411 = vadd.f32 0.0, %v410
  %412 = vmatmul.bf16.gmra.mxu0 %v207
  %v413 = vpop.f32.mrf.mxu0
  %v414 = vadd.f32 0.0, %v413
  %v415 = vpop.f32.mrf.mxu0
  %v416 = vadd.f32 0.0, %v415
  %417 = vmatmul.bf16.gmra.mxu0 %v208
  %v418 = vpop.f32.mrf.mxu0
  %v419 = vadd.f32 0.0, %v418
  %v420 = vpop.f32.mrf.mxu0
  %v421 = vadd.f32 0.0, %v420
  %422 = vmatmul.bf16.gmra.mxu0 %v209
  %v423 = vpop.f32.mrf.mxu0
  %v424 = vadd.f32 0.0, %v423
  %v425 = vpop.f32.mrf.mxu0
  %v426 = vadd.f32 0.0, %v425
  %427 = vmatmul.bf16.gmra.mxu0 %v210
  %v428 = vpop.f32.mrf.mxu0
  %v429 = vadd.f32 0.0, %v428
  %v430 = vpop.f32.mrf.mxu0
  %v431 = vadd.f32 0.0, %v430
  %432 = vmatmul.bf16.gmra.mxu0 %v211
  %v433 = vpop.f32.mrf.mxu0
  %v434 = vadd.f32 0.0, %v433
  %v435 = vpop.f32.mrf.mxu0
  %v436 = vadd.f32 0.0, %v435
  %437 = vmatmul.bf16.gmra.mxu0 %v212
  %v438 = vpop.f32.mrf.mxu0
  %v439 = vadd.f32 0.0, %v438
  %v440 = vpop.f32.mrf.mxu0
  %v441 = vadd.f32 0.0, %v440
  %442 = vmatmul.bf16.gmra.mxu0 %v213
  %v443 = vpop.f32.mrf.mxu0
  %v444 = vadd.f32 0.0, %v443
  %v445 = vpop.f32.mrf.mxu0
  %v446 = vadd.f32 0.0, %v445
  %447 = vmatmul.bf16.gmra.mxu0 %v214
  %v448 = vpop.f32.mrf.mxu0
  %v449 = vadd.f32 0.0, %v448
  %v450 = vpop.f32.mrf.mxu0
  %v451 = vadd.f32 0.0, %v450
  %452 = vmatmul.bf16.gmra.mxu0 %v215
  %v453 = vpop.f32.mrf.mxu0
  %v454 = vadd.f32 0.0, %v453
  %v455 = vpop.f32.mrf.mxu0
  %v456 = vadd.f32 0.0, %v455
  %457 = vmatmul.bf16.gmra.mxu0 %v216
  %v458 = vpop.f32.mrf.mxu0
  %v459 = vadd.f32 0.0, %v458
  %v460 = vpop.f32.mrf.mxu0
  %v461 = vadd.f32 0.0, %v460
  %462 = vmatmul.bf16.gmra.mxu0 %v217
  %v463 = vpop.f32.mrf.mxu0
  %v464 = vadd.f32 0.0, %v463
  %v465 = vpop.f32.mrf.mxu0
  %466 = vdwg.mxu0
  %467 = vmatpush.bf16.msra.mxu0 %v297
  %468 = vmatpush.bf16.msra.mxu0 %v295
  %469 = vmatpush.bf16.msra.mxu0 %v293
  %470 = vmatpush.bf16.msra.mxu0 %v291
  %471 = vmatpush.bf16.msra.mxu0 %v289
  %472 = vmatpush.bf16.msra.mxu0 %v287
  %473 = vmatpush.bf16.msra.mxu0 %v285
  %474 = vmatpush.bf16.msra.mxu0 %v283
  %475 = vmatmul.bf16.gmra.mxu0 %v189
  %v476 = vpop.f32.mrf.mxu0
  %v477 = vadd.f32 0.0, %v476
  %v478 = vpop.f32.mrf.mxu0
  %v479 = vadd.f32 0.0, %v478
  %480 = vmatmul.bf16.gmra.mxu0 %v190
  %v481 = vpop.f32.mrf.mxu0
  %v482 = vadd.f32 0.0, %v481
  %v483 = vpop.f32.mrf.mxu0
  %v484 = vadd.f32 0.0, %v483
  %485 = vmatmul.bf16.gmra.mxu0 %v191
  %v486 = vpop.f32.mrf.mxu0
  %v487 = vadd.f32 0.0, %v486
  %v488 = vpop.f32.mrf.mxu0
  %v489 = vadd.f32 0.0, %v488
  %490 = vmatmul.bf16.gmra.mxu0 %v192
  %v491 = vpop.f32.mrf.mxu0
  %v492 = vadd.f32 0.0, %v491
  %v493 = vpop.f32.mrf.mxu0
  %v494 = vadd.f32 0.0, %v493
  %495 = vmatmul.bf16.gmra.mxu0 %v193
  %v496 = vpop.f32.mrf.mxu0
  %v497 = vadd.f32 0.0, %v496
  %v498 = vpop.f32.mrf.mxu0
  %v499 = vadd.f32 0.0, %v498
  %500 = vmatmul.bf16.gmra.mxu0 %v194
  %v501 = vpop.f32.mrf.mxu0
  %v502 = vadd.f32 0.0, %v501
  %v503 = vpop.f32.mrf.mxu0
  %v504 = vadd.f32 0.0, %v503
  %505 = vmatmul.bf16.gmra.mxu0 %v195
  %v506 = vpop.f32.mrf.mxu0
  %v507 = vadd.f32 0.0, %v506
  %v508 = vpop.f32.mrf.mxu0
  %v509 = vadd.f32 0.0, %v508
  %510 = vmatmul.bf16.gmra.mxu0 %v196
  %v511 = vpop.f32.mrf.mxu0
  %v512 = vadd.f32 0.0, %v511
  %v513 = vpop.f32.mrf.mxu0
  %v514 = vadd.f32 0.0, %v513
  %515 = vmatmul.bf16.gmra.mxu0 %v197
  %v516 = vpop.f32.mrf.mxu0
  %v517 = vadd.f32 0.0, %v516
  %v518 = vpop.f32.mrf.mxu0
  %v519 = vadd.f32 0.0, %v518
  %520 = vmatmul.bf16.gmra.mxu0 %v198
  %v521 = vpop.f32.mrf.mxu0
  %v522 = vadd.f32 0.0, %v521
  %v523 = vpop.f32.mrf.mxu0
  %v524 = vadd.f32 0.0, %v523
  %525 = vmatmul.bf16.gmra.mxu0 %v199
  %v526 = vpop.f32.mrf.mxu0
  %v527 = vadd.f32 0.0, %v526
  %v528 = vpop.f32.mrf.mxu0
  %v529 = vadd.f32 0.0, %v528
  %530 = vmatmul.bf16.gmra.mxu0 %v200
  %v531 = vpop.f32.mrf.mxu0
  %v532 = vadd.f32 0.0, %v531
  %v533 = vpop.f32.mrf.mxu0
  %v534 = vadd.f32 0.0, %v533
  %535 = vmatmul.bf16.gmra.mxu0 %v201
  %v536 = vpop.f32.mrf.mxu0
  %v537 = vadd.f32 0.0, %v536
  %v538 = vpop.f32.mrf.mxu0
  %v539 = vadd.f32 0.0, %v538
  %540 = vmatmul.bf16.gmra.mxu0 %v202
  %v541 = vpop.f32.mrf.mxu0
  %v542 = vadd.f32 0.0, %v541
  %v543 = vpop.f32.mrf.mxu0
  %v544 = vadd.f32 0.0, %v543
  %545 = vmatmul.bf16.gmra.mxu0 %v203
  %v546 = vpop.f32.mrf.mxu0
  %v547 = vadd.f32 0.0, %v546
  %v548 = vpop.f32.mrf.mxu0
  %v549 = vadd.f32 0.0, %v548
  %550 = vmatmul.bf16.gmra.mxu0 %v204
  %v551 = vpop.f32.mrf.mxu0
  %v552 = vadd.f32 0.0, %v551
  %v553 = vpop.f32.mrf.mxu0
  %v554 = vadd.f32 0.0, %v553
  %555 = vmatmul.bf16.gmra.mxu0 %v205
  %v556 = vpop.f32.mrf.mxu0
  %v557 = vadd.f32 0.0, %v556
  %v558 = vpop.f32.mrf.mxu0
  %v559 = vadd.f32 0.0, %v558
  %560 = vmatmul.bf16.gmra.mxu0 %v206
  %v561 = vpop.f32.mrf.mxu0
  %v562 = vadd.f32 0.0, %v561
  %v563 = vpop.f32.mrf.mxu0
  %v564 = vadd.f32 0.0, %v563
  %565 = vmatmul.bf16.gmra.mxu0 %v207
  %v566 = vpop.f32.mrf.mxu0
  %v567 = vadd.f32 0.0, %v566
  %v568 = vpop.f32.mrf.mxu0
  %v569 = vadd.f32 0.0, %v568
  %570 = vmatmul.bf16.gmra.mxu0 %v208
  %v571 = vpop.f32.mrf.mxu0
  %v572 = vadd.f32 0.0, %v571
  %v573 = vpop.f32.mrf.mxu0
  %v574 = vadd.f32 0.0, %v573
  %575 = vmatmul.bf16.gmra.mxu0 %v209
  %v576 = vpop.f32.mrf.mxu0
  %v577 = vadd.f32 0.0, %v576
  %v578 = vpop.f32.mrf.mxu0
  %v579 = vadd.f32 0.0, %v578
  %580 = vmatmul.bf16.gmra.mxu0 %v210
  %v581 = vpop.f32.mrf.mxu0
  %v582 = vadd.f32 0.0, %v581
  %v583 = vpop.f32.mrf.mxu0
  %v584 = vadd.f32 0.0, %v583
  %585 = vmatmul.bf16.gmra.mxu0 %v211
  %v586 = vpop.f32.mrf.mxu0
  %v587 = vadd.f32 0.0, %v586
  %v588 = vpop.f32.mrf.mxu0
  %v589 = vadd.f32 0.0, %v588
  %590 = vmatmul.bf16.gmra.mxu0 %v212
  %v591 = vpop.f32.mrf.mxu0
  %v592 = vadd.f32 0.0, %v591
  %v593 = vpop.f32.mrf.mxu0
  %v594 = vadd.f32 0.0, %v593
  %595 = vmatmul.bf16.gmra.mxu0 %v213
  %v596 = vpop.f32.mrf.mxu0
  %v597 = vadd.f32 0.0, %v596
  %v598 = vpop.f32.mrf.mxu0
  %v599 = vadd.f32 0.0, %v598
  %600 = vmatmul.bf16.gmra.mxu0 %v214
  %v601 = vpop.f32.mrf.mxu0
  %v602 = vadd.f32 0.0, %v601
  %v603 = vpop.f32.mrf.mxu0
  %v604 = vadd.f32 0.0, %v603
  %605 = vmatmul.bf16.gmra.mxu0 %v215
  %v606 = vpop.f32.mrf.mxu0
  %v607 = vadd.f32 0.0, %v606
  %v608 = vpop.f32.mrf.mxu0
  %v609 = vadd.f32 0.0, %v608
  %610 = vmatmul.bf16.gmra.mxu0 %v216
  %v611 = vpop.f32.mrf.mxu0
  %v612 = vadd.f32 0.0, %v611
  %v613 = vpop.f32.mrf.mxu0
  %v614 = vadd.f32 0.0, %v613
  %615 = vmatmul.bf16.gmra.mxu0 %v217
  %v616 = vpop.f32.mrf.mxu0
  %v617 = vadd.f32 0.0, %v616
  %v618 = vpop.f32.mrf.mxu0
  %619 = vdwg.mxu0
  %620 = vst [vmem:[%s3] sm:$0xff] %v324
  %vm621 = vcmask 523264
  %622 = vst.msk [vmem:[%s3 + $0x8] sm:$0xff] %vm621, %v477
  %623 = vst [vmem:[%s3 + $0x10] sm:$0xff] %v326
  %624 = vst.msk [vmem:[%s3 + $0x18] sm:$0xff] %vm621, %v479
  %625 = vst [vmem:[%s3 + $0x20] sm:$0xff] %v329
  %626 = vst.msk [vmem:[%s3 + $0x28] sm:$0xff] %vm621, %v482
  %627 = vst [vmem:[%s3 + $0x30] sm:$0xff] %v331
  %628 = vst.msk [vmem:[%s3 + $0x38] sm:$0xff] %vm621, %v484
  %629 = vst [vmem:[%s3 + $0x40] sm:$0xff] %v334
  %630 = vst.msk [vmem:[%s3 + $0x48] sm:$0xff] %vm621, %v487
  %631 = vst [vmem:[%s3 + $0x50] sm:$0xff] %v336
  %632 = vst.msk [vmem:[%s3 + $0x58] sm:$0xff] %vm621, %v489
  %633 = vst [vmem:[%s3 + $0x60] sm:$0xff] %v339
  %634 = vst.msk [vmem:[%s3 + $0x68] sm:$0xff] %vm621, %v492
  %635 = vst [vmem:[%s3 + $0x70] sm:$0xff] %v341
  %636 = vst.msk [vmem:[%s3 + $0x78] sm:$0xff] %vm621, %v494
  %637 = vst [vmem:[%s3 + $0x80] sm:$0xff] %v344
  %638 = vst.msk [vmem:[%s3 + $0x88] sm:$0xff] %vm621, %v497
  %639 = vst [vmem:[%s3 + $0x90] sm:$0xff] %v346
  %640 = vst.msk [vmem:[%s3 + $0x98] sm:$0xff] %vm621, %v499
  %641 = vst [vmem:[%s3 + $0xa0] sm:$0xff] %v349
  %642 = vst.msk [vmem:[%s3 + $0xa8] sm:$0xff] %vm621, %v502
  %643 = vst [vmem:[%s3 + $0xb0] sm:$0xff] %v351
  %644 = vst.msk [vmem:[%s3 + $0xb8] sm:$0xff] %vm621, %v504
  %645 = vst [vmem:[%s3 + $0xc0] sm:$0xff] %v354
  %646 = vst.msk [vmem:[%s3 + $0xc8] sm:$0xff] %vm621, %v507
  %647 = vst [vmem:[%s3 + $0xd0] sm:$0xff] %v356
  %648 = vst.msk [vmem:[%s3 + $0xd8] sm:$0xff] %vm621, %v509
  %649 = vst [vmem:[%s3 + $0xe0] sm:$0xff] %v359
  %650 = vst.msk [vmem:[%s3 + $0xe8] sm:$0xff] %vm621, %v512
  %651 = vst [vmem:[%s3 + $0xf0] sm:$0xff] %v361
  %652 = vst.msk [vmem:[%s3 + $0xf8] sm:$0xff] %vm621, %v514
  %653 = vst [vmem:[%s3 + $0x100] sm:$0xff] %v364
  %654 = vst.msk [vmem:[%s3 + $0x108] sm:$0xff] %vm621, %v517
  %655 = vst [vmem:[%s3 + $0x110] sm:$0xff] %v366
  %656 = vst.msk [vmem:[%s3 + $0x118] sm:$0xff] %vm621, %v519
  %657 = vst [vmem:[%s3 + $0x120] sm:$0xff] %v369
  %658 = vst.msk [vmem:[%s3 + $0x128] sm:$0xff] %vm621, %v522
  %659 = vst [vmem:[%s3 + $0x130] sm:$0xff] %v371
  %660 = vst.msk [vmem:[%s3 + $0x138] sm:$0xff] %vm621, %v524
  %661 = vst [vmem:[%s3 + $0x140] sm:$0xff] %v374
  %662 = vst.msk [vmem:[%s3 + $0x148] sm:$0xff] %vm621, %v527
  %663 = vst [vmem:[%s3 + $0x150] sm:$0xff] %v376
  %664 = vst.msk [vmem:[%s3 + $0x158] sm:$0xff] %vm621, %v529
  %665 = vst [vmem:[%s3 + $0x160] sm:$0xff] %v379
  %666 = vst.msk [vmem:[%s3 + $0x168] sm:$0xff] %vm621, %v532
  %667 = vst [vmem:[%s3 + $0x170] sm:$0xff] %v381
  %668 = vst.msk [vmem:[%s3 + $0x178] sm:$0xff] %vm621, %v534
  %669 = vst [vmem:[%s3 + $0x180] sm:$0xff] %v384
  %670 = vst.msk [vmem:[%s3 + $0x188] sm:$0xff] %vm621, %v537
  %671 = vst [vmem:[%s3 + $0x190] sm:$0xff] %v386
  %672 = vst.msk [vmem:[%s3 + $0x198] sm:$0xff] %vm621, %v539
  %673 = vst [vmem:[%s3 + $0x1a0] sm:$0xff] %v389
  %674 = vst.msk [vmem:[%s3 + $0x1a8] sm:$0xff] %vm621, %v542
  %675 = vst [vmem:[%s3 + $0x1b0] sm:$0xff] %v391
  %676 = vst.msk [vmem:[%s3 + $0x1b8] sm:$0xff] %vm621, %v544
  %677 = vst [vmem:[%s3 + $0x1c0] sm:$0xff] %v394
  %678 = vst.msk [vmem:[%s3 + $0x1c8] sm:$0xff] %vm621, %v547
  %679 = vst [vmem:[%s3 + $0x1d0] sm:$0xff] %v396
  %680 = vst.msk [vmem:[%s3 + $0x1d8] sm:$0xff] %vm621, %v549
  %681 = vst [vmem:[%s3 + $0x1e0] sm:$0xff] %v399
  %682 = vst.msk [vmem:[%s3 + $0x1e8] sm:$0xff] %vm621, %v552
  %683 = vst [vmem:[%s3 + $0x1f0] sm:$0xff] %v401
  %684 = vst.msk [vmem:[%s3 + $0x1f8] sm:$0xff] %vm621, %v554
  %685 = vst [vmem:[%s3 + $0x200] sm:$0xff] %v404
  %686 = vst.msk [vmem:[%s3 + $0x208] sm:$0xff] %vm621, %v557
  %687 = vst [vmem:[%s3 + $0x210] sm:$0xff] %v406
  %688 = vst.msk [vmem:[%s3 + $0x218] sm:$0xff] %vm621, %v559
  %689 = vst [vmem:[%s3 + $0x220] sm:$0xff] %v409
  %690 = vst.msk [vmem:[%s3 + $0x228] sm:$0xff] %vm621, %v562
  %691 = vst [vmem:[%s3 + $0x230] sm:$0xff] %v411
  %692 = vst.msk [vmem:[%s3 + $0x238] sm:$0xff] %vm621, %v564
  %693 = vst [vmem:[%s3 + $0x240] sm:$0xff] %v414
  %694 = vst.msk [vmem:[%s3 + $0x248] sm:$0xff] %vm621, %v567
  %695 = vst [vmem:[%s3 + $0x250] sm:$0xff] %v416
  %696 = vst.msk [vmem:[%s3 + $0x258] sm:$0xff] %vm621, %v569
  %697 = vst [vmem:[%s3 + $0x260] sm:$0xff] %v419
  %698 = vst.msk [vmem:[%s3 + $0x268] sm:$0xff] %vm621, %v572
  %699 = vst [vmem:[%s3 + $0x270] sm:$0xff] %v421
  %700 = vst.msk [vmem:[%s3 + $0x278] sm:$0xff] %vm621, %v574
  %701 = vst [vmem:[%s3 + $0x280] sm:$0xff] %v424
  %702 = vst.msk [vmem:[%s3 + $0x288] sm:$0xff] %vm621, %v577
  %703 = vst [vmem:[%s3 + $0x290] sm:$0xff] %v426
  %704 = vst.msk [vmem:[%s3 + $0x298] sm:$0xff] %vm621, %v579
  %705 = vst [vmem:[%s3 + $0x2a0] sm:$0xff] %v429
  %706 = vst.msk [vmem:[%s3 + $0x2a8] sm:$0xff] %vm621, %v582
  %707 = vst [vmem:[%s3 + $0x2b0] sm:$0xff] %v431
  %708 = vst.msk [vmem:[%s3 + $0x2b8] sm:$0xff] %vm621, %v584
  %709 = vst [vmem:[%s3 + $0x2c0] sm:$0xff] %v434
  %710 = vst.msk [vmem:[%s3 + $0x2c8] sm:$0xff] %vm621, %v587
  %711 = vst [vmem:[%s3 + $0x2d0] sm:$0xff] %v436
  %712 = vst.msk [vmem:[%s3 + $0x2d8] sm:$0xff] %vm621, %v589
  %713 = vst [vmem:[%s3 + $0x2e0] sm:$0xff] %v439
  %714 = vst.msk [vmem:[%s3 + $0x2e8] sm:$0xff] %vm621, %v592
  %715 = vst [vmem:[%s3 + $0x2f0] sm:$0xff] %v441
  %716 = vst.msk [vmem:[%s3 + $0x2f8] sm:$0xff] %vm621, %v594
  %717 = vst [vmem:[%s3 + $0x300] sm:$0xff] %v444
  %718 = vst.msk [vmem:[%s3 + $0x308] sm:$0xff] %vm621, %v597
  %719 = vst [vmem:[%s3 + $0x310] sm:$0xff] %v446
  %720 = vst.msk [vmem:[%s3 + $0x318] sm:$0xff] %vm621, %v599
  %721 = vst [vmem:[%s3 + $0x320] sm:$0xff] %v449
  %722 = vst.msk [vmem:[%s3 + $0x328] sm:$0xff] %vm621, %v602
  %723 = vst [vmem:[%s3 + $0x330] sm:$0xff] %v451
  %724 = vst.msk [vmem:[%s3 + $0x338] sm:$0xff] %vm621, %v604
  %725 = vst [vmem:[%s3 + $0x340] sm:$0xff] %v454
  %726 = vst.msk [vmem:[%s3 + $0x348] sm:$0xff] %vm621, %v607
  %727 = vst [vmem:[%s3 + $0x350] sm:$0xff] %v456
  %728 = vst.msk [vmem:[%s3 + $0x358] sm:$0xff] %vm621, %v609
  %729 = vst [vmem:[%s3 + $0x360] sm:$0xff] %v459
  %730 = vst.msk [vmem:[%s3 + $0x368] sm:$0xff] %vm621, %v612
  %731 = vst [vmem:[%s3 + $0x370] sm:$0xff] %v461
  %732 = vst.msk [vmem:[%s3 + $0x378] sm:$0xff] %vm621, %v614
  %733 = vst [vmem:[%s3 + $0x380] sm:$0x3] %v464
  %vm734 = vcmask 517120
  %735 = vst.msk [vmem:[%s3 + $0x388] sm:$0x3] %vm734, %v617
  // Predicated region
  $region14: #{auto_encoder_forward.9} parent=0 // pred_check
    _
  $region15: #{auto_encoder_forward.9} parent=0 // pred_check_branch
    %737 = sbr.rel (0) target = $region17
  $region16: #{auto_encoder_forward.9} parent=0 // pred_region
    _
  $region17: #{auto_encoder_forward.9} parent=0 // pred_fallthru
    _
  // Predicated region
  $region18: #{auto_encoder_forward.9} parent=0 // pred_check
    _
  $region19: #{auto_encoder_forward.9} parent=0 // pred_check_branch
    %739 = sbr.rel (0) target = $region21
  $region20: #{auto_encoder_forward.9} parent=0 // pred_region
    _
  $region21: #{auto_encoder_forward.9} parent=0 // pred_fallthru
    _

</llo_original>
